<compile_context>
chip_gen: v7x
topology: tpu7x:2x2x1
jax: 0.10.0
libtpu: 0.0.40
codegen_flags: <defaults>
</compile_context>

<pallas_src>
import jax
import jax.numpy as jnp
from jax.experimental import pallas as pl
from jax.experimental.pallas import tpu as pltpu


def _mha_flash_kernel(xq_ref, xkv_ref, wq_ref, wk_ref, wv_ref, wo_ref, bo_ref,
                      o_ref, q_sc, m_sc, l_sc, acc_sc):
    """One (batch, q-tile, kv-tile) grid step of fused attention.

    xq_ref : (1, tq, C)  bf16   x block for the query tile
    xkv_ref: (1, tk, C)  bf16   x block for the key/value tile
    wq_ref : (H, C, Dh)  bf16   q projection (scale already folded in)
    wk_ref : (H, C, Dh)  bf16   k projection
    wv_ref : (H, C, Dh)  bf16   v projection
    wo_ref : (H, Dh, C)  bf16   output projection, head-split along rows
    bo_ref : (1, C)      f32    output projection bias
    o_ref  : (1, tq, C)         output block (written at the last kv step)
    q_sc   : (H, tq, Dh) bf16   cached q projection for this query tile
    m_sc   : (H, tq, 1)  f32    running row max
    l_sc   : (H, tq, 1)  f32    running softmax denominator
    acc_sc : (H, tq, Dh) f32    running softmax numerator (p @ v)
    """
    ki = pl.program_id(2)
    nk = pl.num_programs(2)

    H, C, Dh = wq_ref.shape
    tq = xq_ref.shape[1]
    tk = xkv_ref.shape[1]

    @pl.when(ki == 0)
    def _init():
        m_sc[...] = jnp.full((H, tq, 1), -jnp.inf, dtype=jnp.float32)
        l_sc[...] = jnp.zeros((H, tq, 1), dtype=jnp.float32)
        acc_sc[...] = jnp.zeros((H, tq, Dh), dtype=jnp.float32)
        # Project q once per query tile (reused for every kv tile).
        xq = jnp.broadcast_to(xq_ref[0][None], (H, tq, C))
        q_sc[...] = jnp.einsum(
            "hqc,hcd->hqd", xq, wq_ref[...],
            preferred_element_type=jnp.float32).astype(jnp.bfloat16)

    # k / v projections for this kv tile (head-batched, f32 accumulation).
    xkv = jnp.broadcast_to(xkv_ref[0][None], (H, tk, C))
    k = jnp.einsum("hkc,hcd->hkd", xkv, wk_ref[...],
                   preferred_element_type=jnp.float32).astype(jnp.bfloat16)
    v = jnp.einsum("hkc,hcd->hkd", xkv, wv_ref[...],
                   preferred_element_type=jnp.float32).astype(jnp.bfloat16)

    # Scores: head-batched, contracting Dh directly (no explicit transpose).
    s = jnp.einsum("hqd,hkd->hqk", q_sc[...], k,
                   preferred_element_type=jnp.float32)          # (H, tq, tk)

    # Online softmax update.
    m_prev = m_sc[...]
    m_new = jnp.maximum(m_prev, jnp.max(s, axis=-1, keepdims=True))
    alpha = jnp.exp(m_prev - m_new)
    p = jnp.exp(s - m_new)                                      # (H, tq, tk)
    l_sc[...] = alpha * l_sc[...] + jnp.sum(p, axis=-1, keepdims=True)
    acc_sc[...] = alpha * acc_sc[...] + jnp.einsum(
        "hqk,hkd->hqd", p.astype(jnp.bfloat16), v,
        preferred_element_type=jnp.float32)
    m_sc[...] = m_new

    @pl.when(ki == nk - 1)
    def _finalize():
        # attn_drop / proj_drop are identity (p = 0.0).
        inv_l = pl.reciprocal(l_sc[...], approx=True)           # (H, tq, 1)
        ctx = (acc_sc[...] * inv_l).astype(jnp.bfloat16)        # (H, tq, Dh)
        # Output projection with the head merge folded in:
        #   out = sum_h ctx_h @ w_proj[h*Dh:(h+1)*Dh, :]
        proj = jnp.einsum("hqd,hdc->hqc", ctx, wo_ref[...],
                          preferred_element_type=jnp.float32)   # (H, tq, C)
        out = jnp.sum(proj, axis=0) + bo_ref[...]               # (tq, C)
        o_ref[0] = out.astype(o_ref.dtype)


def _pick_tile(n, target):
    """Largest tile <= target that divides n and is sublane-aligned (or n)."""
    if n <= target:
        return n
    for t in range(min(target, n), 0, -1):
        if n % t == 0 and t % 8 == 0:
            return t
    return n  # fall back to the full extent (exempt from the (8,128) rule)


def attention_forward(x, w_qkv, w_proj, b_proj, *, num_heads,
                      q_tile=256, kv_tile=256):
    """x: (B, N, C); w_qkv: (C, 3C); w_proj: (C, C); b_proj: (1, C).

    Weights are pre-transposed to (in_features, out_features) layout, i.e.
    qkv = x @ w_qkv and out = ctx @ w_proj + b_proj, matching nn.Linear.
    """
    B, N, C = x.shape
    H = num_heads
    assert C % H == 0, "dim must be divisible by num_heads"
    Dh = C // H
    scale = Dh ** (-0.5)

    tq = _pick_tile(N, q_tile)
    tk = _pick_tile(N, kv_tile)
    nq = N // tq
    nk = N // tk

    # Pre-split weights into head-batched layouts (one-time, outside kernel).
    # Column order of w_qkv is [3, H, Dh], matching reshape(B, N, 3, H, Dh).
    wq = w_qkv[:, 0 * C:1 * C].reshape(C, H, Dh).transpose(1, 0, 2) * scale
    wk = w_qkv[:, 1 * C:2 * C].reshape(C, H, Dh).transpose(1, 0, 2)
    wv = w_qkv[:, 2 * C:3 * C].reshape(C, H, Dh).transpose(1, 0, 2)
    wo = w_proj.reshape(H, Dh, C)

    # bf16 operands for the MXU (f32 accumulation inside the kernel).
    x_bf = x.astype(jnp.bfloat16)
    wq = wq.astype(jnp.bfloat16)
    wk = wk.astype(jnp.bfloat16)
    wv = wv.astype(jnp.bfloat16)
    wo = wo.astype(jnp.bfloat16)
    bo = b_proj.astype(jnp.float32)

    return pl.pallas_call(
        _mha_flash_kernel,
        out_shape=jax.ShapeDtypeStruct((B, N, C), x.dtype),
        grid_spec=pltpu.PrefetchScalarGridSpec(
            num_scalar_prefetch=0,
            grid=(B, nq, nk),
            in_specs=[
                pl.BlockSpec((1, tq, C), lambda b, qi, ki: (b, qi, 0)),  # x (q)
                pl.BlockSpec((1, tk, C), lambda b, qi, ki: (b, ki, 0)),  # x (kv)
                pl.BlockSpec((H, C, Dh), lambda b, qi, ki: (0, 0, 0)),   # wq
                pl.BlockSpec((H, C, Dh), lambda b, qi, ki: (0, 0, 0)),   # wk
                pl.BlockSpec((H, C, Dh), lambda b, qi, ki: (0, 0, 0)),   # wv
                pl.BlockSpec((H, Dh, C), lambda b, qi, ki: (0, 0, 0)),   # wo
                pl.BlockSpec((1, C), lambda b, qi, ki: (0, 0)),          # bias
            ],
            out_specs=pl.BlockSpec((1, tq, C), lambda b, qi, ki: (b, qi, 0)),
            scratch_shapes=[
                pltpu.VMEM((H, tq, Dh), jnp.bfloat16),  # cached (scaled) q
                pltpu.VMEM((H, tq, 1), jnp.float32),    # running max
                pltpu.VMEM((H, tq, 1), jnp.float32),    # running denominator
                pltpu.VMEM((H, tq, Dh), jnp.float32),   # running numerator
            ],
        ),
        compiler_params=pltpu.CompilerParams(
            dimension_semantics=("parallel", "parallel", "arbitrary"),
            vmem_limit_bytes=48 * 1024 * 1024,
        ),
    )(x_bf, x_bf, wq, wk, wv, wo, bo)


def attention_reference(x, w_qkv, w_proj, b_proj, *, num_heads):
    B, N, C = x.shape
    Dh = C // num_heads
    scale = Dh ** (-0.5)
    qkv = jnp.einsum("bnc,cd->bnd", x, w_qkv)                    # (B, N, 3C)
    qkv = qkv.reshape(B, N, 3, num_heads, Dh)
    qkv = jnp.transpose(qkv, (2, 0, 3, 1, 4))                    # (3, B, H, N, Dh)
    q, k, v = qkv[0], qkv[1], qkv[2]
    attn = jnp.einsum("bhnd,bhmd->bhnm", q, k) * scale
    attn = jax.nn.softmax(attn, axis=-1)
    out = jnp.einsum("bhnm,bhmd->bhnd", attn, v)
    out = jnp.transpose(out, (0, 2, 1, 3)).reshape(B, N, C)
    return jnp.einsum("bnc,cd->bnd", out, w_proj) + b_proj[0]


if __name__ == "__main__":
    B, N, C = 2, 16, 32
    NUM_HEADS = 8

    key = jax.random.PRNGKey(0)
    kx, kqkv, kproj, kbias = jax.random.split(key, 4)

    x = jax.random.normal(kx, (B, N, C), dtype=jnp.float32)
    # Deterministic synthetic parameters (qkv_bias=False in the module).
    w_qkv = jax.random.normal(kqkv, (C, 3 * C), dtype=jnp.float32) * 0.05
    w_proj = jax.random.normal(kproj, (C, C), dtype=jnp.float32) * 0.05
    b_proj = jax.random.normal(kbias, (1, C), dtype=jnp.float32) * 0.05

    out = attention_forward(x, w_qkv, w_proj, b_proj, num_heads=NUM_HEADS)
    out = jax.block_until_ready(out)

    ref = attention_reference(x, w_qkv, w_proj, b_proj, num_heads=NUM_HEADS)
    # bf16 matmul operands + approx reciprocal => loosened tolerance vs f32 ref.
    assert jnp.allclose(out, ref, atol=2e-2, rtol=2e-2), "mismatch vs reference"

    print("KERNEL_OK")
</pallas_src>

<mosaic_0001>
module attributes {stable_mosaic.version = 11 : i64} {
  func.func @_mha_flash_kernel(%arg0: i32, %arg1: i32, %arg2: i32, %arg3: memref<1x16x32xbf16, #tpu.memory_space<vmem>>, %arg4: memref<1x16x32xbf16, #tpu.memory_space<vmem>>, %arg5: memref<8x32x4xbf16, #tpu.memory_space<vmem>>, %arg6: memref<8x32x4xbf16, #tpu.memory_space<vmem>>, %arg7: memref<8x32x4xbf16, #tpu.memory_space<vmem>>, %arg8: memref<8x4x32xbf16, #tpu.memory_space<vmem>>, %arg9: memref<1x32xf32, #tpu.memory_space<vmem>>, %arg10: memref<1x16x32xf32, #tpu.memory_space<vmem>>, %arg11: memref<8x16x4xbf16, #tpu.memory_space<vmem>>, %arg12: memref<8x16x1xf32, #tpu.memory_space<vmem>>, %arg13: memref<8x16x1xf32, #tpu.memory_space<vmem>>, %arg14: memref<8x16x4xf32, #tpu.memory_space<vmem>>) attributes {dimension_semantics = [#tpu.dimension_semantics<parallel>, #tpu.dimension_semantics<parallel>, #tpu.dimension_semantics<arbitrary>], iteration_bounds = array<i64: 2, 1, 1>, scalar_prefetch = 0 : i64, scratch_operands = 4 : i64, tpu.core_type = #tpu.core_type<tc>, window_params = [{transform_indices = @transform_0, window_bounds = array<i64: 1, 16, 32>}, {transform_indices = @transform_1, window_bounds = array<i64: 1, 16, 32>}, {pipeline_mode = #tpu.pipeline_mode<synchronous>, transform_indices = @transform_2, window_bounds = array<i64: 8, 32, 4>}, {pipeline_mode = #tpu.pipeline_mode<synchronous>, transform_indices = @transform_3, window_bounds = array<i64: 8, 32, 4>}, {pipeline_mode = #tpu.pipeline_mode<synchronous>, transform_indices = @transform_4, window_bounds = array<i64: 8, 32, 4>}, {pipeline_mode = #tpu.pipeline_mode<synchronous>, transform_indices = @transform_5, window_bounds = array<i64: 8, 4, 32>}, {pipeline_mode = #tpu.pipeline_mode<synchronous>, transform_indices = @transform_6, window_bounds = array<i64: 1, 32>}, {transform_indices = @transform_7, window_bounds = array<i64: 1, 16, 32>}]} {
    %c0_i32 = arith.constant 0 : i32
    %0 = arith.cmpi eq, %arg2, %c0_i32 : i32
    %1 = arith.extui %0 : i1 to i32
    %c0_i32_0 = arith.constant 0 : i32
    %2 = arith.cmpi ne, %1, %c0_i32_0 : i32
    scf.if %2 {
      %cst_37 = arith.constant 0xFF800000 : f32
      %42 = vector.broadcast %cst_37 : f32 to vector<8x16x1xf32>
      %c0_38 = arith.constant 0 : index
      %c0_39 = arith.constant 0 : index
      %c0_40 = arith.constant 0 : index
      %43 = vector.load %arg12[%c0_38, %c0_39, %c0_40] : memref<8x16x1xf32, #tpu.memory_space<vmem>>, vector<8x16x1xf32>
      tpu.vector_store %arg12[%c0_38, %c0_39, %c0_40], %42 {strides = array<i32>} : memref<8x16x1xf32, #tpu.memory_space<vmem>>, vector<8x16x1xf32>,
      %cst_41 = arith.constant 0.000000e+00 : f32
      %44 = vector.broadcast %cst_41 : f32 to vector<8x16x1xf32>
      %c0_42 = arith.constant 0 : index
      %c0_43 = arith.constant 0 : index
      %c0_44 = arith.constant 0 : index
      %45 = vector.load %arg13[%c0_42, %c0_43, %c0_44] : memref<8x16x1xf32, #tpu.memory_space<vmem>>, vector<8x16x1xf32>
      tpu.vector_store %arg13[%c0_42, %c0_43, %c0_44], %44 {strides = array<i32>} : memref<8x16x1xf32, #tpu.memory_space<vmem>>, vector<8x16x1xf32>,
      %cst_45 = arith.constant 0.000000e+00 : f32
      %46 = vector.broadcast %cst_45 : f32 to vector<8x16x4xf32>
      %c0_46 = arith.constant 0 : index
      %c0_47 = arith.constant 0 : index
      %c0_48 = arith.constant 0 : index
      %47 = vector.load %arg14[%c0_46, %c0_47, %c0_48] : memref<8x16x4xf32, #tpu.memory_space<vmem>>, vector<8x16x4xf32>
      tpu.vector_store %arg14[%c0_46, %c0_47, %c0_48], %46 {strides = array<i32>} : memref<8x16x4xf32, #tpu.memory_space<vmem>>, vector<8x16x4xf32>,
      %c0_49 = arith.constant 0 : index
      %c0_50 = arith.constant 0 : index
      %c0_51 = arith.constant 0 : index
      %48 = vector.load %arg3[%c0_49, %c0_50, %c0_51] : memref<1x16x32xbf16, #tpu.memory_space<vmem>>, vector<1x16x32xbf16>
      %49 = vector.shape_cast %48 : vector<1x16x32xbf16> to vector<16x32xbf16>
      %50 = vector.shape_cast %49 : vector<16x32xbf16> to vector<1x16x32xbf16>
      %51 = vector.shape_cast %50 : vector<1x16x32xbf16> to vector<1x16x32xbf16>
      %52 = vector.broadcast %51 : vector<1x16x32xbf16> to vector<8x16x32xbf16>
      %c0_52 = arith.constant 0 : index
      %c0_53 = arith.constant 0 : index
      %c0_54 = arith.constant 0 : index
      %53 = vector.load %arg5[%c0_52, %c0_53, %c0_54] : memref<8x32x4xbf16, #tpu.memory_space<vmem>>, vector<8x32x4xbf16>
      "tpu.trace_start"() <{level = 10 : i32, message = "hqc,hcd->hqd"}> : () -> ()
      %cst_55 = arith.constant dense<0.000000e+00> : vector<8x16x4xf32>
      %54 = tpu.matmul %52, %53, %cst_55 {dimension_numbers = #tpu.dot_dimension_numbers<[2], [1], [1], [2], [0, 0, 0, 1, 1, 2], [0], [0]>} : vector<8x16x32xbf16>, vector<8x32x4xbf16>, vector<8x16x4xf32> -> vector<8x16x4xf32>
      "tpu.trace_stop"() : () -> ()
      %55 = arith.truncf %54 : vector<8x16x4xf32> to vector<8x16x4xbf16>
      %c0_56 = arith.constant 0 : index
      %c0_57 = arith.constant 0 : index
      %c0_58 = arith.constant 0 : index
      %56 = vector.load %arg11[%c0_56, %c0_57, %c0_58] : memref<8x16x4xbf16, #tpu.memory_space<vmem>>, vector<8x16x4xbf16>
      tpu.vector_store %arg11[%c0_56, %c0_57, %c0_58], %55 {strides = array<i32>} : memref<8x16x4xbf16, #tpu.memory_space<vmem>>, vector<8x16x4xbf16>,
    } else {
    }
    %c0 = arith.constant 0 : index
    %c0_1 = arith.constant 0 : index
    %c0_2 = arith.constant 0 : index
    %3 = vector.load %arg4[%c0, %c0_1, %c0_2] : memref<1x16x32xbf16, #tpu.memory_space<vmem>>, vector<1x16x32xbf16>
    %4 = vector.shape_cast %3 : vector<1x16x32xbf16> to vector<16x32xbf16>
    %5 = vector.shape_cast %4 : vector<16x32xbf16> to vector<1x16x32xbf16>
    %6 = vector.shape_cast %5 : vector<1x16x32xbf16> to vector<1x16x32xbf16>
    %7 = vector.broadcast %6 : vector<1x16x32xbf16> to vector<8x16x32xbf16>
    %c0_3 = arith.constant 0 : index
    %c0_4 = arith.constant 0 : index
    %c0_5 = arith.constant 0 : index
    %8 = vector.load %arg6[%c0_3, %c0_4, %c0_5] : memref<8x32x4xbf16, #tpu.memory_space<vmem>>, vector<8x32x4xbf16>
    "tpu.trace_start"() <{level = 10 : i32, message = "hkc,hcd->hkd"}> : () -> ()
    %cst = arith.constant dense<0.000000e+00> : vector<8x16x4xf32>
    %9 = tpu.matmul %7, %8, %cst {dimension_numbers = #tpu.dot_dimension_numbers<[2], [1], [1], [2], [0, 0, 0, 1, 1, 2], [0], [0]>} : vector<8x16x32xbf16>, vector<8x32x4xbf16>, vector<8x16x4xf32> -> vector<8x16x4xf32>
    "tpu.trace_stop"() : () -> ()
    %10 = arith.truncf %9 : vector<8x16x4xf32> to vector<8x16x4xbf16>
    %c0_6 = arith.constant 0 : index
    %c0_7 = arith.constant 0 : index
    %c0_8 = arith.constant 0 : index
    %11 = vector.load %arg7[%c0_6, %c0_7, %c0_8] : memref<8x32x4xbf16, #tpu.memory_space<vmem>>, vector<8x32x4xbf16>
    "tpu.trace_start"() <{level = 10 : i32, message = "hkc,hcd->hkd"}> : () -> ()
    %cst_9 = arith.constant dense<0.000000e+00> : vector<8x16x4xf32>
    %12 = tpu.matmul %7, %11, %cst_9 {dimension_numbers = #tpu.dot_dimension_numbers<[2], [1], [1], [2], [0, 0, 0, 1, 1, 2], [0], [0]>} : vector<8x16x32xbf16>, vector<8x32x4xbf16>, vector<8x16x4xf32> -> vector<8x16x4xf32>
    "tpu.trace_stop"() : () -> ()
    %13 = arith.truncf %12 : vector<8x16x4xf32> to vector<8x16x4xbf16>
    %c0_10 = arith.constant 0 : index
    %c0_11 = arith.constant 0 : index
    %c0_12 = arith.constant 0 : index
    %14 = vector.load %arg11[%c0_10, %c0_11, %c0_12] : memref<8x16x4xbf16, #tpu.memory_space<vmem>>, vector<8x16x4xbf16>
    "tpu.trace_start"() <{level = 10 : i32, message = "hqd,hkd->hqk"}> : () -> ()
    %cst_13 = arith.constant dense<0.000000e+00> : vector<8x16x16xf32>
    %15 = tpu.matmul %14, %10, %cst_13 {dimension_numbers = #tpu.dot_dimension_numbers<[2], [2], [1], [1], [0, 0, 0, 1, 1, 1], [0], [0]>} : vector<8x16x4xbf16>, vector<8x16x4xbf16>, vector<8x16x16xf32> -> vector<8x16x16xf32>
    "tpu.trace_stop"() : () -> ()
    %c0_14 = arith.constant 0 : index
    %c0_15 = arith.constant 0 : index
    %c0_16 = arith.constant 0 : index
    %16 = vector.load %arg12[%c0_14, %c0_15, %c0_16] : memref<8x16x1xf32, #tpu.memory_space<vmem>>, vector<8x16x1xf32>
    %cst_17 = arith.constant dense<0xFF800000> : vector<8x16xf32>
    %17 = vector.multi_reduction <maximumf>, %15, %cst_17 [2] : vector<8x16x16xf32> to vector<8x16xf32>
    %18 = vector.shape_cast %17 : vector<8x16xf32> to vector<8x16x1xf32>
    %19 = arith.maximumf %16, %18 : vector<8x16x1xf32>
    %20 = arith.subf %16, %19 : vector<8x16x1xf32>
    %21 = math.exp %20 : vector<8x16x1xf32>
    %22 = vector.broadcast %19 : vector<8x16x1xf32> to vector<8x16x16xf32>
    %23 = arith.subf %15, %22 : vector<8x16x16xf32>
    %24 = math.exp %23 : vector<8x16x16xf32>
    %c0_18 = arith.constant 0 : index
    %c0_19 = arith.constant 0 : index
    %c0_20 = arith.constant 0 : index
    %25 = vector.load %arg13[%c0_18, %c0_19, %c0_20] : memref<8x16x1xf32, #tpu.memory_space<vmem>>, vector<8x16x1xf32>
    %26 = arith.mulf %21, %25 : vector<8x16x1xf32>
    %cst_21 = arith.constant dense<0.000000e+00> : vector<8x16xf32>
    %27 = vector.multi_reduction <add>, %24, %cst_21 [2] : vector<8x16x16xf32> to vector<8x16xf32>
    %28 = vector.shape_cast %27 : vector<8x16xf32> to vector<8x16x1xf32>
    %29 = arith.addf %26, %28 : vector<8x16x1xf32>
    %c0_22 = arith.constant 0 : index
    %c0_23 = arith.constant 0 : index
    %c0_24 = arith.constant 0 : index
    %30 = vector.load %arg13[%c0_22, %c0_23, %c0_24] : memref<8x16x1xf32, #tpu.memory_space<vmem>>, vector<8x16x1xf32>
    tpu.vector_store %arg13[%c0_22, %c0_23, %c0_24], %29 {strides = array<i32>} : memref<8x16x1xf32, #tpu.memory_space<vmem>>, vector<8x16x1xf32>,
    %c0_25 = arith.constant 0 : index
    %c0_26 = arith.constant 0 : index
    %c0_27 = arith.constant 0 : index
    %31 = vector.load %arg14[%c0_25, %c0_26, %c0_27] : memref<8x16x4xf32, #tpu.memory_space<vmem>>, vector<8x16x4xf32>
    %32 = vector.broadcast %21 : vector<8x16x1xf32> to vector<8x16x4xf32>
    %33 = arith.mulf %32, %31 : vector<8x16x4xf32>
    %34 = arith.truncf %24 : vector<8x16x16xf32> to vector<8x16x16xbf16>
    "tpu.trace_start"() <{level = 10 : i32, message = "hqk,hkd->hqd"}> : () -> ()
    %cst_28 = arith.constant dense<0.000000e+00> : vector<8x16x4xf32>
    %35 = tpu.matmul %34, %13, %cst_28 {dimension_numbers = #tpu.dot_dimension_numbers<[2], [1], [1], [2], [0, 0, 0, 1, 1, 2], [0], [0]>} : vector<8x16x16xbf16>, vector<8x16x4xbf16>, vector<8x16x4xf32> -> vector<8x16x4xf32>
    "tpu.trace_stop"() : () -> ()
    %36 = arith.addf %33, %35 : vector<8x16x4xf32>
    %c0_29 = arith.constant 0 : index
    %c0_30 = arith.constant 0 : index
    %c0_31 = arith.constant 0 : index
    %37 = vector.load %arg14[%c0_29, %c0_30, %c0_31] : memref<8x16x4xf32, #tpu.memory_space<vmem>>, vector<8x16x4xf32>
    tpu.vector_store %arg14[%c0_29, %c0_30, %c0_31], %36 {strides = array<i32>} : memref<8x16x4xf32, #tpu.memory_space<vmem>>, vector<8x16x4xf32>,
    %c0_32 = arith.constant 0 : index
    %c0_33 = arith.constant 0 : index
    %c0_34 = arith.constant 0 : index
    %38 = vector.load %arg12[%c0_32, %c0_33, %c0_34] : memref<8x16x1xf32, #tpu.memory_space<vmem>>, vector<8x16x1xf32>
    tpu.vector_store %arg12[%c0_32, %c0_33, %c0_34], %19 {strides = array<i32>} : memref<8x16x1xf32, #tpu.memory_space<vmem>>, vector<8x16x1xf32>,
    %c0_i32_35 = arith.constant 0 : i32
    %39 = arith.cmpi eq, %arg2, %c0_i32_35 : i32
    %40 = arith.extui %39 : i1 to i32
    %c0_i32_36 = arith.constant 0 : i32
    %41 = arith.cmpi ne, %40, %c0_i32_36 : i32
    scf.if %41 {
      %c0_37 = arith.constant 0 : index
      %c0_38 = arith.constant 0 : index
      %c0_39 = arith.constant 0 : index
      %42 = vector.load %arg13[%c0_37, %c0_38, %c0_39] : memref<8x16x1xf32, #tpu.memory_space<vmem>>, vector<8x16x1xf32>
      %43 = tpu.reciprocal %42 {approx = true} : vector<8x16x1xf32> -> vector<8x16x1xf32>
      %c0_40 = arith.constant 0 : index
      %c0_41 = arith.constant 0 : index
      %c0_42 = arith.constant 0 : index
      %44 = vector.load %arg14[%c0_40, %c0_41, %c0_42] : memref<8x16x4xf32, #tpu.memory_space<vmem>>, vector<8x16x4xf32>
      %45 = vector.broadcast %43 : vector<8x16x1xf32> to vector<8x16x4xf32>
      %46 = arith.mulf %44, %45 : vector<8x16x4xf32>
      %47 = arith.truncf %46 : vector<8x16x4xf32> to vector<8x16x4xbf16>
      %c0_43 = arith.constant 0 : index
      %c0_44 = arith.constant 0 : index
      %c0_45 = arith.constant 0 : index
      %48 = vector.load %arg8[%c0_43, %c0_44, %c0_45] : memref<8x4x32xbf16, #tpu.memory_space<vmem>>, vector<8x4x32xbf16>
      "tpu.trace_start"() <{level = 10 : i32, message = "hqd,hdc->hqc"}> : () -> ()
      %cst_46 = arith.constant dense<0.000000e+00> : vector<8x16x32xf32>
      %49 = tpu.matmul %47, %48, %cst_46 {dimension_numbers = #tpu.dot_dimension_numbers<[2], [1], [1], [2], [0, 0, 0, 1, 1, 2], [0], [0]>} : vector<8x16x4xbf16>, vector<8x4x32xbf16>, vector<8x16x32xf32> -> vector<8x16x32xf32>
      "tpu.trace_stop"() : () -> ()
      %cst_47 = arith.constant dense<0.000000e+00> : vector<16x32xf32>
      %50 = vector.multi_reduction <add>, %49, %cst_47 [0] : vector<8x16x32xf32> to vector<16x32xf32>
      %c0_48 = arith.constant 0 : index
      %c0_49 = arith.constant 0 : index
      %51 = vector.load %arg9[%c0_48, %c0_49] : memref<1x32xf32, #tpu.memory_space<vmem>>, vector<1x32xf32>
      %52 = vector.broadcast %51 : vector<1x32xf32> to vector<16x32xf32>
      %53 = arith.addf %50, %52 : vector<16x32xf32>
      %c0_50 = arith.constant 0 : index
      %c0_51 = arith.constant 0 : index
      %c0_52 = arith.constant 0 : index
      %54 = vector.load %arg10[%c0_50, %c0_51, %c0_52] : memref<1x16x32xf32, #tpu.memory_space<vmem>>, vector<1x16x32xf32>
      %55 = vector.shape_cast %54 : vector<1x16x32xf32> to vector<16x32xf32>
      %56 = vector.shape_cast %53 : vector<16x32xf32> to vector<1x16x32xf32>
      tpu.vector_store %arg10[%c0_50, %c0_51, %c0_52], %56 {strides = array<i32>} : memref<1x16x32xf32, #tpu.memory_space<vmem>>, vector<1x16x32xf32>,
    } else {
    }
    return
  }
  func.func @transform_0(%arg0: i32, %arg1: i32, %arg2: i32) -> (i32, i32, i32) {
    %c0_i32 = arith.constant 0 : i32
    %c0_i32_0 = arith.constant 0 : i32
    return %arg0, %arg1, %c0_i32 : i32, i32, i32
  }
  func.func @transform_1(%arg0: i32, %arg1: i32, %arg2: i32) -> (i32, i32, i32) {
    %c0_i32 = arith.constant 0 : i32
    %c0_i32_0 = arith.constant 0 : i32
    return %arg0, %arg2, %c0_i32 : i32, i32, i32
  }
  func.func @transform_2(%arg0: i32, %arg1: i32, %arg2: i32) -> (i32, i32, i32) {
    %c0_i32 = arith.constant 0 : i32
    %c0_i32_0 = arith.constant 0 : i32
    %c0_i32_1 = arith.constant 0 : i32
    %c0_i32_2 = arith.constant 0 : i32
    return %c0_i32, %c0_i32_0, %c0_i32_1 : i32, i32, i32
  }
  func.func @transform_3(%arg0: i32, %arg1: i32, %arg2: i32) -> (i32, i32, i32) {
    %c0_i32 = arith.constant 0 : i32
    %c0_i32_0 = arith.constant 0 : i32
    %c0_i32_1 = arith.constant 0 : i32
    %c0_i32_2 = arith.constant 0 : i32
    return %c0_i32, %c0_i32_0, %c0_i32_1 : i32, i32, i32
  }
  func.func @transform_4(%arg0: i32, %arg1: i32, %arg2: i32) -> (i32, i32, i32) {
    %c0_i32 = arith.constant 0 : i32
    %c0_i32_0 = arith.constant 0 : i32
    %c0_i32_1 = arith.constant 0 : i32
    %c0_i32_2 = arith.constant 0 : i32
    return %c0_i32, %c0_i32_0, %c0_i32_1 : i32, i32, i32
  }
  func.func @transform_5(%arg0: i32, %arg1: i32, %arg2: i32) -> (i32, i32, i32) {
    %c0_i32 = arith.constant 0 : i32
    %c0_i32_0 = arith.constant 0 : i32
    %c0_i32_1 = arith.constant 0 : i32
    %c0_i32_2 = arith.constant 0 : i32
    return %c0_i32, %c0_i32_0, %c0_i32_1 : i32, i32, i32
  }
  func.func @transform_6(%arg0: i32, %arg1: i32, %arg2: i32) -> (i32, i32) {
    %c0_i32 = arith.constant 0 : i32
    %c0_i32_0 = arith.constant 0 : i32
    %c0_i32_1 = arith.constant 0 : i32
    return %c0_i32, %c0_i32_0 : i32, i32
  }
  func.func @transform_7(%arg0: i32, %arg1: i32, %arg2: i32) -> (i32, i32, i32) {
    %c0_i32 = arith.constant 0 : i32
    %c0_i32_0 = arith.constant 0 : i32
    return %arg0, %arg1, %c0_i32 : i32, i32, i32
  }
}

</mosaic_0001>

<llo_original>
// kernel: tpu_custom_call.1
$region0: #{tpu_custom_call.1}
  #allocation0 [shape = 'u32[]', space=smem, size = 0x4, offset = 0x4, fixed_abs, tag = 'smem constant byte address 0x4 - core index']
  #allocation1 [shape = 'u32[144,128]{1,0:T(1,128)}', space=vmem, size = 0x12000, scoped, tag = 'internal scratch']
  #allocation2 [shape = 'bf16[8,16,4]{2,1,0:T(16,128)(2,1)}', space=vmem, size = 0x8000, scoped, tag = 'scratch operand']
  #allocation3 [shape = 'f32[8,16,1]{2,1,0:T(8,128)}', space=vmem, size = 0x10000, scoped, tag = 'scratch operand']
  #allocation4 [shape = 'f32[8,16,1]{2,1,0:T(8,128)}', space=vmem, size = 0x10000, scoped, tag = 'scratch operand']
  #allocation5 [shape = 'f32[8,16,4]{2,1,0:T(8,128)}', space=vmem, size = 0x10000, scoped, tag = 'scratch operand']
  %s0 = inlined_call_operand.vmem [shape: bf16[2,16,32], index: 0, kind: input, shape index: {}]
  %s1 = inlined_call_operand.vmem [shape: bf16[2,16,32], index: 1, kind: input, shape index: {}]
  %s2 = inlined_call_operand.vmem [shape: bf16[8,32,4], index: 2, kind: input, shape index: {}]
  %s3 = inlined_call_operand.vmem [shape: bf16[8,32,4], index: 3, kind: input, shape index: {}]
  %s4 = inlined_call_operand.vmem [shape: bf16[8,32,4], index: 4, kind: input, shape index: {}]
  %s5 = inlined_call_operand.vmem [shape: bf16[8,4,32], index: 5, kind: input, shape index: {}]
  %s6 = inlined_call_operand.vmem [shape: f32[1,32], index: 6, kind: input, shape index: {}]
  %s7 = inlined_call_operand.hbm [shape: f32[2,16,32], index: 7, kind: output, shape index: {}]
  %s8 = sld [smem:[#allocation0]]
  $region69: #{tpu_custom_call.1} parent=0
    _
  %s10 = ssub.s32 1, %s8
  %s11 = scalar_select 0, %s10, %s8
  $region1: #{tpu_custom_call.1} parent=0
    #allocation6 [shape = 'u8[16384]{0}', space=vmem, size = 0x4000, scoped, tag = 'output window, operand 0']
    #allocation7 [shape = 's32[2]{0}', space=sflag, size = 0x8, scoped, tag = 'scoped memory for tpu_custom_call.1']
    %12 = vsyncpa [#allocation7], 0
    %s13 = scalar_lea.sflag [#allocation7], 1
    %14 = vsyncpa %s13, 0
    loop: start=0, step=1, limit=4
    $region2: #{tpu_custom_call.1} parent=1 // loop_pre_header
      _
    $region3: #{tpu_custom_call.1} parent=1 // loop_header
      %s16 = sphi 0, %s20
      %p17 = scmp.ge.s32.totalorder %s16, 4
      %s23 = sphi 0, %s42
      %s24 = sphi 0, %s38
      %s25 = sphi 0, %s34
      %s26 = sphi 0, %s23
      %s27 = sphi 0, %s24
      %s28 = sphi 0, %s25
      %s29 = sphi 0, %s26
      %s30 = sphi 0, %s27
      %s31 = sphi 0, %s28
      %s47 = sphi 0, %s49
      %s50 = sphi 0, %s47
      %s51 = sphi 0, %s50
      %s67 = sphi 0, %s51
      %s75 = sphi 0, %s77
      %s78 = sphi 0, %s75
      %s79 = sphi 0, %s78
      %s95 = sphi 0, %s79
      %s99 = sphi 0, %s99
      %s101 = sphi 0, %s99
      %s102 = sphi 0, %s101
      %s116 = sphi 0, %s102
      %s120 = sphi 0, %s120
      %s122 = sphi 0, %s120
      %s123 = sphi 0, %s122
      %s137 = sphi 0, %s123
      %s141 = sphi 0, %s141
      %s143 = sphi 0, %s141
      %s144 = sphi 0, %s143
      %s158 = sphi 0, %s144
      %s162 = sphi 0, %s162
      %s164 = sphi 0, %s162
      %s165 = sphi 0, %s164
      %s179 = sphi 0, %s165
      %s183 = sphi 0, %s183
      %s185 = sphi 0, %s183
      %s186 = sphi 0, %s185
      %s200 = sphi 0, %s186
      %s208 = sphi 0, %s210
      %s211 = sphi 0, %s208
      %s212 = sphi 0, %s211
      %s228 = sphi 0, %s212
    $region4: #{tpu_custom_call.1} parent=1 // loop_header_branch
      %19 = sbr.rel (%p17) target = $region8
    $region5: #{tpu_custom_call.1} parent=1 // loop_body
      %s21 = ssub.s32 %s16, 1
      %s22 = ssub.s32 %s16, 2
      %s32 = sadd.s32 1, %s25
      %p33 = scmp.ge.s32.totalorder %s32, 1
      %s34 = scalar_select %p33, 0, %s32
      %s35 = sadd.s32 1, %s24
      %s36 = scalar_select %p33, %s35, %s24
      %p37 = scmp.ge.s32.totalorder %s36, 1
      %s38 = scalar_select %p37, 0, %s36
      %s39 = sadd.s32 1, %s23
      %s40 = scalar_select %p37, %s39, %s23
      %p41 = scmp.ge.s32.totalorder %s40, 2
      %s42 = scalar_select %p41, 0, %s40
      %s43 = ssub.s32 %s23, %s42
      %s44 = ssub.s32 %s24, %s38
      %s45 = sor.u32 %s43, %s44
      %p46 = scmp.eq.s32.totalorder %s45, 0
      %s48 = sadd.s32 %s47, 1
      %s49 = scalar_select %p46, %s47, %s48
      %p52 = pneg %p46
      %p53 = scmp.eq.s32.totalorder %s16, 1
      %p54 = por %p52, %p53
      %p55 = scmp.ne.s32.totalorder %s47, %s50
      %p56 = scmp.eq.s32.totalorder %s16, 0
      %p57 = por %p55, %p56
      %p58 = scmp.ne.s32.totalorder %s47, %s50
      %p59 = scmp.eq.s32.totalorder %s21, 1
      %p60 = por %p58, %p59
      %p61 = scmp.ne.s32.totalorder %s50, %s51
      %p62 = scmp.eq.s32.totalorder %s21, 0
      %p63 = por %p61, %p62
      %p64 = scmp.ne.s32.totalorder %s50, %s51
      %p65 = scmp.eq.s32.totalorder %s22, 1
      %p66 = por %p64, %p65
      %p68 = scmp.ne.s32.totalorder %s51, %s67
      %p69 = scmp.eq.s32.totalorder %s22, 0
      %p70 = por %p68, %p69
      %s71 = ssub.s32 %s23, %s42
      %s72 = ssub.s32 %s25, %s34
      %s73 = sor.u32 %s71, %s72
      %p74 = scmp.eq.s32.totalorder %s73, 0
      %s76 = sadd.s32 %s75, 1
      %s77 = scalar_select %p74, %s75, %s76
      %p80 = pneg %p74
      %p81 = scmp.eq.s32.totalorder %s16, 1
      %p82 = por %p80, %p81
      %p83 = scmp.ne.s32.totalorder %s75, %s78
      %p84 = scmp.eq.s32.totalorder %s16, 0
      %p85 = por %p83, %p84
      %p86 = scmp.ne.s32.totalorder %s75, %s78
      %p87 = scmp.eq.s32.totalorder %s21, 1
      %p88 = por %p86, %p87
      %p89 = scmp.ne.s32.totalorder %s78, %s79
      %p90 = scmp.eq.s32.totalorder %s21, 0
      %p91 = por %p89, %p90
      %p92 = scmp.ne.s32.totalorder %s78, %s79
      %p93 = scmp.eq.s32.totalorder %s22, 1
      %p94 = por %p92, %p93
      %p96 = scmp.ne.s32.totalorder %s79, %s95
      %p97 = scmp.eq.s32.totalorder %s22, 0
      %p98 = por %p96, %p97
      %s100 = sadd.s32 %s99, 1
      %p103 = scmp.eq.s32.totalorder %s16, 1
      %p104 = scmp.ne.s32.totalorder %s99, %s101
      %p105 = scmp.eq.s32.totalorder %s16, 0
      %p106 = por %p104, %p105
      %p107 = scmp.ne.s32.totalorder %s99, %s101
      %p108 = scmp.eq.s32.totalorder %s21, 1
      %p109 = por %p107, %p108
      %p110 = scmp.ne.s32.totalorder %s101, %s102
      %p111 = scmp.eq.s32.totalorder %s21, 0
      %p112 = por %p110, %p111
      %p113 = scmp.ne.s32.totalorder %s101, %s102
      %p114 = scmp.eq.s32.totalorder %s22, 1
      %p115 = por %p113, %p114
      %p117 = scmp.ne.s32.totalorder %s102, %s116
      %p118 = scmp.eq.s32.totalorder %s22, 0
      %p119 = por %p117, %p118
      %s121 = sadd.s32 %s120, 1
      %p124 = scmp.eq.s32.totalorder %s16, 1
      %p125 = scmp.ne.s32.totalorder %s120, %s122
      %p126 = scmp.eq.s32.totalorder %s16, 0
      %p127 = por %p125, %p126
      %p128 = scmp.ne.s32.totalorder %s120, %s122
      %p129 = scmp.eq.s32.totalorder %s21, 1
      %p130 = por %p128, %p129
      %p131 = scmp.ne.s32.totalorder %s122, %s123
      %p132 = scmp.eq.s32.totalorder %s21, 0
      %p133 = por %p131, %p132
      %p134 = scmp.ne.s32.totalorder %s122, %s123
      %p135 = scmp.eq.s32.totalorder %s22, 1
      %p136 = por %p134, %p135
      %p138 = scmp.ne.s32.totalorder %s123, %s137
      %p139 = scmp.eq.s32.totalorder %s22, 0
      %p140 = por %p138, %p139
      %s142 = sadd.s32 %s141, 1
      %p145 = scmp.eq.s32.totalorder %s16, 1
      %p146 = scmp.ne.s32.totalorder %s141, %s143
      %p147 = scmp.eq.s32.totalorder %s16, 0
      %p148 = por %p146, %p147
      %p149 = scmp.ne.s32.totalorder %s141, %s143
      %p150 = scmp.eq.s32.totalorder %s21, 1
      %p151 = por %p149, %p150
      %p152 = scmp.ne.s32.totalorder %s143, %s144
      %p153 = scmp.eq.s32.totalorder %s21, 0
      %p154 = por %p152, %p153
      %p155 = scmp.ne.s32.totalorder %s143, %s144
      %p156 = scmp.eq.s32.totalorder %s22, 1
      %p157 = por %p155, %p156
      %p159 = scmp.ne.s32.totalorder %s144, %s158
      %p160 = scmp.eq.s32.totalorder %s22, 0
      %p161 = por %p159, %p160
      %s163 = sadd.s32 %s162, 1
      %p166 = scmp.eq.s32.totalorder %s16, 1
      %p167 = scmp.ne.s32.totalorder %s162, %s164
      %p168 = scmp.eq.s32.totalorder %s16, 0
      %p169 = por %p167, %p168
      %p170 = scmp.ne.s32.totalorder %s162, %s164
      %p171 = scmp.eq.s32.totalorder %s21, 1
      %p172 = por %p170, %p171
      %p173 = scmp.ne.s32.totalorder %s164, %s165
      %p174 = scmp.eq.s32.totalorder %s21, 0
      %p175 = por %p173, %p174
      %p176 = scmp.ne.s32.totalorder %s164, %s165
      %p177 = scmp.eq.s32.totalorder %s22, 1
      %p178 = por %p176, %p177
      %p180 = scmp.ne.s32.totalorder %s165, %s179
      %p181 = scmp.eq.s32.totalorder %s22, 0
      %p182 = por %p180, %p181
      %s184 = sadd.s32 %s183, 1
      %p187 = scmp.eq.s32.totalorder %s16, 1
      %p188 = scmp.ne.s32.totalorder %s183, %s185
      %p189 = scmp.eq.s32.totalorder %s16, 0
      %p190 = por %p188, %p189
      %p191 = scmp.ne.s32.totalorder %s183, %s185
      %p192 = scmp.eq.s32.totalorder %s21, 1
      %p193 = por %p191, %p192
      %p194 = scmp.ne.s32.totalorder %s185, %s186
      %p195 = scmp.eq.s32.totalorder %s21, 0
      %p196 = por %p194, %p195
      %p197 = scmp.ne.s32.totalorder %s185, %s186
      %p198 = scmp.eq.s32.totalorder %s22, 1
      %p199 = por %p197, %p198
      %p201 = scmp.ne.s32.totalorder %s186, %s200
      %p202 = scmp.eq.s32.totalorder %s22, 0
      %p203 = por %p201, %p202
      %s204 = ssub.s32 %s23, %s42
      %s205 = ssub.s32 %s24, %s38
      %s206 = sor.u32 %s204, %s205
      %p207 = scmp.eq.s32.totalorder %s206, 0
      %s209 = sadd.s32 %s208, 1
      %s210 = scalar_select %p207, %s208, %s209
      %p213 = pneg %p207
      %p214 = scmp.eq.s32.totalorder %s16, 1
      %p215 = por %p213, %p214
      %p216 = scmp.ne.s32.totalorder %s208, %s211
      %p217 = scmp.eq.s32.totalorder %s16, 0
      %p218 = por %p216, %p217
      %p219 = scmp.ne.s32.totalorder %s208, %s211
      %p220 = scmp.eq.s32.totalorder %s21, 1
      %p221 = por %p219, %p220
      %p222 = scmp.ne.s32.totalorder %s211, %s212
      %p223 = scmp.eq.s32.totalorder %s21, 0
      %p224 = por %p222, %p223
      %p225 = scmp.ne.s32.totalorder %s211, %s212
      %p226 = scmp.eq.s32.totalorder %s22, 1
      %p227 = por %p225, %p226
      %p229 = scmp.ne.s32.totalorder %s212, %s228
      %p230 = scmp.eq.s32.totalorder %s22, 0
      %p231 = por %p229, %p230
      %p232 = scmp.le.s32.totalorder 1, %s16
      %p233 = scmp.lt.s32.totalorder %s16, 3
      %p234 = pnand %p232, %p233
      %p235 = pneg %p234
      // Predicated region
      $region9: #{tpu_custom_call.1} parent=5 // pred_check
        _
      $region10: #{tpu_custom_call.1} parent=5 // pred_check_branch
        %237 = sbr.rel (%p234) target = $region12
      $region11: #{tpu_custom_call.1} parent=5 // pred_region
        %s238 = ssub.s32 %s16, 1
        // Predicated region
        $region13: #{tpu_custom_call.1} parent=11 // pred_check
          %p239 = pneg %p112
        $region14: #{tpu_custom_call.1} parent=11 // pred_check_branch
          %241 = sbr.rel (%p239) target = $region16
        $region15: #{tpu_custom_call.1} parent=11 // pred_region
          _
        $region16: #{tpu_custom_call.1} parent=11 // pred_fallthru
          _
        // Predicated region
        $region17: #{tpu_custom_call.1} parent=11 // pred_check
          %p242 = pneg %p133
        $region18: #{tpu_custom_call.1} parent=11 // pred_check_branch
          %244 = sbr.rel (%p242) target = $region20
        $region19: #{tpu_custom_call.1} parent=11 // pred_region
          _
        $region20: #{tpu_custom_call.1} parent=11 // pred_fallthru
          _
        // Predicated region
        $region21: #{tpu_custom_call.1} parent=11 // pred_check
          %p245 = pneg %p154
        $region22: #{tpu_custom_call.1} parent=11 // pred_check_branch
          %247 = sbr.rel (%p245) target = $region24
        $region23: #{tpu_custom_call.1} parent=11 // pred_region
          _
        $region24: #{tpu_custom_call.1} parent=11 // pred_fallthru
          _
        // Predicated region
        $region25: #{tpu_custom_call.1} parent=11 // pred_check
          %p248 = pneg %p175
        $region26: #{tpu_custom_call.1} parent=11 // pred_check_branch
          %250 = sbr.rel (%p248) target = $region28
        $region27: #{tpu_custom_call.1} parent=11 // pred_region
          _
        $region28: #{tpu_custom_call.1} parent=11 // pred_fallthru
          _
        // Predicated region
        $region29: #{tpu_custom_call.1} parent=11 // pred_check
          %p251 = pneg %p196
        $region30: #{tpu_custom_call.1} parent=11 // pred_check_branch
          %253 = sbr.rel (%p251) target = $region32
        $region31: #{tpu_custom_call.1} parent=11 // pred_region
          _
        $region32: #{tpu_custom_call.1} parent=11 // pred_fallthru
          _
      $region12: #{tpu_custom_call.1} parent=5 // pred_fallthru
        _
      %p254 = scmp.lt.s32.totalorder %s16, 2
      // Predicated region
      $region33: #{tpu_custom_call.1} parent=5 // pred_check
        %p255 = pneg %p254
      $region34: #{tpu_custom_call.1} parent=5 // pred_check_branch
        %257 = sbr.rel (%p255) target = $region36
      $region35: #{tpu_custom_call.1} parent=5 // pred_region
        // Predicated region
        $region37: #{tpu_custom_call.1} parent=35 // pred_check
          %p258 = pneg %p57
        $region38: #{tpu_custom_call.1} parent=35 // pred_check_branch
          %260 = sbr.rel (%p258) target = $region40
        $region39: #{tpu_custom_call.1} parent=35 // pred_region
          %s261 = smul.u32 2, %s24
          %p262 = scmp.lt.s32.totalorder %s23, 1
          %s263 = scalar_select %p262, %s23, 1
          %p264 = scmp.lt.s32.totalorder %s261, 1
          %s265 = scalar_select %p264, %s261, 1
          %s266 = smul.addr %s263, 2
          %s267 = sadd.s32 %s265, %s266
          %s268 = smul.addr %s267, 4
          %s269 = scalar_lea.vmem %s0, %s268
          %s270 = smul.u32 2, %s24
        $region40: #{tpu_custom_call.1} parent=35 // pred_fallthru
          _
        // Predicated region
        $region41: #{tpu_custom_call.1} parent=35 // pred_check
          %p271 = pneg %p85
        $region42: #{tpu_custom_call.1} parent=35 // pred_check_branch
          %273 = sbr.rel (%p271) target = $region44
        $region43: #{tpu_custom_call.1} parent=35 // pred_region
          %s274 = smul.u32 2, %s25
          %p275 = scmp.lt.s32.totalorder %s23, 1
          %s276 = scalar_select %p275, %s23, 1
          %p277 = scmp.lt.s32.totalorder %s274, 1
          %s278 = scalar_select %p277, %s274, 1
          %s279 = smul.addr %s276, 2
          %s280 = sadd.s32 %s278, %s279
          %s281 = smul.addr %s280, 4
          %s282 = scalar_lea.vmem %s1, %s281
          %s283 = smul.u32 2, %s25
        $region44: #{tpu_custom_call.1} parent=35 // pred_fallthru
          _
      $region36: #{tpu_custom_call.1} parent=5 // pred_fallthru
        _
      %p284 = scmp.le.s32.totalorder 1, %s16
      %p285 = scmp.lt.s32.totalorder %s16, 3
      %p286 = pnand %p284, %p285
      %p287 = pneg %p286
      // Predicated region
      $region45: #{tpu_custom_call.1} parent=5 // pred_check
        _
      $region46: #{tpu_custom_call.1} parent=5 // pred_check_branch
        %289 = sbr.rel (%p286) target = $region48
      $region47: #{tpu_custom_call.1} parent=5 // pred_region
        %s290 = ssub.s32 %s16, 1
        %s291 = smul.u32 2, %s27
        %p292 = scmp.lt.s32.totalorder %s26, 1
        %s293 = scalar_select %p292, %s26, 1
        %p294 = scmp.lt.s32.totalorder %s291, 1
        %s295 = scalar_select %p294, %s291, 1
        %s296 = smul.addr %s293, 2
        %s297 = sadd.s32 %s295, %s296
        %s298 = smul.addr %s297, 4
        %s299 = scalar_lea.vmem %s0, %s298
        %p300 = pneg %p63
        %p301 = pneg %p60
        %s302 = smul.u32 2, %s28
        %p303 = scmp.lt.s32.totalorder %s26, 1
        %s304 = scalar_select %p303, %s26, 1
        %p305 = scmp.lt.s32.totalorder %s302, 1
        %s306 = scalar_select %p305, %s302, 1
        %s307 = smul.addr %s304, 2
        %s308 = sadd.s32 %s306, %s307
        %s309 = smul.addr %s308, 4
        %s310 = scalar_lea.vmem %s1, %s309
        %p311 = pneg %p91
        %p312 = pneg %p88
        %p313 = pneg %p112
        %p314 = pneg %p109
        %p315 = pneg %p133
        %p316 = pneg %p130
        %p317 = pneg %p154
        %p318 = pneg %p151
        %p319 = pneg %p175
        %p320 = pneg %p172
        %p321 = pneg %p196
        %p322 = pneg %p193
        %p323 = pneg %p224
        %p324 = pneg %p221
        %s325 = sand.u32 %s211, 1
        %s326 = scalar_lea.sflag [#allocation7], %s325
        %s327 = sand.u32 %s211, 1
        %s328 = smul.addr %s327, 16
        %s329 = scalar_lea.vmem [#allocation6], %s328
        %s330 = smul.u32 2, %s27
        %p331 = scmp.lt.s32.totalorder %s26, 1
        %s332 = scalar_select %p331, %s26, 1
        %p333 = scmp.lt.s32.totalorder %s330, 1
        %s334 = scalar_select %p333, %s330, 1
        %s335 = smul.addr %s332, 2
        %s336 = sadd.s32 %s334, %s335
        %s337 = smul.addr %s336, 4
        %s338 = scalar_lea.vmem %s0, %s337
        %s339 = smul.u32 2, %s27
        %s340 = smul.u32 2, %s28
        %p341 = scmp.lt.s32.totalorder %s26, 1
        %s342 = scalar_select %p341, %s26, 1
        %p343 = scmp.lt.s32.totalorder %s340, 1
        %s344 = scalar_select %p343, %s340, 1
        %s345 = smul.addr %s342, 2
        %s346 = sadd.s32 %s344, %s345
        %s347 = smul.addr %s346, 4
        %s348 = scalar_lea.vmem %s1, %s347
        %s349 = smul.u32 2, %s28
        %s350 = smul.u32 2, %s27
        %p352 = scmp.eq.s32.totalorder %s28, 0
        // Predicated region
        $region49: #{tpu_custom_call.1} parent=47 // pred_check
          %p353 = pneg %p352
        $region50: #{tpu_custom_call.1} parent=47 // pred_check_branch
          %355 = sbr.rel (%p353) target = $region52
        $region51: #{tpu_custom_call.1} parent=47 // pred_region
          %vm356 = vcmask 7168
          %357 = vst.msk [vmem:[#allocation3] sm:$0xff] %vm356, -inf
          %358 = vst.msk [vmem:[#allocation3 + $0x8] sm:$0xff] %vm356, -inf
          %359 = vst.msk [vmem:[#allocation3 + $0x10] sm:$0xff] %vm356, -inf
          %360 = vst.msk [vmem:[#allocation3 + $0x18] sm:$0xff] %vm356, -inf
          %361 = vst.msk [vmem:[#allocation3 + $0x20] sm:$0xff] %vm356, -inf
          %362 = vst.msk [vmem:[#allocation3 + $0x28] sm:$0xff] %vm356, -inf
          %363 = vst.msk [vmem:[#allocation3 + $0x30] sm:$0xff] %vm356, -inf
          %364 = vst.msk [vmem:[#allocation3 + $0x38] sm:$0xff] %vm356, -inf
          %365 = vst.msk [vmem:[#allocation3 + $0x40] sm:$0xff] %vm356, -inf
          %366 = vst.msk [vmem:[#allocation3 + $0x48] sm:$0xff] %vm356, -inf
          %367 = vst.msk [vmem:[#allocation3 + $0x50] sm:$0xff] %vm356, -inf
          %368 = vst.msk [vmem:[#allocation3 + $0x58] sm:$0xff] %vm356, -inf
          %369 = vst.msk [vmem:[#allocation3 + $0x60] sm:$0xff] %vm356, -inf
          %370 = vst.msk [vmem:[#allocation3 + $0x68] sm:$0xff] %vm356, -inf
          %371 = vst.msk [vmem:[#allocation3 + $0x70] sm:$0xff] %vm356, -inf
          %372 = vst.msk [vmem:[#allocation3 + $0x78] sm:$0xff] %vm356, -inf
          %373 = vst.msk [vmem:[#allocation4] sm:$0xff] %vm356, 0.0
          %374 = vst.msk [vmem:[#allocation4 + $0x8] sm:$0xff] %vm356, 0.0
          %375 = vst.msk [vmem:[#allocation4 + $0x10] sm:$0xff] %vm356, 0.0
          %376 = vst.msk [vmem:[#allocation4 + $0x18] sm:$0xff] %vm356, 0.0
          %377 = vst.msk [vmem:[#allocation4 + $0x20] sm:$0xff] %vm356, 0.0
          %378 = vst.msk [vmem:[#allocation4 + $0x28] sm:$0xff] %vm356, 0.0
          %379 = vst.msk [vmem:[#allocation4 + $0x30] sm:$0xff] %vm356, 0.0
          %380 = vst.msk [vmem:[#allocation4 + $0x38] sm:$0xff] %vm356, 0.0
          %381 = vst.msk [vmem:[#allocation4 + $0x40] sm:$0xff] %vm356, 0.0
          %382 = vst.msk [vmem:[#allocation4 + $0x48] sm:$0xff] %vm356, 0.0
          %383 = vst.msk [vmem:[#allocation4 + $0x50] sm:$0xff] %vm356, 0.0
          %384 = vst.msk [vmem:[#allocation4 + $0x58] sm:$0xff] %vm356, 0.0
          %385 = vst.msk [vmem:[#allocation4 + $0x60] sm:$0xff] %vm356, 0.0
          %386 = vst.msk [vmem:[#allocation4 + $0x68] sm:$0xff] %vm356, 0.0
          %387 = vst.msk [vmem:[#allocation4 + $0x70] sm:$0xff] %vm356, 0.0
          %388 = vst.msk [vmem:[#allocation4 + $0x78] sm:$0xff] %vm356, 0.0
          %vm389 = vcmask 31744
          %390 = vst.msk [vmem:[#allocation5] sm:$0xff] %vm389, 0.0
          %391 = vst.msk [vmem:[#allocation5 + $0x8] sm:$0xff] %vm389, 0.0
          %392 = vst.msk [vmem:[#allocation5 + $0x10] sm:$0xff] %vm389, 0.0
          %393 = vst.msk [vmem:[#allocation5 + $0x18] sm:$0xff] %vm389, 0.0
          %394 = vst.msk [vmem:[#allocation5 + $0x20] sm:$0xff] %vm389, 0.0
          %395 = vst.msk [vmem:[#allocation5 + $0x28] sm:$0xff] %vm389, 0.0
          %396 = vst.msk [vmem:[#allocation5 + $0x30] sm:$0xff] %vm389, 0.0
          %397 = vst.msk [vmem:[#allocation5 + $0x38] sm:$0xff] %vm389, 0.0
          %398 = vst.msk [vmem:[#allocation5 + $0x40] sm:$0xff] %vm389, 0.0
          %399 = vst.msk [vmem:[#allocation5 + $0x48] sm:$0xff] %vm389, 0.0
          %400 = vst.msk [vmem:[#allocation5 + $0x50] sm:$0xff] %vm389, 0.0
          %401 = vst.msk [vmem:[#allocation5 + $0x58] sm:$0xff] %vm389, 0.0
          %402 = vst.msk [vmem:[#allocation5 + $0x60] sm:$0xff] %vm389, 0.0
          %403 = vst.msk [vmem:[#allocation5 + $0x68] sm:$0xff] %vm389, 0.0
          %404 = vst.msk [vmem:[#allocation5 + $0x70] sm:$0xff] %vm389, 0.0
          %405 = vst.msk [vmem:[#allocation5 + $0x78] sm:$0xff] %vm389, 0.0
          %v406 = vld [vmem:[%s338] sm:$0xf]
          %v407 = vld [vmem:[%s338 + $0x4] sm:$0xf]
          %v408 = vld [vmem:[%s2] sm:$0xf]
          %v409 = vld [vmem:[%s2 + $0x4] sm:$0xf]
          %v410 = vld [vmem:[%s2 + $0x8] sm:$0xf]
          %v411 = vld [vmem:[%s2 + $0xc] sm:$0xf]
          %v412 = vld [vmem:[%s2 + $0x10] sm:$0xf]
          %v413 = vld [vmem:[%s2 + $0x14] sm:$0xf]
          %v414 = vld [vmem:[%s2 + $0x18] sm:$0xf]
          %v415 = vld [vmem:[%s2 + $0x1c] sm:$0xf]
          %v416 = vld [vmem:[%s2 + $0x20] sm:$0xf]
          %v417 = vld [vmem:[%s2 + $0x24] sm:$0xf]
          %v418 = vld [vmem:[%s2 + $0x28] sm:$0xf]
          %v419 = vld [vmem:[%s2 + $0x2c] sm:$0xf]
          %v420 = vld [vmem:[%s2 + $0x30] sm:$0xf]
          %v421 = vld [vmem:[%s2 + $0x34] sm:$0xf]
          %v422 = vld [vmem:[%s2 + $0x38] sm:$0xf]
          %v423 = vld [vmem:[%s2 + $0x3c] sm:$0xf]
          %v424 = vld [vmem:[%s2 + $0x40] sm:$0xf]
          %v425 = vld [vmem:[%s2 + $0x44] sm:$0xf]
          %v426 = vld [vmem:[%s2 + $0x48] sm:$0xf]
          %v427 = vld [vmem:[%s2 + $0x4c] sm:$0xf]
          %v428 = vld [vmem:[%s2 + $0x50] sm:$0xf]
          %v429 = vld [vmem:[%s2 + $0x54] sm:$0xf]
          %v430 = vld [vmem:[%s2 + $0x58] sm:$0xf]
          %v431 = vld [vmem:[%s2 + $0x5c] sm:$0xf]
          %v432 = vld [vmem:[%s2 + $0x60] sm:$0xf]
          %v433 = vld [vmem:[%s2 + $0x64] sm:$0xf]
          %v434 = vld [vmem:[%s2 + $0x68] sm:$0xf]
          %v435 = vld [vmem:[%s2 + $0x6c] sm:$0xf]
          %v436 = vld [vmem:[%s2 + $0x70] sm:$0xf]
          %v437 = vld [vmem:[%s2 + $0x74] sm:$0xf]
          %v438 = vld [vmem:[%s2 + $0x78] sm:$0xf]
          %v439 = vld [vmem:[%s2 + $0x7c] sm:$0xf]
          %v442 = vunpack.c.l.b16 %v406
          %v443 = vunpack.c.l.b16 %v407
          %v444 = vpack.c.b16 %v443, %v442
          %v449 = vunpack.c.l.b16 %v408
          %v450 = vunpack.c.l.b16 %v409
          %v451 = vunpack.c.l.b16 %v410
          %v452 = vunpack.c.l.b16 %v411
          %v453 = vpack.c.b16 %v450, %v449
          %v454 = vpack.c.b16 %v452, %v451
          %vm457 = vcmask 261120
          %v459 = vsel %vm457, %v444, 0
          %461 = vmatprep.subr.bf16.mxu0 0
          %462 = vmatpush1.bf16.msra.mxu0 %v453
          %463 = vmatprep.subr.bf16.mxu0 0
          %464 = vmatpush1.bf16.msra.mxu0 %v454
          %465 = vmatprep.subr.bf16.mxu0 0
          %466 = vmatpush1.bf16.msra.mxu0 0
          %467 = vmatprep.subr.bf16.mxu0 0
          %468 = vmatpush1.bf16.msra.mxu0 0
          %469 = vmatprep.subr.bf16.mxu0 0
          %470 = vmatpush1.bf16.msra.mxu0 0
          %471 = vmatprep.subr.bf16.mxu0 0
          %472 = vmatpush1.bf16.msra.mxu0 0
          %473 = vmatprep.subr.bf16.mxu0 0
          %474 = vmatpush1.bf16.msra.mxu0 0
          %475 = vmatprep.subr.bf16.mxu0 0
          %476 = vmatpush1.bf16.msra.mxu0 0
          %477 = vmatprep.subr.bf16.mxu0 0
          %478 = vmatpush1.bf16.msra.mxu0 0
          %479 = vmatprep.subr.bf16.mxu0 0
          %480 = vmatpush1.bf16.msra.mxu0 0
          %481 = vmatprep.subr.bf16.mxu0 0
          %482 = vmatpush1.bf16.msra.mxu0 0
          %483 = vmatprep.subr.bf16.mxu0 0
          %484 = vmatpush1.bf16.msra.mxu0 0
          %485 = vmatprep.subr.bf16.mxu0 0
          %486 = vmatpush1.bf16.msra.mxu0 0
          %487 = vmatprep.subr.bf16.mxu0 0
          %488 = vmatpush1.bf16.msra.mxu0 0
          %489 = vmatprep.subr.bf16.mxu0 0
          %490 = vmatpush1.bf16.msra.mxu0 0
          %491 = vmatprep.subr.bf16.mxu0 0
          %492 = vmatpush1.bf16.msra.mxu0 0
          %493 = vmatprep.mubr.bf16.mxu0 0
          %494 = vmatmul.mubr.bf16.gmra.mrb[0].mxu0 %v459
          %v495 = vpop.f32.mrb[0].mxu0
          %v496 = vadd.f32 0.0, %v495
          %v497 = vpop.f32.mrb[0].mxu0
          %v498 = vpop.f32.mrb[0].mxu0
          %v499 = vadd.f32 0.0, %v498
          %v500 = vpop.f32.mrb[0].mxu0
          %501 = vdwg.mxu0
          %v506 = vunpack.c.l.b16 %v412
          %v507 = vunpack.c.l.b16 %v413
          %v508 = vunpack.c.l.b16 %v414
          %v509 = vunpack.c.l.b16 %v415
          %v510 = vpack.c.b16 %v507, %v506
          %v511 = vpack.c.b16 %v509, %v508
          %514 = vmatprep.subr.bf16.mxu0 0
          %515 = vmatpush1.bf16.msra.mxu0 %v510
          %516 = vmatprep.subr.bf16.mxu0 0
          %517 = vmatpush1.bf16.msra.mxu0 %v511
          %518 = vmatprep.subr.bf16.mxu0 0
          %519 = vmatpush1.bf16.msra.mxu0 0
          %520 = vmatprep.subr.bf16.mxu0 0
          %521 = vmatpush1.bf16.msra.mxu0 0
          %522 = vmatprep.subr.bf16.mxu0 0
          %523 = vmatpush1.bf16.msra.mxu0 0
          %524 = vmatprep.subr.bf16.mxu0 0
          %525 = vmatpush1.bf16.msra.mxu0 0
          %526 = vmatprep.subr.bf16.mxu0 0
          %527 = vmatpush1.bf16.msra.mxu0 0
          %528 = vmatprep.subr.bf16.mxu0 0
          %529 = vmatpush1.bf16.msra.mxu0 0
          %530 = vmatprep.subr.bf16.mxu0 0
          %531 = vmatpush1.bf16.msra.mxu0 0
          %532 = vmatprep.subr.bf16.mxu0 0
          %533 = vmatpush1.bf16.msra.mxu0 0
          %534 = vmatprep.subr.bf16.mxu0 0
          %535 = vmatpush1.bf16.msra.mxu0 0
          %536 = vmatprep.subr.bf16.mxu0 0
          %537 = vmatpush1.bf16.msra.mxu0 0
          %538 = vmatprep.subr.bf16.mxu0 0
          %539 = vmatpush1.bf16.msra.mxu0 0
          %540 = vmatprep.subr.bf16.mxu0 0
          %541 = vmatpush1.bf16.msra.mxu0 0
          %542 = vmatprep.subr.bf16.mxu0 0
          %543 = vmatpush1.bf16.msra.mxu0 0
          %544 = vmatprep.subr.bf16.mxu0 0
          %545 = vmatpush1.bf16.msra.mxu0 0
          %546 = vmatprep.mubr.bf16.mxu0 0
          %547 = vmatmul.mubr.bf16.gmra.mrb[0].mxu0 %v459
          %v548 = vpop.f32.mrb[0].mxu0
          %v549 = vadd.f32 0.0, %v548
          %v550 = vpop.f32.mrb[0].mxu0
          %v551 = vpop.f32.mrb[0].mxu0
          %v552 = vadd.f32 0.0, %v551
          %v553 = vpop.f32.mrb[0].mxu0
          %554 = vdwg.mxu0
          %v559 = vunpack.c.l.b16 %v416
          %v560 = vunpack.c.l.b16 %v417
          %v561 = vunpack.c.l.b16 %v418
          %v562 = vunpack.c.l.b16 %v419
          %v563 = vpack.c.b16 %v560, %v559
          %v564 = vpack.c.b16 %v562, %v561
          %567 = vmatprep.subr.bf16.mxu0 0
          %568 = vmatpush1.bf16.msra.mxu0 %v563
          %569 = vmatprep.subr.bf16.mxu0 0
          %570 = vmatpush1.bf16.msra.mxu0 %v564
          %571 = vmatprep.subr.bf16.mxu0 0
          %572 = vmatpush1.bf16.msra.mxu0 0
          %573 = vmatprep.subr.bf16.mxu0 0
          %574 = vmatpush1.bf16.msra.mxu0 0
          %575 = vmatprep.subr.bf16.mxu0 0
          %576 = vmatpush1.bf16.msra.mxu0 0
          %577 = vmatprep.subr.bf16.mxu0 0
          %578 = vmatpush1.bf16.msra.mxu0 0
          %579 = vmatprep.subr.bf16.mxu0 0
          %580 = vmatpush1.bf16.msra.mxu0 0
          %581 = vmatprep.subr.bf16.mxu0 0
          %582 = vmatpush1.bf16.msra.mxu0 0
          %583 = vmatprep.subr.bf16.mxu0 0
          %584 = vmatpush1.bf16.msra.mxu0 0
          %585 = vmatprep.subr.bf16.mxu0 0
          %586 = vmatpush1.bf16.msra.mxu0 0
          %587 = vmatprep.subr.bf16.mxu0 0
          %588 = vmatpush1.bf16.msra.mxu0 0
          %589 = vmatprep.subr.bf16.mxu0 0
          %590 = vmatpush1.bf16.msra.mxu0 0
          %591 = vmatprep.subr.bf16.mxu0 0
          %592 = vmatpush1.bf16.msra.mxu0 0
          %593 = vmatprep.subr.bf16.mxu0 0
          %594 = vmatpush1.bf16.msra.mxu0 0
          %595 = vmatprep.subr.bf16.mxu0 0
          %596 = vmatpush1.bf16.msra.mxu0 0
          %597 = vmatprep.subr.bf16.mxu0 0
          %598 = vmatpush1.bf16.msra.mxu0 0
          %599 = vmatprep.mubr.bf16.mxu0 0
          %600 = vmatmul.mubr.bf16.gmra.mrb[0].mxu0 %v459
          %v601 = vpop.f32.mrb[0].mxu0
          %v602 = vadd.f32 0.0, %v601
          %v603 = vpop.f32.mrb[0].mxu0
          %v604 = vpop.f32.mrb[0].mxu0
          %v605 = vadd.f32 0.0, %v604
          %v606 = vpop.f32.mrb[0].mxu0
          %607 = vdwg.mxu0
          %v612 = vunpack.c.l.b16 %v420
          %v613 = vunpack.c.l.b16 %v421
          %v614 = vunpack.c.l.b16 %v422
          %v615 = vunpack.c.l.b16 %v423
          %v616 = vpack.c.b16 %v613, %v612
          %v617 = vpack.c.b16 %v615, %v614
          %620 = vmatprep.subr.bf16.mxu0 0
          %621 = vmatpush1.bf16.msra.mxu0 %v616
          %622 = vmatprep.subr.bf16.mxu0 0
          %623 = vmatpush1.bf16.msra.mxu0 %v617
          %624 = vmatprep.subr.bf16.mxu0 0
          %625 = vmatpush1.bf16.msra.mxu0 0
          %626 = vmatprep.subr.bf16.mxu0 0
          %627 = vmatpush1.bf16.msra.mxu0 0
          %628 = vmatprep.subr.bf16.mxu0 0
          %629 = vmatpush1.bf16.msra.mxu0 0
          %630 = vmatprep.subr.bf16.mxu0 0
          %631 = vmatpush1.bf16.msra.mxu0 0
          %632 = vmatprep.subr.bf16.mxu0 0
          %633 = vmatpush1.bf16.msra.mxu0 0
          %634 = vmatprep.subr.bf16.mxu0 0
          %635 = vmatpush1.bf16.msra.mxu0 0
          %636 = vmatprep.subr.bf16.mxu0 0
          %637 = vmatpush1.bf16.msra.mxu0 0
          %638 = vmatprep.subr.bf16.mxu0 0
          %639 = vmatpush1.bf16.msra.mxu0 0
          %640 = vmatprep.subr.bf16.mxu0 0
          %641 = vmatpush1.bf16.msra.mxu0 0
          %642 = vmatprep.subr.bf16.mxu0 0
          %643 = vmatpush1.bf16.msra.mxu0 0
          %644 = vmatprep.subr.bf16.mxu0 0
          %645 = vmatpush1.bf16.msra.mxu0 0
          %646 = vmatprep.subr.bf16.mxu0 0
          %647 = vmatpush1.bf16.msra.mxu0 0
          %648 = vmatprep.subr.bf16.mxu0 0
          %649 = vmatpush1.bf16.msra.mxu0 0
          %650 = vmatprep.subr.bf16.mxu0 0
          %651 = vmatpush1.bf16.msra.mxu0 0
          %652 = vmatprep.mubr.bf16.mxu0 0
          %653 = vmatmul.mubr.bf16.gmra.mrb[0].mxu0 %v459
          %v654 = vpop.f32.mrb[0].mxu0
          %v655 = vadd.f32 0.0, %v654
          %v656 = vpop.f32.mrb[0].mxu0
          %v657 = vpop.f32.mrb[0].mxu0
          %v658 = vadd.f32 0.0, %v657
          %v659 = vpop.f32.mrb[0].mxu0
          %660 = vdwg.mxu0
          %v665 = vunpack.c.l.b16 %v424
          %v666 = vunpack.c.l.b16 %v425
          %v667 = vunpack.c.l.b16 %v426
          %v668 = vunpack.c.l.b16 %v427
          %v669 = vpack.c.b16 %v666, %v665
          %v670 = vpack.c.b16 %v668, %v667
          %673 = vmatprep.subr.bf16.mxu0 0
          %674 = vmatpush1.bf16.msra.mxu0 %v669
          %675 = vmatprep.subr.bf16.mxu0 0
          %676 = vmatpush1.bf16.msra.mxu0 %v670
          %677 = vmatprep.subr.bf16.mxu0 0
          %678 = vmatpush1.bf16.msra.mxu0 0
          %679 = vmatprep.subr.bf16.mxu0 0
          %680 = vmatpush1.bf16.msra.mxu0 0
          %681 = vmatprep.subr.bf16.mxu0 0
          %682 = vmatpush1.bf16.msra.mxu0 0
          %683 = vmatprep.subr.bf16.mxu0 0
          %684 = vmatpush1.bf16.msra.mxu0 0
          %685 = vmatprep.subr.bf16.mxu0 0
          %686 = vmatpush1.bf16.msra.mxu0 0
          %687 = vmatprep.subr.bf16.mxu0 0
          %688 = vmatpush1.bf16.msra.mxu0 0
          %689 = vmatprep.subr.bf16.mxu0 0
          %690 = vmatpush1.bf16.msra.mxu0 0
          %691 = vmatprep.subr.bf16.mxu0 0
          %692 = vmatpush1.bf16.msra.mxu0 0
          %693 = vmatprep.subr.bf16.mxu0 0
          %694 = vmatpush1.bf16.msra.mxu0 0
          %695 = vmatprep.subr.bf16.mxu0 0
          %696 = vmatpush1.bf16.msra.mxu0 0
          %697 = vmatprep.subr.bf16.mxu0 0
          %698 = vmatpush1.bf16.msra.mxu0 0
          %699 = vmatprep.subr.bf16.mxu0 0
          %700 = vmatpush1.bf16.msra.mxu0 0
          %701 = vmatprep.subr.bf16.mxu0 0
          %702 = vmatpush1.bf16.msra.mxu0 0
          %703 = vmatprep.subr.bf16.mxu0 0
          %704 = vmatpush1.bf16.msra.mxu0 0
          %705 = vmatprep.mubr.bf16.mxu0 0
          %706 = vmatmul.mubr.bf16.gmra.mrb[0].mxu0 %v459
          %v707 = vpop.f32.mrb[0].mxu0
          %v708 = vadd.f32 0.0, %v707
          %v709 = vpop.f32.mrb[0].mxu0
          %v710 = vpop.f32.mrb[0].mxu0
          %v711 = vadd.f32 0.0, %v710
          %v712 = vpop.f32.mrb[0].mxu0
          %713 = vdwg.mxu0
          %v718 = vunpack.c.l.b16 %v428
          %v719 = vunpack.c.l.b16 %v429
          %v720 = vunpack.c.l.b16 %v430
          %v721 = vunpack.c.l.b16 %v431
          %v722 = vpack.c.b16 %v719, %v718
          %v723 = vpack.c.b16 %v721, %v720
          %726 = vmatprep.subr.bf16.mxu0 0
          %727 = vmatpush1.bf16.msra.mxu0 %v722
          %728 = vmatprep.subr.bf16.mxu0 0
          %729 = vmatpush1.bf16.msra.mxu0 %v723
          %730 = vmatprep.subr.bf16.mxu0 0
          %731 = vmatpush1.bf16.msra.mxu0 0
          %732 = vmatprep.subr.bf16.mxu0 0
          %733 = vmatpush1.bf16.msra.mxu0 0
          %734 = vmatprep.subr.bf16.mxu0 0
          %735 = vmatpush1.bf16.msra.mxu0 0
          %736 = vmatprep.subr.bf16.mxu0 0
          %737 = vmatpush1.bf16.msra.mxu0 0
          %738 = vmatprep.subr.bf16.mxu0 0
          %739 = vmatpush1.bf16.msra.mxu0 0
          %740 = vmatprep.subr.bf16.mxu0 0
          %741 = vmatpush1.bf16.msra.mxu0 0
          %742 = vmatprep.subr.bf16.mxu0 0
          %743 = vmatpush1.bf16.msra.mxu0 0
          %744 = vmatprep.subr.bf16.mxu0 0
          %745 = vmatpush1.bf16.msra.mxu0 0
          %746 = vmatprep.subr.bf16.mxu0 0
          %747 = vmatpush1.bf16.msra.mxu0 0
          %748 = vmatprep.subr.bf16.mxu0 0
          %749 = vmatpush1.bf16.msra.mxu0 0
          %750 = vmatprep.subr.bf16.mxu0 0
          %751 = vmatpush1.bf16.msra.mxu0 0
          %752 = vmatprep.subr.bf16.mxu0 0
          %753 = vmatpush1.bf16.msra.mxu0 0
          %754 = vmatprep.subr.bf16.mxu0 0
          %755 = vmatpush1.bf16.msra.mxu0 0
          %756 = vmatprep.subr.bf16.mxu0 0
          %757 = vmatpush1.bf16.msra.mxu0 0
          %758 = vmatprep.mubr.bf16.mxu0 0
          %759 = vmatmul.mubr.bf16.gmra.mrb[0].mxu0 %v459
          %v760 = vpop.f32.mrb[0].mxu0
          %v761 = vadd.f32 0.0, %v760
          %v762 = vpop.f32.mrb[0].mxu0
          %v763 = vpop.f32.mrb[0].mxu0
          %v764 = vadd.f32 0.0, %v763
          %v765 = vpop.f32.mrb[0].mxu0
          %766 = vdwg.mxu0
          %v771 = vunpack.c.l.b16 %v432
          %v772 = vunpack.c.l.b16 %v433
          %v773 = vunpack.c.l.b16 %v434
          %v774 = vunpack.c.l.b16 %v435
          %v775 = vpack.c.b16 %v772, %v771
          %v776 = vpack.c.b16 %v774, %v773
          %779 = vmatprep.subr.bf16.mxu0 0
          %780 = vmatpush1.bf16.msra.mxu0 %v775
          %781 = vmatprep.subr.bf16.mxu0 0
          %782 = vmatpush1.bf16.msra.mxu0 %v776
          %783 = vmatprep.subr.bf16.mxu0 0
          %784 = vmatpush1.bf16.msra.mxu0 0
          %785 = vmatprep.subr.bf16.mxu0 0
          %786 = vmatpush1.bf16.msra.mxu0 0
          %787 = vmatprep.subr.bf16.mxu0 0
          %788 = vmatpush1.bf16.msra.mxu0 0
          %789 = vmatprep.subr.bf16.mxu0 0
          %790 = vmatpush1.bf16.msra.mxu0 0
          %791 = vmatprep.subr.bf16.mxu0 0
          %792 = vmatpush1.bf16.msra.mxu0 0
          %793 = vmatprep.subr.bf16.mxu0 0
          %794 = vmatpush1.bf16.msra.mxu0 0
          %795 = vmatprep.subr.bf16.mxu0 0
          %796 = vmatpush1.bf16.msra.mxu0 0
          %797 = vmatprep.subr.bf16.mxu0 0
          %798 = vmatpush1.bf16.msra.mxu0 0
          %799 = vmatprep.subr.bf16.mxu0 0
          %800 = vmatpush1.bf16.msra.mxu0 0
          %801 = vmatprep.subr.bf16.mxu0 0
          %802 = vmatpush1.bf16.msra.mxu0 0
          %803 = vmatprep.subr.bf16.mxu0 0
          %804 = vmatpush1.bf16.msra.mxu0 0
          %805 = vmatprep.subr.bf16.mxu0 0
          %806 = vmatpush1.bf16.msra.mxu0 0
          %807 = vmatprep.subr.bf16.mxu0 0
          %808 = vmatpush1.bf16.msra.mxu0 0
          %809 = vmatprep.subr.bf16.mxu0 0
          %810 = vmatpush1.bf16.msra.mxu0 0
          %811 = vmatprep.mubr.bf16.mxu0 0
          %812 = vmatmul.mubr.bf16.gmra.mrb[0].mxu0 %v459
          %v813 = vpop.f32.mrb[0].mxu0
          %v814 = vadd.f32 0.0, %v813
          %v815 = vpop.f32.mrb[0].mxu0
          %v816 = vpop.f32.mrb[0].mxu0
          %v817 = vadd.f32 0.0, %v816
          %v818 = vpop.f32.mrb[0].mxu0
          %819 = vdwg.mxu0
          %v824 = vunpack.c.l.b16 %v436
          %v825 = vunpack.c.l.b16 %v437
          %v826 = vunpack.c.l.b16 %v438
          %v827 = vunpack.c.l.b16 %v439
          %v828 = vpack.c.b16 %v825, %v824
          %v829 = vpack.c.b16 %v827, %v826
          %832 = vmatprep.subr.bf16.mxu0 0
          %833 = vmatpush1.bf16.msra.mxu0 %v828
          %834 = vmatprep.subr.bf16.mxu0 0
          %835 = vmatpush1.bf16.msra.mxu0 %v829
          %836 = vmatprep.subr.bf16.mxu0 0
          %837 = vmatpush1.bf16.msra.mxu0 0
          %838 = vmatprep.subr.bf16.mxu0 0
          %839 = vmatpush1.bf16.msra.mxu0 0
          %840 = vmatprep.subr.bf16.mxu0 0
          %841 = vmatpush1.bf16.msra.mxu0 0
          %842 = vmatprep.subr.bf16.mxu0 0
          %843 = vmatpush1.bf16.msra.mxu0 0
          %844 = vmatprep.subr.bf16.mxu0 0
          %845 = vmatpush1.bf16.msra.mxu0 0
          %846 = vmatprep.subr.bf16.mxu0 0
          %847 = vmatpush1.bf16.msra.mxu0 0
          %848 = vmatprep.subr.bf16.mxu0 0
          %849 = vmatpush1.bf16.msra.mxu0 0
          %850 = vmatprep.subr.bf16.mxu0 0
          %851 = vmatpush1.bf16.msra.mxu0 0
          %852 = vmatprep.subr.bf16.mxu0 0
          %853 = vmatpush1.bf16.msra.mxu0 0
          %854 = vmatprep.subr.bf16.mxu0 0
          %855 = vmatpush1.bf16.msra.mxu0 0
          %856 = vmatprep.subr.bf16.mxu0 0
          %857 = vmatpush1.bf16.msra.mxu0 0
          %858 = vmatprep.subr.bf16.mxu0 0
          %859 = vmatpush1.bf16.msra.mxu0 0
          %860 = vmatprep.subr.bf16.mxu0 0
          %861 = vmatpush1.bf16.msra.mxu0 0
          %862 = vmatprep.subr.bf16.mxu0 0
          %863 = vmatpush1.bf16.msra.mxu0 0
          %864 = vmatprep.mubr.bf16.mxu0 0
          %865 = vmatmul.mubr.bf16.gmra.mrb[0].mxu0 %v459
          %v866 = vpop.f32.mrb[0].mxu0
          %v867 = vadd.f32 0.0, %v866
          %v868 = vpop.f32.mrb[0].mxu0
          %v869 = vpop.f32.mrb[0].mxu0
          %v870 = vadd.f32 0.0, %v869
          %v871 = vpop.f32.mrb[0].mxu0
          %872 = vdwg.mxu0
          %v873 = vpack.c.bf16 %v499, %v496
          %v874 = vpack.c.bf16 %v552, %v549
          %v875 = vpack.c.bf16 %v605, %v602
          %v876 = vpack.c.bf16 %v658, %v655
          %v877 = vpack.c.bf16 %v711, %v708
          %v878 = vpack.c.bf16 %v764, %v761
          %v879 = vpack.c.bf16 %v817, %v814
          %v880 = vpack.c.bf16 %v870, %v867
          %881 = vst.msk [vmem:[#allocation2] sm:$0xff] %vm389, %v873
          %882 = vst.msk [vmem:[#allocation2 + $0x8] sm:$0xff] %vm389, %v874
          %883 = vst.msk [vmem:[#allocation2 + $0x10] sm:$0xff] %vm389, %v875
          %884 = vst.msk [vmem:[#allocation2 + $0x18] sm:$0xff] %vm389, %v876
          %885 = vst.msk [vmem:[#allocation2 + $0x20] sm:$0xff] %vm389, %v877
          %886 = vst.msk [vmem:[#allocation2 + $0x28] sm:$0xff] %vm389, %v878
          %887 = vst.msk [vmem:[#allocation2 + $0x30] sm:$0xff] %vm389, %v879
          %888 = vst.msk [vmem:[#allocation2 + $0x38] sm:$0xff] %vm389, %v880
        $region52: #{tpu_custom_call.1} parent=47 // pred_fallthru
          _
        %v889 = vld [vmem:[%s348] sm:$0xf]
        %v890 = vld [vmem:[%s348 + $0x4] sm:$0xf]
        %v891 = vld [vmem:[%s3] sm:$0xf]
        %v892 = vld [vmem:[%s3 + $0x4] sm:$0xf]
        %v893 = vld [vmem:[%s3 + $0x8] sm:$0xf]
        %v894 = vld [vmem:[%s3 + $0xc] sm:$0xf]
        %v895 = vld [vmem:[%s3 + $0x10] sm:$0xf]
        %v896 = vld [vmem:[%s3 + $0x14] sm:$0xf]
        %v897 = vld [vmem:[%s3 + $0x18] sm:$0xf]
        %v898 = vld [vmem:[%s3 + $0x1c] sm:$0xf]
        %v899 = vld [vmem:[%s3 + $0x20] sm:$0xf]
        %v900 = vld [vmem:[%s3 + $0x24] sm:$0xf]
        %v901 = vld [vmem:[%s3 + $0x28] sm:$0xf]
        %v902 = vld [vmem:[%s3 + $0x2c] sm:$0xf]
        %v903 = vld [vmem:[%s3 + $0x30] sm:$0xf]
        %v904 = vld [vmem:[%s3 + $0x34] sm:$0xf]
        %v905 = vld [vmem:[%s3 + $0x38] sm:$0xf]
        %v906 = vld [vmem:[%s3 + $0x3c] sm:$0xf]
        %v907 = vld [vmem:[%s3 + $0x40] sm:$0xf]
        %v908 = vld [vmem:[%s3 + $0x44] sm:$0xf]
        %v909 = vld [vmem:[%s3 + $0x48] sm:$0xf]
        %v910 = vld [vmem:[%s3 + $0x4c] sm:$0xf]
        %v911 = vld [vmem:[%s3 + $0x50] sm:$0xf]
        %v912 = vld [vmem:[%s3 + $0x54] sm:$0xf]
        %v913 = vld [vmem:[%s3 + $0x58] sm:$0xf]
        %v914 = vld [vmem:[%s3 + $0x5c] sm:$0xf]
        %v915 = vld [vmem:[%s3 + $0x60] sm:$0xf]
        %v916 = vld [vmem:[%s3 + $0x64] sm:$0xf]
        %v917 = vld [vmem:[%s3 + $0x68] sm:$0xf]
        %v918 = vld [vmem:[%s3 + $0x6c] sm:$0xf]
        %v919 = vld [vmem:[%s3 + $0x70] sm:$0xf]
        %v920 = vld [vmem:[%s3 + $0x74] sm:$0xf]
        %v921 = vld [vmem:[%s3 + $0x78] sm:$0xf]
        %v922 = vld [vmem:[%s3 + $0x7c] sm:$0xf]
        %v925 = vunpack.c.l.b16 %v889
        %v926 = vunpack.c.l.b16 %v890
        %v927 = vpack.c.b16 %v926, %v925
        %v932 = vunpack.c.l.b16 %v891
        %v933 = vunpack.c.l.b16 %v892
        %v934 = vunpack.c.l.b16 %v893
        %v935 = vunpack.c.l.b16 %v894
        %v936 = vpack.c.b16 %v933, %v932
        %v937 = vpack.c.b16 %v935, %v934
        %vm940 = vcmask 261120
        %v942 = vsel %vm940, %v927, 0
        %944 = vmatprep.subr.bf16.mxu0 0
        %945 = vmatpush1.bf16.msra.mxu0 %v936
        %946 = vmatprep.subr.bf16.mxu0 0
        %947 = vmatpush1.bf16.msra.mxu0 %v937
        %948 = vmatprep.subr.bf16.mxu0 0
        %949 = vmatpush1.bf16.msra.mxu0 0
        %950 = vmatprep.subr.bf16.mxu0 0
        %951 = vmatpush1.bf16.msra.mxu0 0
        %952 = vmatprep.subr.bf16.mxu0 0
        %953 = vmatpush1.bf16.msra.mxu0 0
        %954 = vmatprep.subr.bf16.mxu0 0
        %955 = vmatpush1.bf16.msra.mxu0 0
        %956 = vmatprep.subr.bf16.mxu0 0
        %957 = vmatpush1.bf16.msra.mxu0 0
        %958 = vmatprep.subr.bf16.mxu0 0
        %959 = vmatpush1.bf16.msra.mxu0 0
        %960 = vmatprep.subr.bf16.mxu0 0
        %961 = vmatpush1.bf16.msra.mxu0 0
        %962 = vmatprep.subr.bf16.mxu0 0
        %963 = vmatpush1.bf16.msra.mxu0 0
        %964 = vmatprep.subr.bf16.mxu0 0
        %965 = vmatpush1.bf16.msra.mxu0 0
        %966 = vmatprep.subr.bf16.mxu0 0
        %967 = vmatpush1.bf16.msra.mxu0 0
        %968 = vmatprep.subr.bf16.mxu0 0
        %969 = vmatpush1.bf16.msra.mxu0 0
        %970 = vmatprep.subr.bf16.mxu0 0
        %971 = vmatpush1.bf16.msra.mxu0 0
        %972 = vmatprep.subr.bf16.mxu0 0
        %973 = vmatpush1.bf16.msra.mxu0 0
        %974 = vmatprep.subr.bf16.mxu0 0
        %975 = vmatpush1.bf16.msra.mxu0 0
        %976 = vmatprep.mubr.bf16.mxu0 0
        %977 = vmatmul.mubr.bf16.gmra.mrb[0].mxu0 %v942
        %v978 = vpop.f32.mrb[0].mxu0
        %v979 = vadd.f32 0.0, %v978
        %v980 = vpop.f32.mrb[0].mxu0
        %v981 = vpop.f32.mrb[0].mxu0
        %v982 = vadd.f32 0.0, %v981
        %v983 = vpop.f32.mrb[0].mxu0
        %984 = vdwg.mxu0
        %v989 = vunpack.c.l.b16 %v895
        %v990 = vunpack.c.l.b16 %v896
        %v991 = vunpack.c.l.b16 %v897
        %v992 = vunpack.c.l.b16 %v898
        %v993 = vpack.c.b16 %v990, %v989
        %v994 = vpack.c.b16 %v992, %v991
        %997 = vmatprep.subr.bf16.mxu0 0
        %998 = vmatpush1.bf16.msra.mxu0 %v993
        %999 = vmatprep.subr.bf16.mxu0 0
        %1000 = vmatpush1.bf16.msra.mxu0 %v994
        %1001 = vmatprep.subr.bf16.mxu0 0
        %1002 = vmatpush1.bf16.msra.mxu0 0
        %1003 = vmatprep.subr.bf16.mxu0 0
        %1004 = vmatpush1.bf16.msra.mxu0 0
        %1005 = vmatprep.subr.bf16.mxu0 0
        %1006 = vmatpush1.bf16.msra.mxu0 0
        %1007 = vmatprep.subr.bf16.mxu0 0
        %1008 = vmatpush1.bf16.msra.mxu0 0
        %1009 = vmatprep.subr.bf16.mxu0 0
        %1010 = vmatpush1.bf16.msra.mxu0 0
        %1011 = vmatprep.subr.bf16.mxu0 0
        %1012 = vmatpush1.bf16.msra.mxu0 0
        %1013 = vmatprep.subr.bf16.mxu0 0
        %1014 = vmatpush1.bf16.msra.mxu0 0
        %1015 = vmatprep.subr.bf16.mxu0 0
        %1016 = vmatpush1.bf16.msra.mxu0 0
        %1017 = vmatprep.subr.bf16.mxu0 0
        %1018 = vmatpush1.bf16.msra.mxu0 0
        %1019 = vmatprep.subr.bf16.mxu0 0
        %1020 = vmatpush1.bf16.msra.mxu0 0
        %1021 = vmatprep.subr.bf16.mxu0 0
        %1022 = vmatpush1.bf16.msra.mxu0 0
        %1023 = vmatprep.subr.bf16.mxu0 0
        %1024 = vmatpush1.bf16.msra.mxu0 0
        %1025 = vmatprep.subr.bf16.mxu0 0
        %1026 = vmatpush1.bf16.msra.mxu0 0
        %1027 = vmatprep.subr.bf16.mxu0 0
        %1028 = vmatpush1.bf16.msra.mxu0 0
        %1029 = vmatprep.mubr.bf16.mxu0 0
        %1030 = vmatmul.mubr.bf16.gmra.mrb[0].mxu0 %v942
        %v1031 = vpop.f32.mrb[0].mxu0
        %v1032 = vadd.f32 0.0, %v1031
        %v1033 = vpop.f32.mrb[0].mxu0
        %v1034 = vpop.f32.mrb[0].mxu0
        %v1035 = vadd.f32 0.0, %v1034
        %v1036 = vpop.f32.mrb[0].mxu0
        %1037 = vdwg.mxu0
        %v1042 = vunpack.c.l.b16 %v899
        %v1043 = vunpack.c.l.b16 %v900
        %v1044 = vunpack.c.l.b16 %v901
        %v1045 = vunpack.c.l.b16 %v902
        %v1046 = vpack.c.b16 %v1043, %v1042
        %v1047 = vpack.c.b16 %v1045, %v1044
        %1050 = vmatprep.subr.bf16.mxu0 0
        %1051 = vmatpush1.bf16.msra.mxu0 %v1046
        %1052 = vmatprep.subr.bf16.mxu0 0
        %1053 = vmatpush1.bf16.msra.mxu0 %v1047
        %1054 = vmatprep.subr.bf16.mxu0 0
        %1055 = vmatpush1.bf16.msra.mxu0 0
        %1056 = vmatprep.subr.bf16.mxu0 0
        %1057 = vmatpush1.bf16.msra.mxu0 0
        %1058 = vmatprep.subr.bf16.mxu0 0
        %1059 = vmatpush1.bf16.msra.mxu0 0
        %1060 = vmatprep.subr.bf16.mxu0 0
        %1061 = vmatpush1.bf16.msra.mxu0 0
        %1062 = vmatprep.subr.bf16.mxu0 0
        %1063 = vmatpush1.bf16.msra.mxu0 0
        %1064 = vmatprep.subr.bf16.mxu0 0
        %1065 = vmatpush1.bf16.msra.mxu0 0
        %1066 = vmatprep.subr.bf16.mxu0 0
        %1067 = vmatpush1.bf16.msra.mxu0 0
        %1068 = vmatprep.subr.bf16.mxu0 0
        %1069 = vmatpush1.bf16.msra.mxu0 0
        %1070 = vmatprep.subr.bf16.mxu0 0
        %1071 = vmatpush1.bf16.msra.mxu0 0
        %1072 = vmatprep.subr.bf16.mxu0 0
        %1073 = vmatpush1.bf16.msra.mxu0 0
        %1074 = vmatprep.subr.bf16.mxu0 0
        %1075 = vmatpush1.bf16.msra.mxu0 0
        %1076 = vmatprep.subr.bf16.mxu0 0
        %1077 = vmatpush1.bf16.msra.mxu0 0
        %1078 = vmatprep.subr.bf16.mxu0 0
        %1079 = vmatpush1.bf16.msra.mxu0 0
        %1080 = vmatprep.subr.bf16.mxu0 0
        %1081 = vmatpush1.bf16.msra.mxu0 0
        %1082 = vmatprep.mubr.bf16.mxu0 0
        %1083 = vmatmul.mubr.bf16.gmra.mrb[0].mxu0 %v942
        %v1084 = vpop.f32.mrb[0].mxu0
        %v1085 = vadd.f32 0.0, %v1084
        %v1086 = vpop.f32.mrb[0].mxu0
        %v1087 = vpop.f32.mrb[0].mxu0
        %v1088 = vadd.f32 0.0, %v1087
        %v1089 = vpop.f32.mrb[0].mxu0
        %1090 = vdwg.mxu0
        %v1095 = vunpack.c.l.b16 %v903
        %v1096 = vunpack.c.l.b16 %v904
        %v1097 = vunpack.c.l.b16 %v905
        %v1098 = vunpack.c.l.b16 %v906
        %v1099 = vpack.c.b16 %v1096, %v1095
        %v1100 = vpack.c.b16 %v1098, %v1097
        %1103 = vmatprep.subr.bf16.mxu0 0
        %1104 = vmatpush1.bf16.msra.mxu0 %v1099
        %1105 = vmatprep.subr.bf16.mxu0 0
        %1106 = vmatpush1.bf16.msra.mxu0 %v1100
        %1107 = vmatprep.subr.bf16.mxu0 0
        %1108 = vmatpush1.bf16.msra.mxu0 0
        %1109 = vmatprep.subr.bf16.mxu0 0
        %1110 = vmatpush1.bf16.msra.mxu0 0
        %1111 = vmatprep.subr.bf16.mxu0 0
        %1112 = vmatpush1.bf16.msra.mxu0 0
        %1113 = vmatprep.subr.bf16.mxu0 0
        %1114 = vmatpush1.bf16.msra.mxu0 0
        %1115 = vmatprep.subr.bf16.mxu0 0
        %1116 = vmatpush1.bf16.msra.mxu0 0
        %1117 = vmatprep.subr.bf16.mxu0 0
        %1118 = vmatpush1.bf16.msra.mxu0 0
        %1119 = vmatprep.subr.bf16.mxu0 0
        %1120 = vmatpush1.bf16.msra.mxu0 0
        %1121 = vmatprep.subr.bf16.mxu0 0
        %1122 = vmatpush1.bf16.msra.mxu0 0
        %1123 = vmatprep.subr.bf16.mxu0 0
        %1124 = vmatpush1.bf16.msra.mxu0 0
        %1125 = vmatprep.subr.bf16.mxu0 0
        %1126 = vmatpush1.bf16.msra.mxu0 0
        %1127 = vmatprep.subr.bf16.mxu0 0
        %1128 = vmatpush1.bf16.msra.mxu0 0
        %1129 = vmatprep.subr.bf16.mxu0 0
        %1130 = vmatpush1.bf16.msra.mxu0 0
        %1131 = vmatprep.subr.bf16.mxu0 0
        %1132 = vmatpush1.bf16.msra.mxu0 0
        %1133 = vmatprep.subr.bf16.mxu0 0
        %1134 = vmatpush1.bf16.msra.mxu0 0
        %1135 = vmatprep.mubr.bf16.mxu0 0
        %1136 = vmatmul.mubr.bf16.gmra.mrb[0].mxu0 %v942
        %v1137 = vpop.f32.mrb[0].mxu0
        %v1138 = vadd.f32 0.0, %v1137
        %v1139 = vpop.f32.mrb[0].mxu0
        %v1140 = vpop.f32.mrb[0].mxu0
        %v1141 = vadd.f32 0.0, %v1140
        %v1142 = vpop.f32.mrb[0].mxu0
        %1143 = vdwg.mxu0
        %v1148 = vunpack.c.l.b16 %v907
        %v1149 = vunpack.c.l.b16 %v908
        %v1150 = vunpack.c.l.b16 %v909
        %v1151 = vunpack.c.l.b16 %v910
        %v1152 = vpack.c.b16 %v1149, %v1148
        %v1153 = vpack.c.b16 %v1151, %v1150
        %1156 = vmatprep.subr.bf16.mxu0 0
        %1157 = vmatpush1.bf16.msra.mxu0 %v1152
        %1158 = vmatprep.subr.bf16.mxu0 0
        %1159 = vmatpush1.bf16.msra.mxu0 %v1153
        %1160 = vmatprep.subr.bf16.mxu0 0
        %1161 = vmatpush1.bf16.msra.mxu0 0
        %1162 = vmatprep.subr.bf16.mxu0 0
        %1163 = vmatpush1.bf16.msra.mxu0 0
        %1164 = vmatprep.subr.bf16.mxu0 0
        %1165 = vmatpush1.bf16.msra.mxu0 0
        %1166 = vmatprep.subr.bf16.mxu0 0
        %1167 = vmatpush1.bf16.msra.mxu0 0
        %1168 = vmatprep.subr.bf16.mxu0 0
        %1169 = vmatpush1.bf16.msra.mxu0 0
        %1170 = vmatprep.subr.bf16.mxu0 0
        %1171 = vmatpush1.bf16.msra.mxu0 0
        %1172 = vmatprep.subr.bf16.mxu0 0
        %1173 = vmatpush1.bf16.msra.mxu0 0
        %1174 = vmatprep.subr.bf16.mxu0 0
        %1175 = vmatpush1.bf16.msra.mxu0 0
        %1176 = vmatprep.subr.bf16.mxu0 0
        %1177 = vmatpush1.bf16.msra.mxu0 0
        %1178 = vmatprep.subr.bf16.mxu0 0
        %1179 = vmatpush1.bf16.msra.mxu0 0
        %1180 = vmatprep.subr.bf16.mxu0 0
        %1181 = vmatpush1.bf16.msra.mxu0 0
        %1182 = vmatprep.subr.bf16.mxu0 0
        %1183 = vmatpush1.bf16.msra.mxu0 0
        %1184 = vmatprep.subr.bf16.mxu0 0
        %1185 = vmatpush1.bf16.msra.mxu0 0
        %1186 = vmatprep.subr.bf16.mxu0 0
        %1187 = vmatpush1.bf16.msra.mxu0 0
        %1188 = vmatprep.mubr.bf16.mxu0 0
        %1189 = vmatmul.mubr.bf16.gmra.mrb[0].mxu0 %v942
        %v1190 = vpop.f32.mrb[0].mxu0
        %v1191 = vadd.f32 0.0, %v1190
        %v1192 = vpop.f32.mrb[0].mxu0
        %v1193 = vpop.f32.mrb[0].mxu0
        %v1194 = vadd.f32 0.0, %v1193
        %v1195 = vpop.f32.mrb[0].mxu0
        %1196 = vdwg.mxu0
        %v1201 = vunpack.c.l.b16 %v911
        %v1202 = vunpack.c.l.b16 %v912
        %v1203 = vunpack.c.l.b16 %v913
        %v1204 = vunpack.c.l.b16 %v914
        %v1205 = vpack.c.b16 %v1202, %v1201
        %v1206 = vpack.c.b16 %v1204, %v1203
        %1209 = vmatprep.subr.bf16.mxu0 0
        %1210 = vmatpush1.bf16.msra.mxu0 %v1205
        %1211 = vmatprep.subr.bf16.mxu0 0
        %1212 = vmatpush1.bf16.msra.mxu0 %v1206
        %1213 = vmatprep.subr.bf16.mxu0 0
        %1214 = vmatpush1.bf16.msra.mxu0 0
        %1215 = vmatprep.subr.bf16.mxu0 0
        %1216 = vmatpush1.bf16.msra.mxu0 0
        %1217 = vmatprep.subr.bf16.mxu0 0
        %1218 = vmatpush1.bf16.msra.mxu0 0
        %1219 = vmatprep.subr.bf16.mxu0 0
        %1220 = vmatpush1.bf16.msra.mxu0 0
        %1221 = vmatprep.subr.bf16.mxu0 0
        %1222 = vmatpush1.bf16.msra.mxu0 0
        %1223 = vmatprep.subr.bf16.mxu0 0
        %1224 = vmatpush1.bf16.msra.mxu0 0
        %1225 = vmatprep.subr.bf16.mxu0 0
        %1226 = vmatpush1.bf16.msra.mxu0 0
        %1227 = vmatprep.subr.bf16.mxu0 0
        %1228 = vmatpush1.bf16.msra.mxu0 0
        %1229 = vmatprep.subr.bf16.mxu0 0
        %1230 = vmatpush1.bf16.msra.mxu0 0
        %1231 = vmatprep.subr.bf16.mxu0 0
        %1232 = vmatpush1.bf16.msra.mxu0 0
        %1233 = vmatprep.subr.bf16.mxu0 0
        %1234 = vmatpush1.bf16.msra.mxu0 0
        %1235 = vmatprep.subr.bf16.mxu0 0
        %1236 = vmatpush1.bf16.msra.mxu0 0
        %1237 = vmatprep.subr.bf16.mxu0 0
        %1238 = vmatpush1.bf16.msra.mxu0 0
        %1239 = vmatprep.subr.bf16.mxu0 0
        %1240 = vmatpush1.bf16.msra.mxu0 0
        %1241 = vmatprep.mubr.bf16.mxu0 0
        %1242 = vmatmul.mubr.bf16.gmra.mrb[0].mxu0 %v942
        %v1243 = vpop.f32.mrb[0].mxu0
        %v1244 = vadd.f32 0.0, %v1243
        %v1245 = vpop.f32.mrb[0].mxu0
        %v1246 = vpop.f32.mrb[0].mxu0
        %v1247 = vadd.f32 0.0, %v1246
        %v1248 = vpop.f32.mrb[0].mxu0
        %1249 = vdwg.mxu0
        %v1254 = vunpack.c.l.b16 %v915
        %v1255 = vunpack.c.l.b16 %v916
        %v1256 = vunpack.c.l.b16 %v917
        %v1257 = vunpack.c.l.b16 %v918
        %v1258 = vpack.c.b16 %v1255, %v1254
        %v1259 = vpack.c.b16 %v1257, %v1256
        %1262 = vmatprep.subr.bf16.mxu0 0
        %1263 = vmatpush1.bf16.msra.mxu0 %v1258
        %1264 = vmatprep.subr.bf16.mxu0 0
        %1265 = vmatpush1.bf16.msra.mxu0 %v1259
        %1266 = vmatprep.subr.bf16.mxu0 0
        %1267 = vmatpush1.bf16.msra.mxu0 0
        %1268 = vmatprep.subr.bf16.mxu0 0
        %1269 = vmatpush1.bf16.msra.mxu0 0
        %1270 = vmatprep.subr.bf16.mxu0 0
        %1271 = vmatpush1.bf16.msra.mxu0 0
        %1272 = vmatprep.subr.bf16.mxu0 0
        %1273 = vmatpush1.bf16.msra.mxu0 0
        %1274 = vmatprep.subr.bf16.mxu0 0
        %1275 = vmatpush1.bf16.msra.mxu0 0
        %1276 = vmatprep.subr.bf16.mxu0 0
        %1277 = vmatpush1.bf16.msra.mxu0 0
        %1278 = vmatprep.subr.bf16.mxu0 0
        %1279 = vmatpush1.bf16.msra.mxu0 0
        %1280 = vmatprep.subr.bf16.mxu0 0
        %1281 = vmatpush1.bf16.msra.mxu0 0
        %1282 = vmatprep.subr.bf16.mxu0 0
        %1283 = vmatpush1.bf16.msra.mxu0 0
        %1284 = vmatprep.subr.bf16.mxu0 0
        %1285 = vmatpush1.bf16.msra.mxu0 0
        %1286 = vmatprep.subr.bf16.mxu0 0
        %1287 = vmatpush1.bf16.msra.mxu0 0
        %1288 = vmatprep.subr.bf16.mxu0 0
        %1289 = vmatpush1.bf16.msra.mxu0 0
        %1290 = vmatprep.subr.bf16.mxu0 0
        %1291 = vmatpush1.bf16.msra.mxu0 0
        %1292 = vmatprep.subr.bf16.mxu0 0
        %1293 = vmatpush1.bf16.msra.mxu0 0
        %1294 = vmatprep.mubr.bf16.mxu0 0
        %1295 = vmatmul.mubr.bf16.gmra.mrb[0].mxu0 %v942
        %v1296 = vpop.f32.mrb[0].mxu0
        %v1297 = vadd.f32 0.0, %v1296
        %v1298 = vpop.f32.mrb[0].mxu0
        %v1299 = vpop.f32.mrb[0].mxu0
        %v1300 = vadd.f32 0.0, %v1299
        %v1301 = vpop.f32.mrb[0].mxu0
        %1302 = vdwg.mxu0
        %v1307 = vunpack.c.l.b16 %v919
        %v1308 = vunpack.c.l.b16 %v920
        %v1309 = vunpack.c.l.b16 %v921
        %v1310 = vunpack.c.l.b16 %v922
        %v1311 = vpack.c.b16 %v1308, %v1307
        %v1312 = vpack.c.b16 %v1310, %v1309
        %1315 = vmatprep.subr.bf16.mxu0 0
        %1316 = vmatpush1.bf16.msra.mxu0 %v1311
        %1317 = vmatprep.subr.bf16.mxu0 0
        %1318 = vmatpush1.bf16.msra.mxu0 %v1312
        %1319 = vmatprep.subr.bf16.mxu0 0
        %1320 = vmatpush1.bf16.msra.mxu0 0
        %1321 = vmatprep.subr.bf16.mxu0 0
        %1322 = vmatpush1.bf16.msra.mxu0 0
        %1323 = vmatprep.subr.bf16.mxu0 0
        %1324 = vmatpush1.bf16.msra.mxu0 0
        %1325 = vmatprep.subr.bf16.mxu0 0
        %1326 = vmatpush1.bf16.msra.mxu0 0
        %1327 = vmatprep.subr.bf16.mxu0 0
        %1328 = vmatpush1.bf16.msra.mxu0 0
        %1329 = vmatprep.subr.bf16.mxu0 0
        %1330 = vmatpush1.bf16.msra.mxu0 0
        %1331 = vmatprep.subr.bf16.mxu0 0
        %1332 = vmatpush1.bf16.msra.mxu0 0
        %1333 = vmatprep.subr.bf16.mxu0 0
        %1334 = vmatpush1.bf16.msra.mxu0 0
        %1335 = vmatprep.subr.bf16.mxu0 0
        %1336 = vmatpush1.bf16.msra.mxu0 0
        %1337 = vmatprep.subr.bf16.mxu0 0
        %1338 = vmatpush1.bf16.msra.mxu0 0
        %1339 = vmatprep.subr.bf16.mxu0 0
        %1340 = vmatpush1.bf16.msra.mxu0 0
        %1341 = vmatprep.subr.bf16.mxu0 0
        %1342 = vmatpush1.bf16.msra.mxu0 0
        %1343 = vmatprep.subr.bf16.mxu0 0
        %1344 = vmatpush1.bf16.msra.mxu0 0
        %1345 = vmatprep.subr.bf16.mxu0 0
        %1346 = vmatpush1.bf16.msra.mxu0 0
        %1347 = vmatprep.mubr.bf16.mxu0 0
        %1348 = vmatmul.mubr.bf16.gmra.mrb[0].mxu0 %v942
        %v1349 = vpop.f32.mrb[0].mxu0
        %v1350 = vadd.f32 0.0, %v1349
        %v1351 = vpop.f32.mrb[0].mxu0
        %v1352 = vpop.f32.mrb[0].mxu0
        %v1353 = vadd.f32 0.0, %v1352
        %v1354 = vpop.f32.mrb[0].mxu0
        %1355 = vdwg.mxu0
        %v1356 = vpack.c.bf16 %v982, %v979
        %v1357 = vpack.c.bf16 %v1035, %v1032
        %v1358 = vpack.c.bf16 %v1088, %v1085
        %v1359 = vpack.c.bf16 %v1141, %v1138
        %v1360 = vpack.c.bf16 %v1194, %v1191
        %v1361 = vpack.c.bf16 %v1247, %v1244
        %v1362 = vpack.c.bf16 %v1300, %v1297
        %v1363 = vpack.c.bf16 %v1353, %v1350
        %v1364 = vld [vmem:[%s4] sm:$0xf]
        %v1365 = vld [vmem:[%s4 + $0x4] sm:$0xf]
        %v1366 = vld [vmem:[%s4 + $0x8] sm:$0xf]
        %v1367 = vld [vmem:[%s4 + $0xc] sm:$0xf]
        %v1368 = vld [vmem:[%s4 + $0x10] sm:$0xf]
        %v1369 = vld [vmem:[%s4 + $0x14] sm:$0xf]
        %v1370 = vld [vmem:[%s4 + $0x18] sm:$0xf]
        %v1371 = vld [vmem:[%s4 + $0x1c] sm:$0xf]
        %v1372 = vld [vmem:[%s4 + $0x20] sm:$0xf]
        %v1373 = vld [vmem:[%s4 + $0x24] sm:$0xf]
        %v1374 = vld [vmem:[%s4 + $0x28] sm:$0xf]
        %v1375 = vld [vmem:[%s4 + $0x2c] sm:$0xf]
        %v1376 = vld [vmem:[%s4 + $0x30] sm:$0xf]
        %v1377 = vld [vmem:[%s4 + $0x34] sm:$0xf]
        %v1378 = vld [vmem:[%s4 + $0x38] sm:$0xf]
        %v1379 = vld [vmem:[%s4 + $0x3c] sm:$0xf]
        %v1380 = vld [vmem:[%s4 + $0x40] sm:$0xf]
        %v1381 = vld [vmem:[%s4 + $0x44] sm:$0xf]
        %v1382 = vld [vmem:[%s4 + $0x48] sm:$0xf]
        %v1383 = vld [vmem:[%s4 + $0x4c] sm:$0xf]
        %v1384 = vld [vmem:[%s4 + $0x50] sm:$0xf]
        %v1385 = vld [vmem:[%s4 + $0x54] sm:$0xf]
        %v1386 = vld [vmem:[%s4 + $0x58] sm:$0xf]
        %v1387 = vld [vmem:[%s4 + $0x5c] sm:$0xf]
        %v1388 = vld [vmem:[%s4 + $0x60] sm:$0xf]
        %v1389 = vld [vmem:[%s4 + $0x64] sm:$0xf]
        %v1390 = vld [vmem:[%s4 + $0x68] sm:$0xf]
        %v1391 = vld [vmem:[%s4 + $0x6c] sm:$0xf]
        %v1392 = vld [vmem:[%s4 + $0x70] sm:$0xf]
        %v1393 = vld [vmem:[%s4 + $0x74] sm:$0xf]
        %v1394 = vld [vmem:[%s4 + $0x78] sm:$0xf]
        %v1395 = vld [vmem:[%s4 + $0x7c] sm:$0xf]
        %v1400 = vunpack.c.l.b16 %v1364
        %v1401 = vunpack.c.l.b16 %v1365
        %v1402 = vunpack.c.l.b16 %v1366
        %v1403 = vunpack.c.l.b16 %v1367
        %v1404 = vpack.c.b16 %v1401, %v1400
        %v1405 = vpack.c.b16 %v1403, %v1402
        %1408 = vmatprep.subr.bf16.mxu0 0
        %1409 = vmatpush1.bf16.msra.mxu0 %v1404
        %1410 = vmatprep.subr.bf16.mxu0 0
        %1411 = vmatpush1.bf16.msra.mxu0 %v1405
        %1412 = vmatprep.subr.bf16.mxu0 0
        %1413 = vmatpush1.bf16.msra.mxu0 0
        %1414 = vmatprep.subr.bf16.mxu0 0
        %1415 = vmatpush1.bf16.msra.mxu0 0
        %1416 = vmatprep.subr.bf16.mxu0 0
        %1417 = vmatpush1.bf16.msra.mxu0 0
        %1418 = vmatprep.subr.bf16.mxu0 0
        %1419 = vmatpush1.bf16.msra.mxu0 0
        %1420 = vmatprep.subr.bf16.mxu0 0
        %1421 = vmatpush1.bf16.msra.mxu0 0
        %1422 = vmatprep.subr.bf16.mxu0 0
        %1423 = vmatpush1.bf16.msra.mxu0 0
        %1424 = vmatprep.subr.bf16.mxu0 0
        %1425 = vmatpush1.bf16.msra.mxu0 0
        %1426 = vmatprep.subr.bf16.mxu0 0
        %1427 = vmatpush1.bf16.msra.mxu0 0
        %1428 = vmatprep.subr.bf16.mxu0 0
        %1429 = vmatpush1.bf16.msra.mxu0 0
        %1430 = vmatprep.subr.bf16.mxu0 0
        %1431 = vmatpush1.bf16.msra.mxu0 0
        %1432 = vmatprep.subr.bf16.mxu0 0
        %1433 = vmatpush1.bf16.msra.mxu0 0
        %1434 = vmatprep.subr.bf16.mxu0 0
        %1435 = vmatpush1.bf16.msra.mxu0 0
        %1436 = vmatprep.subr.bf16.mxu0 0
        %1437 = vmatpush1.bf16.msra.mxu0 0
        %1438 = vmatprep.subr.bf16.mxu0 0
        %1439 = vmatpush1.bf16.msra.mxu0 0
        %1440 = vmatprep.mubr.bf16.mxu0 0
        %1441 = vmatmul.mubr.bf16.gmra.mrb[0].mxu0 %v942
        %v1442 = vpop.f32.mrb[0].mxu0
        %v1443 = vadd.f32 0.0, %v1442
        %v1444 = vpop.f32.mrb[0].mxu0
        %v1445 = vpop.f32.mrb[0].mxu0
        %v1446 = vadd.f32 0.0, %v1445
        %v1447 = vpop.f32.mrb[0].mxu0
        %1448 = vdwg.mxu0
        %v1453 = vunpack.c.l.b16 %v1368
        %v1454 = vunpack.c.l.b16 %v1369
        %v1455 = vunpack.c.l.b16 %v1370
        %v1456 = vunpack.c.l.b16 %v1371
        %v1457 = vpack.c.b16 %v1454, %v1453
        %v1458 = vpack.c.b16 %v1456, %v1455
        %1461 = vmatprep.subr.bf16.mxu0 0
        %1462 = vmatpush1.bf16.msra.mxu0 %v1457
        %1463 = vmatprep.subr.bf16.mxu0 0
        %1464 = vmatpush1.bf16.msra.mxu0 %v1458
        %1465 = vmatprep.subr.bf16.mxu0 0
        %1466 = vmatpush1.bf16.msra.mxu0 0
        %1467 = vmatprep.subr.bf16.mxu0 0
        %1468 = vmatpush1.bf16.msra.mxu0 0
        %1469 = vmatprep.subr.bf16.mxu0 0
        %1470 = vmatpush1.bf16.msra.mxu0 0
        %1471 = vmatprep.subr.bf16.mxu0 0
        %1472 = vmatpush1.bf16.msra.mxu0 0
        %1473 = vmatprep.subr.bf16.mxu0 0
        %1474 = vmatpush1.bf16.msra.mxu0 0
        %1475 = vmatprep.subr.bf16.mxu0 0
        %1476 = vmatpush1.bf16.msra.mxu0 0
        %1477 = vmatprep.subr.bf16.mxu0 0
        %1478 = vmatpush1.bf16.msra.mxu0 0
        %1479 = vmatprep.subr.bf16.mxu0 0
        %1480 = vmatpush1.bf16.msra.mxu0 0
        %1481 = vmatprep.subr.bf16.mxu0 0
        %1482 = vmatpush1.bf16.msra.mxu0 0
        %1483 = vmatprep.subr.bf16.mxu0 0
        %1484 = vmatpush1.bf16.msra.mxu0 0
        %1485 = vmatprep.subr.bf16.mxu0 0
        %1486 = vmatpush1.bf16.msra.mxu0 0
        %1487 = vmatprep.subr.bf16.mxu0 0
        %1488 = vmatpush1.bf16.msra.mxu0 0
        %1489 = vmatprep.subr.bf16.mxu0 0
        %1490 = vmatpush1.bf16.msra.mxu0 0
        %1491 = vmatprep.subr.bf16.mxu0 0
        %1492 = vmatpush1.bf16.msra.mxu0 0
        %1493 = vmatprep.mubr.bf16.mxu0 0
        %1494 = vmatmul.mubr.bf16.gmra.mrb[0].mxu0 %v942
        %v1495 = vpop.f32.mrb[0].mxu0
        %v1496 = vadd.f32 0.0, %v1495
        %v1497 = vpop.f32.mrb[0].mxu0
        %v1498 = vpop.f32.mrb[0].mxu0
        %v1499 = vadd.f32 0.0, %v1498
        %v1500 = vpop.f32.mrb[0].mxu0
        %1501 = vdwg.mxu0
        %v1506 = vunpack.c.l.b16 %v1372
        %v1507 = vunpack.c.l.b16 %v1373
        %v1508 = vunpack.c.l.b16 %v1374
        %v1509 = vunpack.c.l.b16 %v1375
        %v1510 = vpack.c.b16 %v1507, %v1506
        %v1511 = vpack.c.b16 %v1509, %v1508
        %1514 = vmatprep.subr.bf16.mxu0 0
        %1515 = vmatpush1.bf16.msra.mxu0 %v1510
        %1516 = vmatprep.subr.bf16.mxu0 0
        %1517 = vmatpush1.bf16.msra.mxu0 %v1511
        %1518 = vmatprep.subr.bf16.mxu0 0
        %1519 = vmatpush1.bf16.msra.mxu0 0
        %1520 = vmatprep.subr.bf16.mxu0 0
        %1521 = vmatpush1.bf16.msra.mxu0 0
        %1522 = vmatprep.subr.bf16.mxu0 0
        %1523 = vmatpush1.bf16.msra.mxu0 0
        %1524 = vmatprep.subr.bf16.mxu0 0
        %1525 = vmatpush1.bf16.msra.mxu0 0
        %1526 = vmatprep.subr.bf16.mxu0 0
        %1527 = vmatpush1.bf16.msra.mxu0 0
        %1528 = vmatprep.subr.bf16.mxu0 0
        %1529 = vmatpush1.bf16.msra.mxu0 0
        %1530 = vmatprep.subr.bf16.mxu0 0
        %1531 = vmatpush1.bf16.msra.mxu0 0
        %1532 = vmatprep.subr.bf16.mxu0 0
        %1533 = vmatpush1.bf16.msra.mxu0 0
        %1534 = vmatprep.subr.bf16.mxu0 0
        %1535 = vmatpush1.bf16.msra.mxu0 0
        %1536 = vmatprep.subr.bf16.mxu0 0
        %1537 = vmatpush1.bf16.msra.mxu0 0
        %1538 = vmatprep.subr.bf16.mxu0 0
        %1539 = vmatpush1.bf16.msra.mxu0 0
        %1540 = vmatprep.subr.bf16.mxu0 0
        %1541 = vmatpush1.bf16.msra.mxu0 0
        %1542 = vmatprep.subr.bf16.mxu0 0
        %1543 = vmatpush1.bf16.msra.mxu0 0
        %1544 = vmatprep.subr.bf16.mxu0 0
        %1545 = vmatpush1.bf16.msra.mxu0 0
        %1546 = vmatprep.mubr.bf16.mxu0 0
        %1547 = vmatmul.mubr.bf16.gmra.mrb[0].mxu0 %v942
        %v1548 = vpop.f32.mrb[0].mxu0
        %v1549 = vadd.f32 0.0, %v1548
        %v1550 = vpop.f32.mrb[0].mxu0
        %v1551 = vpop.f32.mrb[0].mxu0
        %v1552 = vadd.f32 0.0, %v1551
        %v1553 = vpop.f32.mrb[0].mxu0
        %1554 = vdwg.mxu0
        %v1559 = vunpack.c.l.b16 %v1376
        %v1560 = vunpack.c.l.b16 %v1377
        %v1561 = vunpack.c.l.b16 %v1378
        %v1562 = vunpack.c.l.b16 %v1379
        %v1563 = vpack.c.b16 %v1560, %v1559
        %v1564 = vpack.c.b16 %v1562, %v1561
        %1567 = vmatprep.subr.bf16.mxu0 0
        %1568 = vmatpush1.bf16.msra.mxu0 %v1563
        %1569 = vmatprep.subr.bf16.mxu0 0
        %1570 = vmatpush1.bf16.msra.mxu0 %v1564
        %1571 = vmatprep.subr.bf16.mxu0 0
        %1572 = vmatpush1.bf16.msra.mxu0 0
        %1573 = vmatprep.subr.bf16.mxu0 0
        %1574 = vmatpush1.bf16.msra.mxu0 0
        %1575 = vmatprep.subr.bf16.mxu0 0
        %1576 = vmatpush1.bf16.msra.mxu0 0
        %1577 = vmatprep.subr.bf16.mxu0 0
        %1578 = vmatpush1.bf16.msra.mxu0 0
        %1579 = vmatprep.subr.bf16.mxu0 0
        %1580 = vmatpush1.bf16.msra.mxu0 0
        %1581 = vmatprep.subr.bf16.mxu0 0
        %1582 = vmatpush1.bf16.msra.mxu0 0
        %1583 = vmatprep.subr.bf16.mxu0 0
        %1584 = vmatpush1.bf16.msra.mxu0 0
        %1585 = vmatprep.subr.bf16.mxu0 0
        %1586 = vmatpush1.bf16.msra.mxu0 0
        %1587 = vmatprep.subr.bf16.mxu0 0
        %1588 = vmatpush1.bf16.msra.mxu0 0
        %1589 = vmatprep.subr.bf16.mxu0 0
        %1590 = vmatpush1.bf16.msra.mxu0 0
        %1591 = vmatprep.subr.bf16.mxu0 0
        %1592 = vmatpush1.bf16.msra.mxu0 0
        %1593 = vmatprep.subr.bf16.mxu0 0
        %1594 = vmatpush1.bf16.msra.mxu0 0
        %1595 = vmatprep.subr.bf16.mxu0 0
        %1596 = vmatpush1.bf16.msra.mxu0 0
        %1597 = vmatprep.subr.bf16.mxu0 0
        %1598 = vmatpush1.bf16.msra.mxu0 0
        %1599 = vmatprep.mubr.bf16.mxu0 0
        %1600 = vmatmul.mubr.bf16.gmra.mrb[0].mxu0 %v942
        %v1601 = vpop.f32.mrb[0].mxu0
        %v1602 = vadd.f32 0.0, %v1601
        %v1603 = vpop.f32.mrb[0].mxu0
        %v1604 = vpop.f32.mrb[0].mxu0
        %v1605 = vadd.f32 0.0, %v1604
        %v1606 = vpop.f32.mrb[0].mxu0
        %1607 = vdwg.mxu0
        %v1612 = vunpack.c.l.b16 %v1380
        %v1613 = vunpack.c.l.b16 %v1381
        %v1614 = vunpack.c.l.b16 %v1382
        %v1615 = vunpack.c.l.b16 %v1383
        %v1616 = vpack.c.b16 %v1613, %v1612
        %v1617 = vpack.c.b16 %v1615, %v1614
        %1620 = vmatprep.subr.bf16.mxu0 0
        %1621 = vmatpush1.bf16.msra.mxu0 %v1616
        %1622 = vmatprep.subr.bf16.mxu0 0
        %1623 = vmatpush1.bf16.msra.mxu0 %v1617
        %1624 = vmatprep.subr.bf16.mxu0 0
        %1625 = vmatpush1.bf16.msra.mxu0 0
        %1626 = vmatprep.subr.bf16.mxu0 0
        %1627 = vmatpush1.bf16.msra.mxu0 0
        %1628 = vmatprep.subr.bf16.mxu0 0
        %1629 = vmatpush1.bf16.msra.mxu0 0
        %1630 = vmatprep.subr.bf16.mxu0 0
        %1631 = vmatpush1.bf16.msra.mxu0 0
        %1632 = vmatprep.subr.bf16.mxu0 0
        %1633 = vmatpush1.bf16.msra.mxu0 0
        %1634 = vmatprep.subr.bf16.mxu0 0
        %1635 = vmatpush1.bf16.msra.mxu0 0
        %1636 = vmatprep.subr.bf16.mxu0 0
        %1637 = vmatpush1.bf16.msra.mxu0 0
        %1638 = vmatprep.subr.bf16.mxu0 0
        %1639 = vmatpush1.bf16.msra.mxu0 0
        %1640 = vmatprep.subr.bf16.mxu0 0
        %1641 = vmatpush1.bf16.msra.mxu0 0
        %1642 = vmatprep.subr.bf16.mxu0 0
        %1643 = vmatpush1.bf16.msra.mxu0 0
        %1644 = vmatprep.subr.bf16.mxu0 0
        %1645 = vmatpush1.bf16.msra.mxu0 0
        %1646 = vmatprep.subr.bf16.mxu0 0
        %1647 = vmatpush1.bf16.msra.mxu0 0
        %1648 = vmatprep.subr.bf16.mxu0 0
        %1649 = vmatpush1.bf16.msra.mxu0 0
        %1650 = vmatprep.subr.bf16.mxu0 0
        %1651 = vmatpush1.bf16.msra.mxu0 0
        %1652 = vmatprep.mubr.bf16.mxu0 0
        %1653 = vmatmul.mubr.bf16.gmra.mrb[0].mxu0 %v942
        %v1654 = vpop.f32.mrb[0].mxu0
        %v1655 = vadd.f32 0.0, %v1654
        %v1656 = vpop.f32.mrb[0].mxu0
        %v1657 = vpop.f32.mrb[0].mxu0
        %v1658 = vadd.f32 0.0, %v1657
        %v1659 = vpop.f32.mrb[0].mxu0
        %1660 = vdwg.mxu0
        %v1665 = vunpack.c.l.b16 %v1384
        %v1666 = vunpack.c.l.b16 %v1385
        %v1667 = vunpack.c.l.b16 %v1386
        %v1668 = vunpack.c.l.b16 %v1387
        %v1669 = vpack.c.b16 %v1666, %v1665
        %v1670 = vpack.c.b16 %v1668, %v1667
        %1673 = vmatprep.subr.bf16.mxu0 0
        %1674 = vmatpush1.bf16.msra.mxu0 %v1669
        %1675 = vmatprep.subr.bf16.mxu0 0
        %1676 = vmatpush1.bf16.msra.mxu0 %v1670
        %1677 = vmatprep.subr.bf16.mxu0 0
        %1678 = vmatpush1.bf16.msra.mxu0 0
        %1679 = vmatprep.subr.bf16.mxu0 0
        %1680 = vmatpush1.bf16.msra.mxu0 0
        %1681 = vmatprep.subr.bf16.mxu0 0
        %1682 = vmatpush1.bf16.msra.mxu0 0
        %1683 = vmatprep.subr.bf16.mxu0 0
        %1684 = vmatpush1.bf16.msra.mxu0 0
        %1685 = vmatprep.subr.bf16.mxu0 0
        %1686 = vmatpush1.bf16.msra.mxu0 0
        %1687 = vmatprep.subr.bf16.mxu0 0
        %1688 = vmatpush1.bf16.msra.mxu0 0
        %1689 = vmatprep.subr.bf16.mxu0 0
        %1690 = vmatpush1.bf16.msra.mxu0 0
        %1691 = vmatprep.subr.bf16.mxu0 0
        %1692 = vmatpush1.bf16.msra.mxu0 0
        %1693 = vmatprep.subr.bf16.mxu0 0
        %1694 = vmatpush1.bf16.msra.mxu0 0
        %1695 = vmatprep.subr.bf16.mxu0 0
        %1696 = vmatpush1.bf16.msra.mxu0 0
        %1697 = vmatprep.subr.bf16.mxu0 0
        %1698 = vmatpush1.bf16.msra.mxu0 0
        %1699 = vmatprep.subr.bf16.mxu0 0
        %1700 = vmatpush1.bf16.msra.mxu0 0
        %1701 = vmatprep.subr.bf16.mxu0 0
        %1702 = vmatpush1.bf16.msra.mxu0 0
        %1703 = vmatprep.subr.bf16.mxu0 0
        %1704 = vmatpush1.bf16.msra.mxu0 0
        %1705 = vmatprep.mubr.bf16.mxu0 0
        %1706 = vmatmul.mubr.bf16.gmra.mrb[0].mxu0 %v942
        %v1707 = vpop.f32.mrb[0].mxu0
        %v1708 = vadd.f32 0.0, %v1707
        %v1709 = vpop.f32.mrb[0].mxu0
        %v1710 = vpop.f32.mrb[0].mxu0
        %v1711 = vadd.f32 0.0, %v1710
        %v1712 = vpop.f32.mrb[0].mxu0
        %1713 = vdwg.mxu0
        %v1718 = vunpack.c.l.b16 %v1388
        %v1719 = vunpack.c.l.b16 %v1389
        %v1720 = vunpack.c.l.b16 %v1390
        %v1721 = vunpack.c.l.b16 %v1391
        %v1722 = vpack.c.b16 %v1719, %v1718
        %v1723 = vpack.c.b16 %v1721, %v1720
        %1726 = vmatprep.subr.bf16.mxu0 0
        %1727 = vmatpush1.bf16.msra.mxu0 %v1722
        %1728 = vmatprep.subr.bf16.mxu0 0
        %1729 = vmatpush1.bf16.msra.mxu0 %v1723
        %1730 = vmatprep.subr.bf16.mxu0 0
        %1731 = vmatpush1.bf16.msra.mxu0 0
        %1732 = vmatprep.subr.bf16.mxu0 0
        %1733 = vmatpush1.bf16.msra.mxu0 0
        %1734 = vmatprep.subr.bf16.mxu0 0
        %1735 = vmatpush1.bf16.msra.mxu0 0
        %1736 = vmatprep.subr.bf16.mxu0 0
        %1737 = vmatpush1.bf16.msra.mxu0 0
        %1738 = vmatprep.subr.bf16.mxu0 0
        %1739 = vmatpush1.bf16.msra.mxu0 0
        %1740 = vmatprep.subr.bf16.mxu0 0
        %1741 = vmatpush1.bf16.msra.mxu0 0
        %1742 = vmatprep.subr.bf16.mxu0 0
        %1743 = vmatpush1.bf16.msra.mxu0 0
        %1744 = vmatprep.subr.bf16.mxu0 0
        %1745 = vmatpush1.bf16.msra.mxu0 0
        %1746 = vmatprep.subr.bf16.mxu0 0
        %1747 = vmatpush1.bf16.msra.mxu0 0
        %1748 = vmatprep.subr.bf16.mxu0 0
        %1749 = vmatpush1.bf16.msra.mxu0 0
        %1750 = vmatprep.subr.bf16.mxu0 0
        %1751 = vmatpush1.bf16.msra.mxu0 0
        %1752 = vmatprep.subr.bf16.mxu0 0
        %1753 = vmatpush1.bf16.msra.mxu0 0
        %1754 = vmatprep.subr.bf16.mxu0 0
        %1755 = vmatpush1.bf16.msra.mxu0 0
        %1756 = vmatprep.subr.bf16.mxu0 0
        %1757 = vmatpush1.bf16.msra.mxu0 0
        %1758 = vmatprep.mubr.bf16.mxu0 0
        %1759 = vmatmul.mubr.bf16.gmra.mrb[0].mxu0 %v942
        %v1760 = vpop.f32.mrb[0].mxu0
        %v1761 = vadd.f32 0.0, %v1760
        %v1762 = vpop.f32.mrb[0].mxu0
        %v1763 = vpop.f32.mrb[0].mxu0
        %v1764 = vadd.f32 0.0, %v1763
        %v1765 = vpop.f32.mrb[0].mxu0
        %1766 = vdwg.mxu0
        %v1771 = vunpack.c.l.b16 %v1392
        %v1772 = vunpack.c.l.b16 %v1393
        %v1773 = vunpack.c.l.b16 %v1394
        %v1774 = vunpack.c.l.b16 %v1395
        %v1775 = vpack.c.b16 %v1772, %v1771
        %v1776 = vpack.c.b16 %v1774, %v1773
        %1779 = vmatprep.subr.bf16.mxu0 0
        %1780 = vmatpush1.bf16.msra.mxu0 %v1775
        %1781 = vmatprep.subr.bf16.mxu0 0
        %1782 = vmatpush1.bf16.msra.mxu0 %v1776
        %1783 = vmatprep.subr.bf16.mxu0 0
        %1784 = vmatpush1.bf16.msra.mxu0 0
        %1785 = vmatprep.subr.bf16.mxu0 0
        %1786 = vmatpush1.bf16.msra.mxu0 0
        %1787 = vmatprep.subr.bf16.mxu0 0
        %1788 = vmatpush1.bf16.msra.mxu0 0
        %1789 = vmatprep.subr.bf16.mxu0 0
        %1790 = vmatpush1.bf16.msra.mxu0 0
        %1791 = vmatprep.subr.bf16.mxu0 0
        %1792 = vmatpush1.bf16.msra.mxu0 0
        %1793 = vmatprep.subr.bf16.mxu0 0
        %1794 = vmatpush1.bf16.msra.mxu0 0
        %1795 = vmatprep.subr.bf16.mxu0 0
        %1796 = vmatpush1.bf16.msra.mxu0 0
        %1797 = vmatprep.subr.bf16.mxu0 0
        %1798 = vmatpush1.bf16.msra.mxu0 0
        %1799 = vmatprep.subr.bf16.mxu0 0
        %1800 = vmatpush1.bf16.msra.mxu0 0
        %1801 = vmatprep.subr.bf16.mxu0 0
        %1802 = vmatpush1.bf16.msra.mxu0 0
        %1803 = vmatprep.subr.bf16.mxu0 0
        %1804 = vmatpush1.bf16.msra.mxu0 0
        %1805 = vmatprep.subr.bf16.mxu0 0
        %1806 = vmatpush1.bf16.msra.mxu0 0
        %1807 = vmatprep.subr.bf16.mxu0 0
        %1808 = vmatpush1.bf16.msra.mxu0 0
        %1809 = vmatprep.subr.bf16.mxu0 0
        %1810 = vmatpush1.bf16.msra.mxu0 0
        %1811 = vmatprep.mubr.bf16.mxu0 0
        %1812 = vmatmul.mubr.bf16.gmra.mrb[0].mxu0 %v942
        %v1813 = vpop.f32.mrb[0].mxu0
        %v1814 = vadd.f32 0.0, %v1813
        %v1815 = vpop.f32.mrb[0].mxu0
        %v1816 = vpop.f32.mrb[0].mxu0
        %v1817 = vadd.f32 0.0, %v1816
        %v1818 = vpop.f32.mrb[0].mxu0
        %1819 = vdwg.mxu0
        %v1820 = vpack.c.bf16 %v1446, %v1443
        %v1821 = vpack.c.bf16 %v1499, %v1496
        %v1822 = vpack.c.bf16 %v1552, %v1549
        %v1823 = vpack.c.bf16 %v1605, %v1602
        %v1824 = vpack.c.bf16 %v1658, %v1655
        %v1825 = vpack.c.bf16 %v1711, %v1708
        %v1826 = vpack.c.bf16 %v1764, %v1761
        %v1827 = vpack.c.bf16 %v1817, %v1814
        %v1828 = vld [vmem:[#allocation2] sm:$0xff]
        %v1829 = vld [vmem:[#allocation2 + $0x8] sm:$0xff]
        %v1830 = vld [vmem:[#allocation2 + $0x10] sm:$0xff]
        %v1831 = vld [vmem:[#allocation2 + $0x18] sm:$0xff]
        %v1832 = vld [vmem:[#allocation2 + $0x20] sm:$0xff]
        %v1833 = vld [vmem:[#allocation2 + $0x28] sm:$0xff]
        %v1834 = vld [vmem:[#allocation2 + $0x30] sm:$0xff]
        %v1835 = vld [vmem:[#allocation2 + $0x38] sm:$0xff]
        %vm1836 = vcmask 31744
        %v1838 = vsel %vm1836, %v1828, 0
        %v1841 = vsel %vm1836, %v1356, 0
        %1843 = vmatprep.subr.bf16.mxu0 0
        %1844 = vmatpush1.bf16.xpose.msra.mxu0 %v1841
        %1845 = vmatprep.subr.bf16.mxu0 0
        %1846 = vmatpush1.bf16.xpose.msra.mxu0 0
        %1847 = vmatprep.subr.bf16.mxu0 0
        %1848 = vmatpush1.bf16.xpose.msra.mxu0 0
        %1849 = vmatprep.subr.bf16.mxu0 0
        %1850 = vmatpush1.bf16.xpose.msra.mxu0 0
        %1851 = vmatprep.subr.bf16.mxu0 0
        %1852 = vmatpush1.bf16.xpose.msra.mxu0 0
        %1853 = vmatprep.subr.bf16.mxu0 0
        %1854 = vmatpush1.bf16.xpose.msra.mxu0 0
        %1855 = vmatprep.subr.bf16.mxu0 0
        %1856 = vmatpush1.bf16.xpose.msra.mxu0 0
        %1857 = vmatprep.subr.bf16.mxu0 0
        %1858 = vmatpush1.bf16.xpose.msra.mxu0 0
        %1859 = vmatprep.subr.bf16.mxu0 0
        %1860 = vmatpush1.bf16.xpose.msra.mxu0 0
        %1861 = vmatprep.subr.bf16.mxu0 0
        %1862 = vmatpush1.bf16.xpose.msra.mxu0 0
        %1863 = vmatprep.subr.bf16.mxu0 0
        %1864 = vmatpush1.bf16.xpose.msra.mxu0 0
        %1865 = vmatprep.subr.bf16.mxu0 0
        %1866 = vmatpush1.bf16.xpose.msra.mxu0 0
        %1867 = vmatprep.subr.bf16.mxu0 0
        %1868 = vmatpush1.bf16.xpose.msra.mxu0 0
        %1869 = vmatprep.subr.bf16.mxu0 0
        %1870 = vmatpush1.bf16.xpose.msra.mxu0 0
        %1871 = vmatprep.subr.bf16.mxu0 0
        %1872 = vmatpush1.bf16.xpose.msra.mxu0 0
        %1873 = vmatprep.subr.bf16.mxu0 0
        %1874 = vmatpush1.bf16.xpose.msra.mxu0 0
        %1875 = vmatprep.mubr.bf16.mxu0 0
        %1876 = vmatmul.mubr.bf16.gmra.mrb[0].mxu0 %v1838
        %v1877 = vpop.f32.mrb[0].mxu0
        %v1878 = vadd.f32 0.0, %v1877
        %v1879 = vpop.f32.mrb[0].mxu0
        %v1880 = vpop.f32.mrb[0].mxu0
        %v1881 = vadd.f32 0.0, %v1880
        %v1882 = vpop.f32.mrb[0].mxu0
        %1883 = vdwg.mxu0
        %v1885 = vsel %vm1836, %v1829, 0
        %v1888 = vsel %vm1836, %v1357, 0
        %1890 = vmatprep.subr.bf16.mxu0 0
        %1891 = vmatpush1.bf16.xpose.msra.mxu0 %v1888
        %1892 = vmatprep.subr.bf16.mxu0 0
        %1893 = vmatpush1.bf16.xpose.msra.mxu0 0
        %1894 = vmatprep.subr.bf16.mxu0 0
        %1895 = vmatpush1.bf16.xpose.msra.mxu0 0
        %1896 = vmatprep.subr.bf16.mxu0 0
        %1897 = vmatpush1.bf16.xpose.msra.mxu0 0
        %1898 = vmatprep.subr.bf16.mxu0 0
        %1899 = vmatpush1.bf16.xpose.msra.mxu0 0
        %1900 = vmatprep.subr.bf16.mxu0 0
        %1901 = vmatpush1.bf16.xpose.msra.mxu0 0
        %1902 = vmatprep.subr.bf16.mxu0 0
        %1903 = vmatpush1.bf16.xpose.msra.mxu0 0
        %1904 = vmatprep.subr.bf16.mxu0 0
        %1905 = vmatpush1.bf16.xpose.msra.mxu0 0
        %1906 = vmatprep.subr.bf16.mxu0 0
        %1907 = vmatpush1.bf16.xpose.msra.mxu0 0
        %1908 = vmatprep.subr.bf16.mxu0 0
        %1909 = vmatpush1.bf16.xpose.msra.mxu0 0
        %1910 = vmatprep.subr.bf16.mxu0 0
        %1911 = vmatpush1.bf16.xpose.msra.mxu0 0
        %1912 = vmatprep.subr.bf16.mxu0 0
        %1913 = vmatpush1.bf16.xpose.msra.mxu0 0
        %1914 = vmatprep.subr.bf16.mxu0 0
        %1915 = vmatpush1.bf16.xpose.msra.mxu0 0
        %1916 = vmatprep.subr.bf16.mxu0 0
        %1917 = vmatpush1.bf16.xpose.msra.mxu0 0
        %1918 = vmatprep.subr.bf16.mxu0 0
        %1919 = vmatpush1.bf16.xpose.msra.mxu0 0
        %1920 = vmatprep.subr.bf16.mxu0 0
        %1921 = vmatpush1.bf16.xpose.msra.mxu0 0
        %1922 = vmatprep.mubr.bf16.mxu0 0
        %1923 = vmatmul.mubr.bf16.gmra.mrb[0].mxu0 %v1885
        %v1924 = vpop.f32.mrb[0].mxu0
        %v1925 = vadd.f32 0.0, %v1924
        %v1926 = vpop.f32.mrb[0].mxu0
        %v1927 = vpop.f32.mrb[0].mxu0
        %v1928 = vadd.f32 0.0, %v1927
        %v1929 = vpop.f32.mrb[0].mxu0
        %1930 = vdwg.mxu0
        %v1932 = vsel %vm1836, %v1830, 0
        %v1935 = vsel %vm1836, %v1358, 0
        %1937 = vmatprep.subr.bf16.mxu0 0
        %1938 = vmatpush1.bf16.xpose.msra.mxu0 %v1935
        %1939 = vmatprep.subr.bf16.mxu0 0
        %1940 = vmatpush1.bf16.xpose.msra.mxu0 0
        %1941 = vmatprep.subr.bf16.mxu0 0
        %1942 = vmatpush1.bf16.xpose.msra.mxu0 0
        %1943 = vmatprep.subr.bf16.mxu0 0
        %1944 = vmatpush1.bf16.xpose.msra.mxu0 0
        %1945 = vmatprep.subr.bf16.mxu0 0
        %1946 = vmatpush1.bf16.xpose.msra.mxu0 0
        %1947 = vmatprep.subr.bf16.mxu0 0
        %1948 = vmatpush1.bf16.xpose.msra.mxu0 0
        %1949 = vmatprep.subr.bf16.mxu0 0
        %1950 = vmatpush1.bf16.xpose.msra.mxu0 0
        %1951 = vmatprep.subr.bf16.mxu0 0
        %1952 = vmatpush1.bf16.xpose.msra.mxu0 0
        %1953 = vmatprep.subr.bf16.mxu0 0
        %1954 = vmatpush1.bf16.xpose.msra.mxu0 0
        %1955 = vmatprep.subr.bf16.mxu0 0
        %1956 = vmatpush1.bf16.xpose.msra.mxu0 0
        %1957 = vmatprep.subr.bf16.mxu0 0
        %1958 = vmatpush1.bf16.xpose.msra.mxu0 0
        %1959 = vmatprep.subr.bf16.mxu0 0
        %1960 = vmatpush1.bf16.xpose.msra.mxu0 0
        %1961 = vmatprep.subr.bf16.mxu0 0
        %1962 = vmatpush1.bf16.xpose.msra.mxu0 0
        %1963 = vmatprep.subr.bf16.mxu0 0
        %1964 = vmatpush1.bf16.xpose.msra.mxu0 0
        %1965 = vmatprep.subr.bf16.mxu0 0
        %1966 = vmatpush1.bf16.xpose.msra.mxu0 0
        %1967 = vmatprep.subr.bf16.mxu0 0
        %1968 = vmatpush1.bf16.xpose.msra.mxu0 0
        %1969 = vmatprep.mubr.bf16.mxu0 0
        %1970 = vmatmul.mubr.bf16.gmra.mrb[0].mxu0 %v1932
        %v1971 = vpop.f32.mrb[0].mxu0
        %v1972 = vadd.f32 0.0, %v1971
        %v1973 = vpop.f32.mrb[0].mxu0
        %v1974 = vpop.f32.mrb[0].mxu0
        %v1975 = vadd.f32 0.0, %v1974
        %v1976 = vpop.f32.mrb[0].mxu0
        %1977 = vdwg.mxu0
        %v1979 = vsel %vm1836, %v1831, 0
        %v1982 = vsel %vm1836, %v1359, 0
        %1984 = vmatprep.subr.bf16.mxu0 0
        %1985 = vmatpush1.bf16.xpose.msra.mxu0 %v1982
        %1986 = vmatprep.subr.bf16.mxu0 0
        %1987 = vmatpush1.bf16.xpose.msra.mxu0 0
        %1988 = vmatprep.subr.bf16.mxu0 0
        %1989 = vmatpush1.bf16.xpose.msra.mxu0 0
        %1990 = vmatprep.subr.bf16.mxu0 0
        %1991 = vmatpush1.bf16.xpose.msra.mxu0 0
        %1992 = vmatprep.subr.bf16.mxu0 0
        %1993 = vmatpush1.bf16.xpose.msra.mxu0 0
        %1994 = vmatprep.subr.bf16.mxu0 0
        %1995 = vmatpush1.bf16.xpose.msra.mxu0 0
        %1996 = vmatprep.subr.bf16.mxu0 0
        %1997 = vmatpush1.bf16.xpose.msra.mxu0 0
        %1998 = vmatprep.subr.bf16.mxu0 0
        %1999 = vmatpush1.bf16.xpose.msra.mxu0 0
        %2000 = vmatprep.subr.bf16.mxu0 0
        %2001 = vmatpush1.bf16.xpose.msra.mxu0 0
        %2002 = vmatprep.subr.bf16.mxu0 0
        %2003 = vmatpush1.bf16.xpose.msra.mxu0 0
        %2004 = vmatprep.subr.bf16.mxu0 0
        %2005 = vmatpush1.bf16.xpose.msra.mxu0 0
        %2006 = vmatprep.subr.bf16.mxu0 0
        %2007 = vmatpush1.bf16.xpose.msra.mxu0 0
        %2008 = vmatprep.subr.bf16.mxu0 0
        %2009 = vmatpush1.bf16.xpose.msra.mxu0 0
        %2010 = vmatprep.subr.bf16.mxu0 0
        %2011 = vmatpush1.bf16.xpose.msra.mxu0 0
        %2012 = vmatprep.subr.bf16.mxu0 0
        %2013 = vmatpush1.bf16.xpose.msra.mxu0 0
        %2014 = vmatprep.subr.bf16.mxu0 0
        %2015 = vmatpush1.bf16.xpose.msra.mxu0 0
        %2016 = vmatprep.mubr.bf16.mxu0 0
        %2017 = vmatmul.mubr.bf16.gmra.mrb[0].mxu0 %v1979
        %v2018 = vpop.f32.mrb[0].mxu0
        %v2019 = vadd.f32 0.0, %v2018
        %v2020 = vpop.f32.mrb[0].mxu0
        %v2021 = vpop.f32.mrb[0].mxu0
        %v2022 = vadd.f32 0.0, %v2021
        %v2023 = vpop.f32.mrb[0].mxu0
        %2024 = vdwg.mxu0
        %v2026 = vsel %vm1836, %v1832, 0
        %v2029 = vsel %vm1836, %v1360, 0
        %2031 = vmatprep.subr.bf16.mxu0 0
        %2032 = vmatpush1.bf16.xpose.msra.mxu0 %v2029
        %2033 = vmatprep.subr.bf16.mxu0 0
        %2034 = vmatpush1.bf16.xpose.msra.mxu0 0
        %2035 = vmatprep.subr.bf16.mxu0 0
        %2036 = vmatpush1.bf16.xpose.msra.mxu0 0
        %2037 = vmatprep.subr.bf16.mxu0 0
        %2038 = vmatpush1.bf16.xpose.msra.mxu0 0
        %2039 = vmatprep.subr.bf16.mxu0 0
        %2040 = vmatpush1.bf16.xpose.msra.mxu0 0
        %2041 = vmatprep.subr.bf16.mxu0 0
        %2042 = vmatpush1.bf16.xpose.msra.mxu0 0
        %2043 = vmatprep.subr.bf16.mxu0 0
        %2044 = vmatpush1.bf16.xpose.msra.mxu0 0
        %2045 = vmatprep.subr.bf16.mxu0 0
        %2046 = vmatpush1.bf16.xpose.msra.mxu0 0
        %2047 = vmatprep.subr.bf16.mxu0 0
        %2048 = vmatpush1.bf16.xpose.msra.mxu0 0
        %2049 = vmatprep.subr.bf16.mxu0 0
        %2050 = vmatpush1.bf16.xpose.msra.mxu0 0
        %2051 = vmatprep.subr.bf16.mxu0 0
        %2052 = vmatpush1.bf16.xpose.msra.mxu0 0
        %2053 = vmatprep.subr.bf16.mxu0 0
        %2054 = vmatpush1.bf16.xpose.msra.mxu0 0
        %2055 = vmatprep.subr.bf16.mxu0 0
        %2056 = vmatpush1.bf16.xpose.msra.mxu0 0
        %2057 = vmatprep.subr.bf16.mxu0 0
        %2058 = vmatpush1.bf16.xpose.msra.mxu0 0
        %2059 = vmatprep.subr.bf16.mxu0 0
        %2060 = vmatpush1.bf16.xpose.msra.mxu0 0
        %2061 = vmatprep.subr.bf16.mxu0 0
        %2062 = vmatpush1.bf16.xpose.msra.mxu0 0
        %2063 = vmatprep.mubr.bf16.mxu0 0
        %2064 = vmatmul.mubr.bf16.gmra.mrb[0].mxu0 %v2026
        %v2065 = vpop.f32.mrb[0].mxu0
        %v2066 = vadd.f32 0.0, %v2065
        %v2067 = vpop.f32.mrb[0].mxu0
        %v2068 = vpop.f32.mrb[0].mxu0
        %v2069 = vadd.f32 0.0, %v2068
        %v2070 = vpop.f32.mrb[0].mxu0
        %2071 = vdwg.mxu0
        %v2073 = vsel %vm1836, %v1833, 0
        %v2076 = vsel %vm1836, %v1361, 0
        %2078 = vmatprep.subr.bf16.mxu0 0
        %2079 = vmatpush1.bf16.xpose.msra.mxu0 %v2076
        %2080 = vmatprep.subr.bf16.mxu0 0
        %2081 = vmatpush1.bf16.xpose.msra.mxu0 0
        %2082 = vmatprep.subr.bf16.mxu0 0
        %2083 = vmatpush1.bf16.xpose.msra.mxu0 0
        %2084 = vmatprep.subr.bf16.mxu0 0
        %2085 = vmatpush1.bf16.xpose.msra.mxu0 0
        %2086 = vmatprep.subr.bf16.mxu0 0
        %2087 = vmatpush1.bf16.xpose.msra.mxu0 0
        %2088 = vmatprep.subr.bf16.mxu0 0
        %2089 = vmatpush1.bf16.xpose.msra.mxu0 0
        %2090 = vmatprep.subr.bf16.mxu0 0
        %2091 = vmatpush1.bf16.xpose.msra.mxu0 0
        %2092 = vmatprep.subr.bf16.mxu0 0
        %2093 = vmatpush1.bf16.xpose.msra.mxu0 0
        %2094 = vmatprep.subr.bf16.mxu0 0
        %2095 = vmatpush1.bf16.xpose.msra.mxu0 0
        %2096 = vmatprep.subr.bf16.mxu0 0
        %2097 = vmatpush1.bf16.xpose.msra.mxu0 0
        %2098 = vmatprep.subr.bf16.mxu0 0
        %2099 = vmatpush1.bf16.xpose.msra.mxu0 0
        %2100 = vmatprep.subr.bf16.mxu0 0
        %2101 = vmatpush1.bf16.xpose.msra.mxu0 0
        %2102 = vmatprep.subr.bf16.mxu0 0
        %2103 = vmatpush1.bf16.xpose.msra.mxu0 0
        %2104 = vmatprep.subr.bf16.mxu0 0
        %2105 = vmatpush1.bf16.xpose.msra.mxu0 0
        %2106 = vmatprep.subr.bf16.mxu0 0
        %2107 = vmatpush1.bf16.xpose.msra.mxu0 0
        %2108 = vmatprep.subr.bf16.mxu0 0
        %2109 = vmatpush1.bf16.xpose.msra.mxu0 0
        %2110 = vmatprep.mubr.bf16.mxu0 0
        %2111 = vmatmul.mubr.bf16.gmra.mrb[0].mxu0 %v2073
        %v2112 = vpop.f32.mrb[0].mxu0
        %v2113 = vadd.f32 0.0, %v2112
        %v2114 = vpop.f32.mrb[0].mxu0
        %v2115 = vpop.f32.mrb[0].mxu0
        %v2116 = vadd.f32 0.0, %v2115
        %v2117 = vpop.f32.mrb[0].mxu0
        %2118 = vdwg.mxu0
        %v2120 = vsel %vm1836, %v1834, 0
        %v2123 = vsel %vm1836, %v1362, 0
        %2125 = vmatprep.subr.bf16.mxu0 0
        %2126 = vmatpush1.bf16.xpose.msra.mxu0 %v2123
        %2127 = vmatprep.subr.bf16.mxu0 0
        %2128 = vmatpush1.bf16.xpose.msra.mxu0 0
        %2129 = vmatprep.subr.bf16.mxu0 0
        %2130 = vmatpush1.bf16.xpose.msra.mxu0 0
        %2131 = vmatprep.subr.bf16.mxu0 0
        %2132 = vmatpush1.bf16.xpose.msra.mxu0 0
        %2133 = vmatprep.subr.bf16.mxu0 0
        %2134 = vmatpush1.bf16.xpose.msra.mxu0 0
        %2135 = vmatprep.subr.bf16.mxu0 0
        %2136 = vmatpush1.bf16.xpose.msra.mxu0 0
        %2137 = vmatprep.subr.bf16.mxu0 0
        %2138 = vmatpush1.bf16.xpose.msra.mxu0 0
        %2139 = vmatprep.subr.bf16.mxu0 0
        %2140 = vmatpush1.bf16.xpose.msra.mxu0 0
        %2141 = vmatprep.subr.bf16.mxu0 0
        %2142 = vmatpush1.bf16.xpose.msra.mxu0 0
        %2143 = vmatprep.subr.bf16.mxu0 0
        %2144 = vmatpush1.bf16.xpose.msra.mxu0 0
        %2145 = vmatprep.subr.bf16.mxu0 0
        %2146 = vmatpush1.bf16.xpose.msra.mxu0 0
        %2147 = vmatprep.subr.bf16.mxu0 0
        %2148 = vmatpush1.bf16.xpose.msra.mxu0 0
        %2149 = vmatprep.subr.bf16.mxu0 0
        %2150 = vmatpush1.bf16.xpose.msra.mxu0 0
        %2151 = vmatprep.subr.bf16.mxu0 0
        %2152 = vmatpush1.bf16.xpose.msra.mxu0 0
        %2153 = vmatprep.subr.bf16.mxu0 0
        %2154 = vmatpush1.bf16.xpose.msra.mxu0 0
        %2155 = vmatprep.subr.bf16.mxu0 0
        %2156 = vmatpush1.bf16.xpose.msra.mxu0 0
        %2157 = vmatprep.mubr.bf16.mxu0 0
        %2158 = vmatmul.mubr.bf16.gmra.mrb[0].mxu0 %v2120
        %v2159 = vpop.f32.mrb[0].mxu0
        %v2160 = vadd.f32 0.0, %v2159
        %v2161 = vpop.f32.mrb[0].mxu0
        %v2162 = vpop.f32.mrb[0].mxu0
        %v2163 = vadd.f32 0.0, %v2162
        %v2164 = vpop.f32.mrb[0].mxu0
        %2165 = vdwg.mxu0
        %v2167 = vsel %vm1836, %v1835, 0
        %v2170 = vsel %vm1836, %v1363, 0
        %2172 = vmatprep.subr.bf16.mxu0 0
        %2173 = vmatpush1.bf16.xpose.msra.mxu0 %v2170
        %2174 = vmatprep.subr.bf16.mxu0 0
        %2175 = vmatpush1.bf16.xpose.msra.mxu0 0
        %2176 = vmatprep.subr.bf16.mxu0 0
        %2177 = vmatpush1.bf16.xpose.msra.mxu0 0
        %2178 = vmatprep.subr.bf16.mxu0 0
        %2179 = vmatpush1.bf16.xpose.msra.mxu0 0
        %2180 = vmatprep.subr.bf16.mxu0 0
        %2181 = vmatpush1.bf16.xpose.msra.mxu0 0
        %2182 = vmatprep.subr.bf16.mxu0 0
        %2183 = vmatpush1.bf16.xpose.msra.mxu0 0
        %2184 = vmatprep.subr.bf16.mxu0 0
        %2185 = vmatpush1.bf16.xpose.msra.mxu0 0
        %2186 = vmatprep.subr.bf16.mxu0 0
        %2187 = vmatpush1.bf16.xpose.msra.mxu0 0
        %2188 = vmatprep.subr.bf16.mxu0 0
        %2189 = vmatpush1.bf16.xpose.msra.mxu0 0
        %2190 = vmatprep.subr.bf16.mxu0 0
        %2191 = vmatpush1.bf16.xpose.msra.mxu0 0
        %2192 = vmatprep.subr.bf16.mxu0 0
        %2193 = vmatpush1.bf16.xpose.msra.mxu0 0
        %2194 = vmatprep.subr.bf16.mxu0 0
        %2195 = vmatpush1.bf16.xpose.msra.mxu0 0
        %2196 = vmatprep.subr.bf16.mxu0 0
        %2197 = vmatpush1.bf16.xpose.msra.mxu0 0
        %2198 = vmatprep.subr.bf16.mxu0 0
        %2199 = vmatpush1.bf16.xpose.msra.mxu0 0
        %2200 = vmatprep.subr.bf16.mxu0 0
        %2201 = vmatpush1.bf16.xpose.msra.mxu0 0
        %2202 = vmatprep.subr.bf16.mxu0 0
        %2203 = vmatpush1.bf16.xpose.msra.mxu0 0
        %2204 = vmatprep.mubr.bf16.mxu0 0
        %2205 = vmatmul.mubr.bf16.gmra.mrb[0].mxu0 %v2167
        %v2206 = vpop.f32.mrb[0].mxu0
        %v2207 = vadd.f32 0.0, %v2206
        %v2208 = vpop.f32.mrb[0].mxu0
        %v2209 = vpop.f32.mrb[0].mxu0
        %v2210 = vadd.f32 0.0, %v2209
        %v2211 = vpop.f32.mrb[0].mxu0
        %2212 = vdwg.mxu0
        %v2213 = vld [vmem:[#allocation3] sm:$0xff]
        %v2214 = vld [vmem:[#allocation3 + $0x8] sm:$0xff]
        %v2215 = vld [vmem:[#allocation3 + $0x10] sm:$0xff]
        %v2216 = vld [vmem:[#allocation3 + $0x18] sm:$0xff]
        %v2217 = vld [vmem:[#allocation3 + $0x20] sm:$0xff]
        %v2218 = vld [vmem:[#allocation3 + $0x28] sm:$0xff]
        %v2219 = vld [vmem:[#allocation3 + $0x30] sm:$0xff]
        %v2220 = vld [vmem:[#allocation3 + $0x38] sm:$0xff]
        %v2221 = vld [vmem:[#allocation3 + $0x40] sm:$0xff]
        %v2222 = vld [vmem:[#allocation3 + $0x48] sm:$0xff]
        %v2223 = vld [vmem:[#allocation3 + $0x50] sm:$0xff]
        %v2224 = vld [vmem:[#allocation3 + $0x58] sm:$0xff]
        %v2225 = vld [vmem:[#allocation3 + $0x60] sm:$0xff]
        %v2226 = vld [vmem:[#allocation3 + $0x68] sm:$0xff]
        %v2227 = vld [vmem:[#allocation3 + $0x70] sm:$0xff]
        %v2228 = vld [vmem:[#allocation3 + $0x78] sm:$0xff]
        %vm2229 = vcmask 130048
        %v2230 = vsel %vm2229, %v1878, -inf
        %2231 = vmax.xlane.f32.xlu0 %v2230
        %v2232 = vpop.xlane.xlu0 %2231
        %v2233 = vsel %vm2229, %v1881, -inf
        %2234 = vmax.xlane.f32.xlu0 %v2233
        %v2235 = vpop.xlane.xlu0 %2234
        %v2236 = vsel %vm2229, %v1925, -inf
        %2237 = vmax.xlane.f32.xlu0 %v2236
        %v2238 = vpop.xlane.xlu0 %2237
        %v2239 = vsel %vm2229, %v1928, -inf
        %2240 = vmax.xlane.f32.xlu0 %v2239
        %v2241 = vpop.xlane.xlu0 %2240
        %v2242 = vsel %vm2229, %v1972, -inf
        %2243 = vmax.xlane.f32.xlu0 %v2242
        %v2244 = vpop.xlane.xlu0 %2243
        %v2245 = vsel %vm2229, %v1975, -inf
        %2246 = vmax.xlane.f32.xlu0 %v2245
        %v2247 = vpop.xlane.xlu0 %2246
        %v2248 = vsel %vm2229, %v2019, -inf
        %2249 = vmax.xlane.f32.xlu0 %v2248
        %v2250 = vpop.xlane.xlu0 %2249
        %v2251 = vsel %vm2229, %v2022, -inf
        %2252 = vmax.xlane.f32.xlu0 %v2251
        %v2253 = vpop.xlane.xlu0 %2252
        %v2254 = vsel %vm2229, %v2066, -inf
        %2255 = vmax.xlane.f32.xlu0 %v2254
        %v2256 = vpop.xlane.xlu0 %2255
        %v2257 = vsel %vm2229, %v2069, -inf
        %2258 = vmax.xlane.f32.xlu0 %v2257
        %v2259 = vpop.xlane.xlu0 %2258
        %v2260 = vsel %vm2229, %v2113, -inf
        %2261 = vmax.xlane.f32.xlu0 %v2260
        %v2262 = vpop.xlane.xlu0 %2261
        %v2263 = vsel %vm2229, %v2116, -inf
        %2264 = vmax.xlane.f32.xlu0 %v2263
        %v2265 = vpop.xlane.xlu0 %2264
        %v2266 = vsel %vm2229, %v2160, -inf
        %2267 = vmax.xlane.f32.xlu0 %v2266
        %v2268 = vpop.xlane.xlu0 %2267
        %v2269 = vsel %vm2229, %v2163, -inf
        %2270 = vmax.xlane.f32.xlu0 %v2269
        %v2271 = vpop.xlane.xlu0 %2270
        %v2272 = vsel %vm2229, %v2207, -inf
        %2273 = vmax.xlane.f32.xlu0 %v2272
        %v2274 = vpop.xlane.xlu0 %2273
        %v2275 = vsel %vm2229, %v2210, -inf
        %2276 = vmax.xlane.f32.xlu0 %v2275
        %v2277 = vpop.xlane.xlu0 %2276
        %v2278 = vmax.f32 %v2213, %v2232
        %v2279 = vmax.f32 %v2214, %v2235
        %v2280 = vmax.f32 %v2215, %v2238
        %v2281 = vmax.f32 %v2216, %v2241
        %v2282 = vmax.f32 %v2217, %v2244
        %v2283 = vmax.f32 %v2218, %v2247
        %v2284 = vmax.f32 %v2219, %v2250
        %v2285 = vmax.f32 %v2220, %v2253
        %v2286 = vmax.f32 %v2221, %v2256
        %v2287 = vmax.f32 %v2222, %v2259
        %v2288 = vmax.f32 %v2223, %v2262
        %v2289 = vmax.f32 %v2224, %v2265
        %v2290 = vmax.f32 %v2225, %v2268
        %v2291 = vmax.f32 %v2226, %v2271
        %v2292 = vmax.f32 %v2227, %v2274
        %v2293 = vmax.f32 %v2228, %v2277
        %v2294 = vsub.f32 %v2213, %v2278
        %v2295 = vsub.f32 %v2214, %v2279
        %v2296 = vsub.f32 %v2215, %v2280
        %v2297 = vsub.f32 %v2216, %v2281
        %v2298 = vsub.f32 %v2217, %v2282
        %v2299 = vsub.f32 %v2218, %v2283
        %v2300 = vsub.f32 %v2219, %v2284
        %v2301 = vsub.f32 %v2220, %v2285
        %v2302 = vsub.f32 %v2221, %v2286
        %v2303 = vsub.f32 %v2222, %v2287
        %v2304 = vsub.f32 %v2223, %v2288
        %v2305 = vsub.f32 %v2224, %v2289
        %v2306 = vsub.f32 %v2225, %v2290
        %v2307 = vsub.f32 %v2226, %v2291
        %v2308 = vsub.f32 %v2227, %v2292
        %v2309 = vsub.f32 %v2228, %v2293
        %v2310 = vmul.f32 %v2294, 1.442695
        %v2311 = vpow.pop %v2310
        %v2312 = vmul.f32 %v2295, 1.442695
        %v2313 = vpow.pop %v2312
        %v2314 = vmul.f32 %v2296, 1.442695
        %v2315 = vpow.pop %v2314
        %v2316 = vmul.f32 %v2297, 1.442695
        %v2317 = vpow.pop %v2316
        %v2318 = vmul.f32 %v2298, 1.442695
        %v2319 = vpow.pop %v2318
        %v2320 = vmul.f32 %v2299, 1.442695
        %v2321 = vpow.pop %v2320
        %v2322 = vmul.f32 %v2300, 1.442695
        %v2323 = vpow.pop %v2322
        %v2324 = vmul.f32 %v2301, 1.442695
        %v2325 = vpow.pop %v2324
        %v2326 = vmul.f32 %v2302, 1.442695
        %v2327 = vpow.pop %v2326
        %v2328 = vmul.f32 %v2303, 1.442695
        %v2329 = vpow.pop %v2328
        %v2330 = vmul.f32 %v2304, 1.442695
        %v2331 = vpow.pop %v2330
        %v2332 = vmul.f32 %v2305, 1.442695
        %v2333 = vpow.pop %v2332
        %v2334 = vmul.f32 %v2306, 1.442695
        %v2335 = vpow.pop %v2334
        %v2336 = vmul.f32 %v2307, 1.442695
        %v2337 = vpow.pop %v2336
        %v2338 = vmul.f32 %v2308, 1.442695
        %v2339 = vpow.pop %v2338
        %v2340 = vmul.f32 %v2309, 1.442695
        %v2341 = vpow.pop %v2340
        %2343 = vset.pattern.permute.xlu0 0
        %2344 = vperm.xlu0 %2343, %v2278
        %v2345 = vpop.permute.xlu0 %2344
        %2348 = vset.pattern.permute.xlu0 0
        %2349 = vperm.xlu0 %2348, %v2279
        %v2350 = vpop.permute.xlu0 %2349
        %2353 = vset.pattern.permute.xlu0 0
        %2354 = vperm.xlu0 %2353, %v2280
        %v2355 = vpop.permute.xlu0 %2354
        %2358 = vset.pattern.permute.xlu0 0
        %2359 = vperm.xlu0 %2358, %v2281
        %v2360 = vpop.permute.xlu0 %2359
        %2363 = vset.pattern.permute.xlu0 0
        %2364 = vperm.xlu0 %2363, %v2282
        %v2365 = vpop.permute.xlu0 %2364
        %2368 = vset.pattern.permute.xlu0 0
        %2369 = vperm.xlu0 %2368, %v2283
        %v2370 = vpop.permute.xlu0 %2369
        %2373 = vset.pattern.permute.xlu0 0
        %2374 = vperm.xlu0 %2373, %v2284
        %v2375 = vpop.permute.xlu0 %2374
        %2378 = vset.pattern.permute.xlu0 0
        %2379 = vperm.xlu0 %2378, %v2285
        %v2380 = vpop.permute.xlu0 %2379
        %2383 = vset.pattern.permute.xlu0 0
        %2384 = vperm.xlu0 %2383, %v2286
        %v2385 = vpop.permute.xlu0 %2384
        %2388 = vset.pattern.permute.xlu0 0
        %2389 = vperm.xlu0 %2388, %v2287
        %v2390 = vpop.permute.xlu0 %2389
        %2393 = vset.pattern.permute.xlu0 0
        %2394 = vperm.xlu0 %2393, %v2288
        %v2395 = vpop.permute.xlu0 %2394
        %2398 = vset.pattern.permute.xlu0 0
        %2399 = vperm.xlu0 %2398, %v2289
        %v2400 = vpop.permute.xlu0 %2399
        %2403 = vset.pattern.permute.xlu0 0
        %2404 = vperm.xlu0 %2403, %v2290
        %v2405 = vpop.permute.xlu0 %2404
        %2408 = vset.pattern.permute.xlu0 0
        %2409 = vperm.xlu0 %2408, %v2291
        %v2410 = vpop.permute.xlu0 %2409
        %2413 = vset.pattern.permute.xlu0 0
        %2414 = vperm.xlu0 %2413, %v2292
        %v2415 = vpop.permute.xlu0 %2414
        %2418 = vset.pattern.permute.xlu0 0
        %2419 = vperm.xlu0 %2418, %v2293
        %v2420 = vpop.permute.xlu0 %2419
        %v2422 = vsub.f32 %v1878, %v2345
        %v2423 = vsub.f32 %v1881, %v2350
        %v2424 = vsub.f32 %v1925, %v2355
        %v2425 = vsub.f32 %v1928, %v2360
        %v2426 = vsub.f32 %v1972, %v2365
        %v2427 = vsub.f32 %v1975, %v2370
        %v2428 = vsub.f32 %v2019, %v2375
        %v2429 = vsub.f32 %v2022, %v2380
        %v2430 = vsub.f32 %v2066, %v2385
        %v2431 = vsub.f32 %v2069, %v2390
        %v2432 = vsub.f32 %v2113, %v2395
        %v2433 = vsub.f32 %v2116, %v2400
        %v2434 = vsub.f32 %v2160, %v2405
        %v2435 = vsub.f32 %v2163, %v2410
        %v2436 = vsub.f32 %v2207, %v2415
        %v2437 = vsub.f32 %v2210, %v2420
        %v2438 = vmul.f32 %v2422, 1.442695
        %v2439 = vpow.pop %v2438
        %v2440 = vmul.f32 %v2423, 1.442695
        %v2441 = vpow.pop %v2440
        %v2442 = vmul.f32 %v2424, 1.442695
        %v2443 = vpow.pop %v2442
        %v2444 = vmul.f32 %v2425, 1.442695
        %v2445 = vpow.pop %v2444
        %v2446 = vmul.f32 %v2426, 1.442695
        %v2447 = vpow.pop %v2446
        %v2448 = vmul.f32 %v2427, 1.442695
        %v2449 = vpow.pop %v2448
        %v2450 = vmul.f32 %v2428, 1.442695
        %v2451 = vpow.pop %v2450
        %v2452 = vmul.f32 %v2429, 1.442695
        %v2453 = vpow.pop %v2452
        %v2454 = vmul.f32 %v2430, 1.442695
        %v2455 = vpow.pop %v2454
        %v2456 = vmul.f32 %v2431, 1.442695
        %v2457 = vpow.pop %v2456
        %v2458 = vmul.f32 %v2432, 1.442695
        %v2459 = vpow.pop %v2458
        %v2460 = vmul.f32 %v2433, 1.442695
        %v2461 = vpow.pop %v2460
        %v2462 = vmul.f32 %v2434, 1.442695
        %v2463 = vpow.pop %v2462
        %v2464 = vmul.f32 %v2435, 1.442695
        %v2465 = vpow.pop %v2464
        %v2466 = vmul.f32 %v2436, 1.442695
        %v2467 = vpow.pop %v2466
        %v2468 = vmul.f32 %v2437, 1.442695
        %v2469 = vpow.pop %v2468
        %v2470 = vld [vmem:[#allocation4] sm:$0xff]
        %v2471 = vld [vmem:[#allocation4 + $0x8] sm:$0xff]
        %v2472 = vld [vmem:[#allocation4 + $0x10] sm:$0xff]
        %v2473 = vld [vmem:[#allocation4 + $0x18] sm:$0xff]
        %v2474 = vld [vmem:[#allocation4 + $0x20] sm:$0xff]
        %v2475 = vld [vmem:[#allocation4 + $0x28] sm:$0xff]
        %v2476 = vld [vmem:[#allocation4 + $0x30] sm:$0xff]
        %v2477 = vld [vmem:[#allocation4 + $0x38] sm:$0xff]
        %v2478 = vld [vmem:[#allocation4 + $0x40] sm:$0xff]
        %v2479 = vld [vmem:[#allocation4 + $0x48] sm:$0xff]
        %v2480 = vld [vmem:[#allocation4 + $0x50] sm:$0xff]
        %v2481 = vld [vmem:[#allocation4 + $0x58] sm:$0xff]
        %v2482 = vld [vmem:[#allocation4 + $0x60] sm:$0xff]
        %v2483 = vld [vmem:[#allocation4 + $0x68] sm:$0xff]
        %v2484 = vld [vmem:[#allocation4 + $0x70] sm:$0xff]
        %v2485 = vld [vmem:[#allocation4 + $0x78] sm:$0xff]
        %v2486 = vmul.f32 %v2311, %v2470
        %v2487 = vmul.f32 %v2313, %v2471
        %v2488 = vmul.f32 %v2315, %v2472
        %v2489 = vmul.f32 %v2317, %v2473
        %v2490 = vmul.f32 %v2319, %v2474
        %v2491 = vmul.f32 %v2321, %v2475
        %v2492 = vmul.f32 %v2323, %v2476
        %v2493 = vmul.f32 %v2325, %v2477
        %v2494 = vmul.f32 %v2327, %v2478
        %v2495 = vmul.f32 %v2329, %v2479
        %v2496 = vmul.f32 %v2331, %v2480
        %v2497 = vmul.f32 %v2333, %v2481
        %v2498 = vmul.f32 %v2335, %v2482
        %v2499 = vmul.f32 %v2337, %v2483
        %v2500 = vmul.f32 %v2339, %v2484
        %v2501 = vmul.f32 %v2341, %v2485
        %v2502 = vsel %vm2229, %v2439, 0.0
        %2503 = vadd.xlane.f32.xlu0 %v2502
        %v2504 = vpop.xlane.xlu0 %2503
        %v2505 = vsel %vm2229, %v2441, 0.0
        %2506 = vadd.xlane.f32.xlu0 %v2505
        %v2507 = vpop.xlane.xlu0 %2506
        %v2508 = vsel %vm2229, %v2443, 0.0
        %2509 = vadd.xlane.f32.xlu0 %v2508
        %v2510 = vpop.xlane.xlu0 %2509
        %v2511 = vsel %vm2229, %v2445, 0.0
        %2512 = vadd.xlane.f32.xlu0 %v2511
        %v2513 = vpop.xlane.xlu0 %2512
        %v2514 = vsel %vm2229, %v2447, 0.0
        %2515 = vadd.xlane.f32.xlu0 %v2514
        %v2516 = vpop.xlane.xlu0 %2515
        %v2517 = vsel %vm2229, %v2449, 0.0
        %2518 = vadd.xlane.f32.xlu0 %v2517
        %v2519 = vpop.xlane.xlu0 %2518
        %v2520 = vsel %vm2229, %v2451, 0.0
        %2521 = vadd.xlane.f32.xlu0 %v2520
        %v2522 = vpop.xlane.xlu0 %2521
        %v2523 = vsel %vm2229, %v2453, 0.0
        %2524 = vadd.xlane.f32.xlu0 %v2523
        %v2525 = vpop.xlane.xlu0 %2524
        %v2526 = vsel %vm2229, %v2455, 0.0
        %2527 = vadd.xlane.f32.xlu0 %v2526
        %v2528 = vpop.xlane.xlu0 %2527
        %v2529 = vsel %vm2229, %v2457, 0.0
        %2530 = vadd.xlane.f32.xlu0 %v2529
        %v2531 = vpop.xlane.xlu0 %2530
        %v2532 = vsel %vm2229, %v2459, 0.0
        %2533 = vadd.xlane.f32.xlu0 %v2532
        %v2534 = vpop.xlane.xlu0 %2533
        %v2535 = vsel %vm2229, %v2461, 0.0
        %2536 = vadd.xlane.f32.xlu0 %v2535
        %v2537 = vpop.xlane.xlu0 %2536
        %v2538 = vsel %vm2229, %v2463, 0.0
        %2539 = vadd.xlane.f32.xlu0 %v2538
        %v2540 = vpop.xlane.xlu0 %2539
        %v2541 = vsel %vm2229, %v2465, 0.0
        %2542 = vadd.xlane.f32.xlu0 %v2541
        %v2543 = vpop.xlane.xlu0 %2542
        %v2544 = vsel %vm2229, %v2467, 0.0
        %2545 = vadd.xlane.f32.xlu0 %v2544
        %v2546 = vpop.xlane.xlu0 %2545
        %v2547 = vsel %vm2229, %v2469, 0.0
        %2548 = vadd.xlane.f32.xlu0 %v2547
        %v2549 = vpop.xlane.xlu0 %2548
        %v2550 = vadd.f32 %v2486, %v2504
        %v2551 = vadd.f32 %v2487, %v2507
        %v2552 = vadd.f32 %v2488, %v2510
        %v2553 = vadd.f32 %v2489, %v2513
        %v2554 = vadd.f32 %v2490, %v2516
        %v2555 = vadd.f32 %v2491, %v2519
        %v2556 = vadd.f32 %v2492, %v2522
        %v2557 = vadd.f32 %v2493, %v2525
        %v2558 = vadd.f32 %v2494, %v2528
        %v2559 = vadd.f32 %v2495, %v2531
        %v2560 = vadd.f32 %v2496, %v2534
        %v2561 = vadd.f32 %v2497, %v2537
        %v2562 = vadd.f32 %v2498, %v2540
        %v2563 = vadd.f32 %v2499, %v2543
        %v2564 = vadd.f32 %v2500, %v2546
        %v2565 = vadd.f32 %v2501, %v2549
        %vm2566 = vcmask 7168
        %2567 = vst.msk [vmem:[#allocation4] sm:$0xff] %vm2566, %v2550
        %2568 = vst.msk [vmem:[#allocation4 + $0x8] sm:$0xff] %vm2566, %v2551
        %2569 = vst.msk [vmem:[#allocation4 + $0x10] sm:$0xff] %vm2566, %v2552
        %2570 = vst.msk [vmem:[#allocation4 + $0x18] sm:$0xff] %vm2566, %v2553
        %2571 = vst.msk [vmem:[#allocation4 + $0x20] sm:$0xff] %vm2566, %v2554
        %2572 = vst.msk [vmem:[#allocation4 + $0x28] sm:$0xff] %vm2566, %v2555
        %2573 = vst.msk [vmem:[#allocation4 + $0x30] sm:$0xff] %vm2566, %v2556
        %2574 = vst.msk [vmem:[#allocation4 + $0x38] sm:$0xff] %vm2566, %v2557
        %2575 = vst.msk [vmem:[#allocation4 + $0x40] sm:$0xff] %vm2566, %v2558
        %2576 = vst.msk [vmem:[#allocation4 + $0x48] sm:$0xff] %vm2566, %v2559
        %2577 = vst.msk [vmem:[#allocation4 + $0x50] sm:$0xff] %vm2566, %v2560
        %2578 = vst.msk [vmem:[#allocation4 + $0x58] sm:$0xff] %vm2566, %v2561
        %2579 = vst.msk [vmem:[#allocation4 + $0x60] sm:$0xff] %vm2566, %v2562
        %2580 = vst.msk [vmem:[#allocation4 + $0x68] sm:$0xff] %vm2566, %v2563
        %2581 = vst.msk [vmem:[#allocation4 + $0x70] sm:$0xff] %vm2566, %v2564
        %2582 = vst.msk [vmem:[#allocation4 + $0x78] sm:$0xff] %vm2566, %v2565
        %v2583 = vld [vmem:[#allocation5] sm:$0xff]
        %v2584 = vld [vmem:[#allocation5 + $0x8] sm:$0xff]
        %v2585 = vld [vmem:[#allocation5 + $0x10] sm:$0xff]
        %v2586 = vld [vmem:[#allocation5 + $0x18] sm:$0xff]
        %v2587 = vld [vmem:[#allocation5 + $0x20] sm:$0xff]
        %v2588 = vld [vmem:[#allocation5 + $0x28] sm:$0xff]
        %v2589 = vld [vmem:[#allocation5 + $0x30] sm:$0xff]
        %v2590 = vld [vmem:[#allocation5 + $0x38] sm:$0xff]
        %v2591 = vld [vmem:[#allocation5 + $0x40] sm:$0xff]
        %v2592 = vld [vmem:[#allocation5 + $0x48] sm:$0xff]
        %v2593 = vld [vmem:[#allocation5 + $0x50] sm:$0xff]
        %v2594 = vld [vmem:[#allocation5 + $0x58] sm:$0xff]
        %v2595 = vld [vmem:[#allocation5 + $0x60] sm:$0xff]
        %v2596 = vld [vmem:[#allocation5 + $0x68] sm:$0xff]
        %v2597 = vld [vmem:[#allocation5 + $0x70] sm:$0xff]
        %v2598 = vld [vmem:[#allocation5 + $0x78] sm:$0xff]
        %2600 = vset.pattern.permute.xlu0 0
        %2601 = vperm.xlu0 %2600, %v2311
        %v2602 = vpop.permute.xlu0 %2601
        %2605 = vset.pattern.permute.xlu0 0
        %2606 = vperm.xlu0 %2605, %v2313
        %v2607 = vpop.permute.xlu0 %2606
        %2610 = vset.pattern.permute.xlu0 0
        %2611 = vperm.xlu0 %2610, %v2315
        %v2612 = vpop.permute.xlu0 %2611
        %2615 = vset.pattern.permute.xlu0 0
        %2616 = vperm.xlu0 %2615, %v2317
        %v2617 = vpop.permute.xlu0 %2616
        %2620 = vset.pattern.permute.xlu0 0
        %2621 = vperm.xlu0 %2620, %v2319
        %v2622 = vpop.permute.xlu0 %2621
        %2625 = vset.pattern.permute.xlu0 0
        %2626 = vperm.xlu0 %2625, %v2321
        %v2627 = vpop.permute.xlu0 %2626
        %2630 = vset.pattern.permute.xlu0 0
        %2631 = vperm.xlu0 %2630, %v2323
        %v2632 = vpop.permute.xlu0 %2631
        %2635 = vset.pattern.permute.xlu0 0
        %2636 = vperm.xlu0 %2635, %v2325
        %v2637 = vpop.permute.xlu0 %2636
        %2640 = vset.pattern.permute.xlu0 0
        %2641 = vperm.xlu0 %2640, %v2327
        %v2642 = vpop.permute.xlu0 %2641
        %2645 = vset.pattern.permute.xlu0 0
        %2646 = vperm.xlu0 %2645, %v2329
        %v2647 = vpop.permute.xlu0 %2646
        %2650 = vset.pattern.permute.xlu0 0
        %2651 = vperm.xlu0 %2650, %v2331
        %v2652 = vpop.permute.xlu0 %2651
        %2655 = vset.pattern.permute.xlu0 0
        %2656 = vperm.xlu0 %2655, %v2333
        %v2657 = vpop.permute.xlu0 %2656
        %2660 = vset.pattern.permute.xlu0 0
        %2661 = vperm.xlu0 %2660, %v2335
        %v2662 = vpop.permute.xlu0 %2661
        %2665 = vset.pattern.permute.xlu0 0
        %2666 = vperm.xlu0 %2665, %v2337
        %v2667 = vpop.permute.xlu0 %2666
        %2670 = vset.pattern.permute.xlu0 0
        %2671 = vperm.xlu0 %2670, %v2339
        %v2672 = vpop.permute.xlu0 %2671
        %2675 = vset.pattern.permute.xlu0 0
        %2676 = vperm.xlu0 %2675, %v2341
        %v2677 = vpop.permute.xlu0 %2676
        %v2679 = vmul.f32 %v2602, %v2583
        %v2680 = vmul.f32 %v2607, %v2584
        %v2681 = vmul.f32 %v2612, %v2585
        %v2682 = vmul.f32 %v2617, %v2586
        %v2683 = vmul.f32 %v2622, %v2587
        %v2684 = vmul.f32 %v2627, %v2588
        %v2685 = vmul.f32 %v2632, %v2589
        %v2686 = vmul.f32 %v2637, %v2590
        %v2687 = vmul.f32 %v2642, %v2591
        %v2688 = vmul.f32 %v2647, %v2592
        %v2689 = vmul.f32 %v2652, %v2593
        %v2690 = vmul.f32 %v2657, %v2594
        %v2691 = vmul.f32 %v2662, %v2595
        %v2692 = vmul.f32 %v2667, %v2596
        %v2693 = vmul.f32 %v2672, %v2597
        %v2694 = vmul.f32 %v2677, %v2598
        %v2695 = vpack.c.bf16 %v2441, %v2439
        %v2696 = vpack.c.bf16 %v2445, %v2443
        %v2697 = vpack.c.bf16 %v2449, %v2447
        %v2698 = vpack.c.bf16 %v2453, %v2451
        %v2699 = vpack.c.bf16 %v2457, %v2455
        %v2700 = vpack.c.bf16 %v2461, %v2459
        %v2701 = vpack.c.bf16 %v2465, %v2463
        %v2702 = vpack.c.bf16 %v2469, %v2467
        %v2704 = vsel %vm2229, %v2695, 0
        %2706 = vmatprep.subr.bf16.mxu0 0
        %2707 = vmatpush1.bf16.msra.mxu0 %v1820
        %2708 = vmatprep.subr.bf16.mxu0 0
        %2709 = vmatpush1.bf16.msra.mxu0 0
        %2710 = vmatprep.subr.bf16.mxu0 0
        %2711 = vmatpush1.bf16.msra.mxu0 0
        %2712 = vmatprep.subr.bf16.mxu0 0
        %2713 = vmatpush1.bf16.msra.mxu0 0
        %2714 = vmatprep.subr.bf16.mxu0 0
        %2715 = vmatpush1.bf16.msra.mxu0 0
        %2716 = vmatprep.subr.bf16.mxu0 0
        %2717 = vmatpush1.bf16.msra.mxu0 0
        %2718 = vmatprep.subr.bf16.mxu0 0
        %2719 = vmatpush1.bf16.msra.mxu0 0
        %2720 = vmatprep.subr.bf16.mxu0 0
        %2721 = vmatpush1.bf16.msra.mxu0 0
        %2722 = vmatprep.subr.bf16.mxu0 0
        %2723 = vmatpush1.bf16.msra.mxu0 0
        %2724 = vmatprep.subr.bf16.mxu0 0
        %2725 = vmatpush1.bf16.msra.mxu0 0
        %2726 = vmatprep.subr.bf16.mxu0 0
        %2727 = vmatpush1.bf16.msra.mxu0 0
        %2728 = vmatprep.subr.bf16.mxu0 0
        %2729 = vmatpush1.bf16.msra.mxu0 0
        %2730 = vmatprep.subr.bf16.mxu0 0
        %2731 = vmatpush1.bf16.msra.mxu0 0
        %2732 = vmatprep.subr.bf16.mxu0 0
        %2733 = vmatpush1.bf16.msra.mxu0 0
        %2734 = vmatprep.subr.bf16.mxu0 0
        %2735 = vmatpush1.bf16.msra.mxu0 0
        %2736 = vmatprep.subr.bf16.mxu0 0
        %2737 = vmatpush1.bf16.msra.mxu0 0
        %2738 = vmatprep.mubr.bf16.mxu0 0
        %2739 = vmatmul.mubr.bf16.gmra.mrb[0].mxu0 %v2704
        %v2740 = vpop.f32.mrb[0].mxu0
        %v2741 = vadd.f32 0.0, %v2740
        %v2742 = vpop.f32.mrb[0].mxu0
        %v2743 = vpop.f32.mrb[0].mxu0
        %v2744 = vadd.f32 0.0, %v2743
        %v2745 = vpop.f32.mrb[0].mxu0
        %2746 = vdwg.mxu0
        %v2748 = vsel %vm2229, %v2696, 0
        %2750 = vmatprep.subr.bf16.mxu0 0
        %2751 = vmatpush1.bf16.msra.mxu0 %v1821
        %2752 = vmatprep.subr.bf16.mxu0 0
        %2753 = vmatpush1.bf16.msra.mxu0 0
        %2754 = vmatprep.subr.bf16.mxu0 0
        %2755 = vmatpush1.bf16.msra.mxu0 0
        %2756 = vmatprep.subr.bf16.mxu0 0
        %2757 = vmatpush1.bf16.msra.mxu0 0
        %2758 = vmatprep.subr.bf16.mxu0 0
        %2759 = vmatpush1.bf16.msra.mxu0 0
        %2760 = vmatprep.subr.bf16.mxu0 0
        %2761 = vmatpush1.bf16.msra.mxu0 0
        %2762 = vmatprep.subr.bf16.mxu0 0
        %2763 = vmatpush1.bf16.msra.mxu0 0
        %2764 = vmatprep.subr.bf16.mxu0 0
        %2765 = vmatpush1.bf16.msra.mxu0 0
        %2766 = vmatprep.subr.bf16.mxu0 0
        %2767 = vmatpush1.bf16.msra.mxu0 0
        %2768 = vmatprep.subr.bf16.mxu0 0
        %2769 = vmatpush1.bf16.msra.mxu0 0
        %2770 = vmatprep.subr.bf16.mxu0 0
        %2771 = vmatpush1.bf16.msra.mxu0 0
        %2772 = vmatprep.subr.bf16.mxu0 0
        %2773 = vmatpush1.bf16.msra.mxu0 0
        %2774 = vmatprep.subr.bf16.mxu0 0
        %2775 = vmatpush1.bf16.msra.mxu0 0
        %2776 = vmatprep.subr.bf16.mxu0 0
        %2777 = vmatpush1.bf16.msra.mxu0 0
        %2778 = vmatprep.subr.bf16.mxu0 0
        %2779 = vmatpush1.bf16.msra.mxu0 0
        %2780 = vmatprep.subr.bf16.mxu0 0
        %2781 = vmatpush1.bf16.msra.mxu0 0
        %2782 = vmatprep.mubr.bf16.mxu0 0
        %2783 = vmatmul.mubr.bf16.gmra.mrb[0].mxu0 %v2748
        %v2784 = vpop.f32.mrb[0].mxu0
        %v2785 = vadd.f32 0.0, %v2784
        %v2786 = vpop.f32.mrb[0].mxu0
        %v2787 = vpop.f32.mrb[0].mxu0
        %v2788 = vadd.f32 0.0, %v2787
        %v2789 = vpop.f32.mrb[0].mxu0
        %2790 = vdwg.mxu0
        %v2792 = vsel %vm2229, %v2697, 0
        %2794 = vmatprep.subr.bf16.mxu0 0
        %2795 = vmatpush1.bf16.msra.mxu0 %v1822
        %2796 = vmatprep.subr.bf16.mxu0 0
        %2797 = vmatpush1.bf16.msra.mxu0 0
        %2798 = vmatprep.subr.bf16.mxu0 0
        %2799 = vmatpush1.bf16.msra.mxu0 0
        %2800 = vmatprep.subr.bf16.mxu0 0
        %2801 = vmatpush1.bf16.msra.mxu0 0
        %2802 = vmatprep.subr.bf16.mxu0 0
        %2803 = vmatpush1.bf16.msra.mxu0 0
        %2804 = vmatprep.subr.bf16.mxu0 0
        %2805 = vmatpush1.bf16.msra.mxu0 0
        %2806 = vmatprep.subr.bf16.mxu0 0
        %2807 = vmatpush1.bf16.msra.mxu0 0
        %2808 = vmatprep.subr.bf16.mxu0 0
        %2809 = vmatpush1.bf16.msra.mxu0 0
        %2810 = vmatprep.subr.bf16.mxu0 0
        %2811 = vmatpush1.bf16.msra.mxu0 0
        %2812 = vmatprep.subr.bf16.mxu0 0
        %2813 = vmatpush1.bf16.msra.mxu0 0
        %2814 = vmatprep.subr.bf16.mxu0 0
        %2815 = vmatpush1.bf16.msra.mxu0 0
        %2816 = vmatprep.subr.bf16.mxu0 0
        %2817 = vmatpush1.bf16.msra.mxu0 0
        %2818 = vmatprep.subr.bf16.mxu0 0
        %2819 = vmatpush1.bf16.msra.mxu0 0
        %2820 = vmatprep.subr.bf16.mxu0 0
        %2821 = vmatpush1.bf16.msra.mxu0 0
        %2822 = vmatprep.subr.bf16.mxu0 0
        %2823 = vmatpush1.bf16.msra.mxu0 0
        %2824 = vmatprep.subr.bf16.mxu0 0
        %2825 = vmatpush1.bf16.msra.mxu0 0
        %2826 = vmatprep.mubr.bf16.mxu0 0
        %2827 = vmatmul.mubr.bf16.gmra.mrb[0].mxu0 %v2792
        %v2828 = vpop.f32.mrb[0].mxu0
        %v2829 = vadd.f32 0.0, %v2828
        %v2830 = vpop.f32.mrb[0].mxu0
        %v2831 = vpop.f32.mrb[0].mxu0
        %v2832 = vadd.f32 0.0, %v2831
        %v2833 = vpop.f32.mrb[0].mxu0
        %2834 = vdwg.mxu0
        %v2836 = vsel %vm2229, %v2698, 0
        %2838 = vmatprep.subr.bf16.mxu0 0
        %2839 = vmatpush1.bf16.msra.mxu0 %v1823
        %2840 = vmatprep.subr.bf16.mxu0 0
        %2841 = vmatpush1.bf16.msra.mxu0 0
        %2842 = vmatprep.subr.bf16.mxu0 0
        %2843 = vmatpush1.bf16.msra.mxu0 0
        %2844 = vmatprep.subr.bf16.mxu0 0
        %2845 = vmatpush1.bf16.msra.mxu0 0
        %2846 = vmatprep.subr.bf16.mxu0 0
        %2847 = vmatpush1.bf16.msra.mxu0 0
        %2848 = vmatprep.subr.bf16.mxu0 0
        %2849 = vmatpush1.bf16.msra.mxu0 0
        %2850 = vmatprep.subr.bf16.mxu0 0
        %2851 = vmatpush1.bf16.msra.mxu0 0
        %2852 = vmatprep.subr.bf16.mxu0 0
        %2853 = vmatpush1.bf16.msra.mxu0 0
        %2854 = vmatprep.subr.bf16.mxu0 0
        %2855 = vmatpush1.bf16.msra.mxu0 0
        %2856 = vmatprep.subr.bf16.mxu0 0
        %2857 = vmatpush1.bf16.msra.mxu0 0
        %2858 = vmatprep.subr.bf16.mxu0 0
        %2859 = vmatpush1.bf16.msra.mxu0 0
        %2860 = vmatprep.subr.bf16.mxu0 0
        %2861 = vmatpush1.bf16.msra.mxu0 0
        %2862 = vmatprep.subr.bf16.mxu0 0
        %2863 = vmatpush1.bf16.msra.mxu0 0
        %2864 = vmatprep.subr.bf16.mxu0 0
        %2865 = vmatpush1.bf16.msra.mxu0 0
        %2866 = vmatprep.subr.bf16.mxu0 0
        %2867 = vmatpush1.bf16.msra.mxu0 0
        %2868 = vmatprep.subr.bf16.mxu0 0
        %2869 = vmatpush1.bf16.msra.mxu0 0
        %2870 = vmatprep.mubr.bf16.mxu0 0
        %2871 = vmatmul.mubr.bf16.gmra.mrb[0].mxu0 %v2836
        %v2872 = vpop.f32.mrb[0].mxu0
        %v2873 = vadd.f32 0.0, %v2872
        %v2874 = vpop.f32.mrb[0].mxu0
        %v2875 = vpop.f32.mrb[0].mxu0
        %v2876 = vadd.f32 0.0, %v2875
        %v2877 = vpop.f32.mrb[0].mxu0
        %2878 = vdwg.mxu0
        %v2880 = vsel %vm2229, %v2699, 0
        %2882 = vmatprep.subr.bf16.mxu0 0
        %2883 = vmatpush1.bf16.msra.mxu0 %v1824
        %2884 = vmatprep.subr.bf16.mxu0 0
        %2885 = vmatpush1.bf16.msra.mxu0 0
        %2886 = vmatprep.subr.bf16.mxu0 0
        %2887 = vmatpush1.bf16.msra.mxu0 0
        %2888 = vmatprep.subr.bf16.mxu0 0
        %2889 = vmatpush1.bf16.msra.mxu0 0
        %2890 = vmatprep.subr.bf16.mxu0 0
        %2891 = vmatpush1.bf16.msra.mxu0 0
        %2892 = vmatprep.subr.bf16.mxu0 0
        %2893 = vmatpush1.bf16.msra.mxu0 0
        %2894 = vmatprep.subr.bf16.mxu0 0
        %2895 = vmatpush1.bf16.msra.mxu0 0
        %2896 = vmatprep.subr.bf16.mxu0 0
        %2897 = vmatpush1.bf16.msra.mxu0 0
        %2898 = vmatprep.subr.bf16.mxu0 0
        %2899 = vmatpush1.bf16.msra.mxu0 0
        %2900 = vmatprep.subr.bf16.mxu0 0
        %2901 = vmatpush1.bf16.msra.mxu0 0
        %2902 = vmatprep.subr.bf16.mxu0 0
        %2903 = vmatpush1.bf16.msra.mxu0 0
        %2904 = vmatprep.subr.bf16.mxu0 0
        %2905 = vmatpush1.bf16.msra.mxu0 0
        %2906 = vmatprep.subr.bf16.mxu0 0
        %2907 = vmatpush1.bf16.msra.mxu0 0
        %2908 = vmatprep.subr.bf16.mxu0 0
        %2909 = vmatpush1.bf16.msra.mxu0 0
        %2910 = vmatprep.subr.bf16.mxu0 0
        %2911 = vmatpush1.bf16.msra.mxu0 0
        %2912 = vmatprep.subr.bf16.mxu0 0
        %2913 = vmatpush1.bf16.msra.mxu0 0
        %2914 = vmatprep.mubr.bf16.mxu0 0
        %2915 = vmatmul.mubr.bf16.gmra.mrb[0].mxu0 %v2880
        %v2916 = vpop.f32.mrb[0].mxu0
        %v2917 = vadd.f32 0.0, %v2916
        %v2918 = vpop.f32.mrb[0].mxu0
        %v2919 = vpop.f32.mrb[0].mxu0
        %v2920 = vadd.f32 0.0, %v2919
        %v2921 = vpop.f32.mrb[0].mxu0
        %2922 = vdwg.mxu0
        %v2924 = vsel %vm2229, %v2700, 0
        %2926 = vmatprep.subr.bf16.mxu0 0
        %2927 = vmatpush1.bf16.msra.mxu0 %v1825
        %2928 = vmatprep.subr.bf16.mxu0 0
        %2929 = vmatpush1.bf16.msra.mxu0 0
        %2930 = vmatprep.subr.bf16.mxu0 0
        %2931 = vmatpush1.bf16.msra.mxu0 0
        %2932 = vmatprep.subr.bf16.mxu0 0
        %2933 = vmatpush1.bf16.msra.mxu0 0
        %2934 = vmatprep.subr.bf16.mxu0 0
        %2935 = vmatpush1.bf16.msra.mxu0 0
        %2936 = vmatprep.subr.bf16.mxu0 0
        %2937 = vmatpush1.bf16.msra.mxu0 0
        %2938 = vmatprep.subr.bf16.mxu0 0
        %2939 = vmatpush1.bf16.msra.mxu0 0
        %2940 = vmatprep.subr.bf16.mxu0 0
        %2941 = vmatpush1.bf16.msra.mxu0 0
        %2942 = vmatprep.subr.bf16.mxu0 0
        %2943 = vmatpush1.bf16.msra.mxu0 0
        %2944 = vmatprep.subr.bf16.mxu0 0
        %2945 = vmatpush1.bf16.msra.mxu0 0
        %2946 = vmatprep.subr.bf16.mxu0 0
        %2947 = vmatpush1.bf16.msra.mxu0 0
        %2948 = vmatprep.subr.bf16.mxu0 0
        %2949 = vmatpush1.bf16.msra.mxu0 0
        %2950 = vmatprep.subr.bf16.mxu0 0
        %2951 = vmatpush1.bf16.msra.mxu0 0
        %2952 = vmatprep.subr.bf16.mxu0 0
        %2953 = vmatpush1.bf16.msra.mxu0 0
        %2954 = vmatprep.subr.bf16.mxu0 0
        %2955 = vmatpush1.bf16.msra.mxu0 0
        %2956 = vmatprep.subr.bf16.mxu0 0
        %2957 = vmatpush1.bf16.msra.mxu0 0
        %2958 = vmatprep.mubr.bf16.mxu0 0
        %2959 = vmatmul.mubr.bf16.gmra.mrb[0].mxu0 %v2924
        %v2960 = vpop.f32.mrb[0].mxu0
        %v2961 = vadd.f32 0.0, %v2960
        %v2962 = vpop.f32.mrb[0].mxu0
        %v2963 = vpop.f32.mrb[0].mxu0
        %v2964 = vadd.f32 0.0, %v2963
        %v2965 = vpop.f32.mrb[0].mxu0
        %2966 = vdwg.mxu0
        %v2968 = vsel %vm2229, %v2701, 0
        %2970 = vmatprep.subr.bf16.mxu0 0
        %2971 = vmatpush1.bf16.msra.mxu0 %v1826
        %2972 = vmatprep.subr.bf16.mxu0 0
        %2973 = vmatpush1.bf16.msra.mxu0 0
        %2974 = vmatprep.subr.bf16.mxu0 0
        %2975 = vmatpush1.bf16.msra.mxu0 0
        %2976 = vmatprep.subr.bf16.mxu0 0
        %2977 = vmatpush1.bf16.msra.mxu0 0
        %2978 = vmatprep.subr.bf16.mxu0 0
        %2979 = vmatpush1.bf16.msra.mxu0 0
        %2980 = vmatprep.subr.bf16.mxu0 0
        %2981 = vmatpush1.bf16.msra.mxu0 0
        %2982 = vmatprep.subr.bf16.mxu0 0
        %2983 = vmatpush1.bf16.msra.mxu0 0
        %2984 = vmatprep.subr.bf16.mxu0 0
        %2985 = vmatpush1.bf16.msra.mxu0 0
        %2986 = vmatprep.subr.bf16.mxu0 0
        %2987 = vmatpush1.bf16.msra.mxu0 0
        %2988 = vmatprep.subr.bf16.mxu0 0
        %2989 = vmatpush1.bf16.msra.mxu0 0
        %2990 = vmatprep.subr.bf16.mxu0 0
        %2991 = vmatpush1.bf16.msra.mxu0 0
        %2992 = vmatprep.subr.bf16.mxu0 0
        %2993 = vmatpush1.bf16.msra.mxu0 0
        %2994 = vmatprep.subr.bf16.mxu0 0
        %2995 = vmatpush1.bf16.msra.mxu0 0
        %2996 = vmatprep.subr.bf16.mxu0 0
        %2997 = vmatpush1.bf16.msra.mxu0 0
        %2998 = vmatprep.subr.bf16.mxu0 0
        %2999 = vmatpush1.bf16.msra.mxu0 0
        %3000 = vmatprep.subr.bf16.mxu0 0
        %3001 = vmatpush1.bf16.msra.mxu0 0
        %3002 = vmatprep.mubr.bf16.mxu0 0
        %3003 = vmatmul.mubr.bf16.gmra.mrb[0].mxu0 %v2968
        %v3004 = vpop.f32.mrb[0].mxu0
        %v3005 = vadd.f32 0.0, %v3004
        %v3006 = vpop.f32.mrb[0].mxu0
        %v3007 = vpop.f32.mrb[0].mxu0
        %v3008 = vadd.f32 0.0, %v3007
        %v3009 = vpop.f32.mrb[0].mxu0
        %3010 = vdwg.mxu0
        %v3012 = vsel %vm2229, %v2702, 0
        %3014 = vmatprep.subr.bf16.mxu0 0
        %3015 = vmatpush1.bf16.msra.mxu0 %v1827
        %3016 = vmatprep.subr.bf16.mxu0 0
        %3017 = vmatpush1.bf16.msra.mxu0 0
        %3018 = vmatprep.subr.bf16.mxu0 0
        %3019 = vmatpush1.bf16.msra.mxu0 0
        %3020 = vmatprep.subr.bf16.mxu0 0
        %3021 = vmatpush1.bf16.msra.mxu0 0
        %3022 = vmatprep.subr.bf16.mxu0 0
        %3023 = vmatpush1.bf16.msra.mxu0 0
        %3024 = vmatprep.subr.bf16.mxu0 0
        %3025 = vmatpush1.bf16.msra.mxu0 0
        %3026 = vmatprep.subr.bf16.mxu0 0
        %3027 = vmatpush1.bf16.msra.mxu0 0
        %3028 = vmatprep.subr.bf16.mxu0 0
        %3029 = vmatpush1.bf16.msra.mxu0 0
        %3030 = vmatprep.subr.bf16.mxu0 0
        %3031 = vmatpush1.bf16.msra.mxu0 0
        %3032 = vmatprep.subr.bf16.mxu0 0
        %3033 = vmatpush1.bf16.msra.mxu0 0
        %3034 = vmatprep.subr.bf16.mxu0 0
        %3035 = vmatpush1.bf16.msra.mxu0 0
        %3036 = vmatprep.subr.bf16.mxu0 0
        %3037 = vmatpush1.bf16.msra.mxu0 0
        %3038 = vmatprep.subr.bf16.mxu0 0
        %3039 = vmatpush1.bf16.msra.mxu0 0
        %3040 = vmatprep.subr.bf16.mxu0 0
        %3041 = vmatpush1.bf16.msra.mxu0 0
        %3042 = vmatprep.subr.bf16.mxu0 0
        %3043 = vmatpush1.bf16.msra.mxu0 0
        %3044 = vmatprep.subr.bf16.mxu0 0
        %3045 = vmatpush1.bf16.msra.mxu0 0
        %3046 = vmatprep.mubr.bf16.mxu0 0
        %3047 = vmatmul.mubr.bf16.gmra.mrb[0].mxu0 %v3012
        %v3048 = vpop.f32.mrb[0].mxu0
        %v3049 = vadd.f32 0.0, %v3048
        %v3050 = vpop.f32.mrb[0].mxu0
        %v3051 = vpop.f32.mrb[0].mxu0
        %v3052 = vadd.f32 0.0, %v3051
        %v3053 = vpop.f32.mrb[0].mxu0
        %3054 = vdwg.mxu0
        %v3055 = vadd.f32 %v2679, %v2741
        %v3056 = vadd.f32 %v2680, %v2744
        %v3057 = vadd.f32 %v2681, %v2785
        %v3058 = vadd.f32 %v2682, %v2788
        %v3059 = vadd.f32 %v2683, %v2829
        %v3060 = vadd.f32 %v2684, %v2832
        %v3061 = vadd.f32 %v2685, %v2873
        %v3062 = vadd.f32 %v2686, %v2876
        %v3063 = vadd.f32 %v2687, %v2917
        %v3064 = vadd.f32 %v2688, %v2920
        %v3065 = vadd.f32 %v2689, %v2961
        %v3066 = vadd.f32 %v2690, %v2964
        %v3067 = vadd.f32 %v2691, %v3005
        %v3068 = vadd.f32 %v2692, %v3008
        %v3069 = vadd.f32 %v2693, %v3049
        %v3070 = vadd.f32 %v2694, %v3052
        %3071 = vst.msk [vmem:[#allocation5] sm:$0xff] %vm1836, %v3055
        %3072 = vst.msk [vmem:[#allocation5 + $0x8] sm:$0xff] %vm1836, %v3056
        %3073 = vst.msk [vmem:[#allocation5 + $0x10] sm:$0xff] %vm1836, %v3057
        %3074 = vst.msk [vmem:[#allocation5 + $0x18] sm:$0xff] %vm1836, %v3058
        %3075 = vst.msk [vmem:[#allocation5 + $0x20] sm:$0xff] %vm1836, %v3059
        %3076 = vst.msk [vmem:[#allocation5 + $0x28] sm:$0xff] %vm1836, %v3060
        %3077 = vst.msk [vmem:[#allocation5 + $0x30] sm:$0xff] %vm1836, %v3061
        %3078 = vst.msk [vmem:[#allocation5 + $0x38] sm:$0xff] %vm1836, %v3062
        %3079 = vst.msk [vmem:[#allocation5 + $0x40] sm:$0xff] %vm1836, %v3063
        %3080 = vst.msk [vmem:[#allocation5 + $0x48] sm:$0xff] %vm1836, %v3064
        %3081 = vst.msk [vmem:[#allocation5 + $0x50] sm:$0xff] %vm1836, %v3065
        %3082 = vst.msk [vmem:[#allocation5 + $0x58] sm:$0xff] %vm1836, %v3066
        %3083 = vst.msk [vmem:[#allocation5 + $0x60] sm:$0xff] %vm1836, %v3067
        %3084 = vst.msk [vmem:[#allocation5 + $0x68] sm:$0xff] %vm1836, %v3068
        %3085 = vst.msk [vmem:[#allocation5 + $0x70] sm:$0xff] %vm1836, %v3069
        %3086 = vst.msk [vmem:[#allocation5 + $0x78] sm:$0xff] %vm1836, %v3070
        %3087 = vst.msk [vmem:[#allocation3] sm:$0xff] %vm2566, %v2278
        %3088 = vst.msk [vmem:[#allocation3 + $0x8] sm:$0xff] %vm2566, %v2279
        %3089 = vst.msk [vmem:[#allocation3 + $0x10] sm:$0xff] %vm2566, %v2280
        %3090 = vst.msk [vmem:[#allocation3 + $0x18] sm:$0xff] %vm2566, %v2281
        %3091 = vst.msk [vmem:[#allocation3 + $0x20] sm:$0xff] %vm2566, %v2282
        %3092 = vst.msk [vmem:[#allocation3 + $0x28] sm:$0xff] %vm2566, %v2283
        %3093 = vst.msk [vmem:[#allocation3 + $0x30] sm:$0xff] %vm2566, %v2284
        %3094 = vst.msk [vmem:[#allocation3 + $0x38] sm:$0xff] %vm2566, %v2285
        %3095 = vst.msk [vmem:[#allocation3 + $0x40] sm:$0xff] %vm2566, %v2286
        %3096 = vst.msk [vmem:[#allocation3 + $0x48] sm:$0xff] %vm2566, %v2287
        %3097 = vst.msk [vmem:[#allocation3 + $0x50] sm:$0xff] %vm2566, %v2288
        %3098 = vst.msk [vmem:[#allocation3 + $0x58] sm:$0xff] %vm2566, %v2289
        %3099 = vst.msk [vmem:[#allocation3 + $0x60] sm:$0xff] %vm2566, %v2290
        %3100 = vst.msk [vmem:[#allocation3 + $0x68] sm:$0xff] %vm2566, %v2291
        %3101 = vst.msk [vmem:[#allocation3 + $0x70] sm:$0xff] %vm2566, %v2292
        %3102 = vst.msk [vmem:[#allocation3 + $0x78] sm:$0xff] %vm2566, %v2293
        // Predicated region
        $region53: #{tpu_custom_call.1} parent=47 // pred_check
          %p3103 = pneg %p352
        $region54: #{tpu_custom_call.1} parent=47 // pred_check_branch
          %3105 = sbr.rel (%p3103) target = $region56
        $region55: #{tpu_custom_call.1} parent=47 // pred_region
          %v3106 = vld [vmem:[#allocation4] sm:$0xff]
          %v3107 = vld [vmem:[#allocation4 + $0x8] sm:$0xff]
          %v3108 = vld [vmem:[#allocation4 + $0x10] sm:$0xff]
          %v3109 = vld [vmem:[#allocation4 + $0x18] sm:$0xff]
          %v3110 = vld [vmem:[#allocation4 + $0x20] sm:$0xff]
          %v3111 = vld [vmem:[#allocation4 + $0x28] sm:$0xff]
          %v3112 = vld [vmem:[#allocation4 + $0x30] sm:$0xff]
          %v3113 = vld [vmem:[#allocation4 + $0x38] sm:$0xff]
          %v3114 = vld [vmem:[#allocation4 + $0x40] sm:$0xff]
          %v3115 = vld [vmem:[#allocation4 + $0x48] sm:$0xff]
          %v3116 = vld [vmem:[#allocation4 + $0x50] sm:$0xff]
          %v3117 = vld [vmem:[#allocation4 + $0x58] sm:$0xff]
          %v3118 = vld [vmem:[#allocation4 + $0x60] sm:$0xff]
          %v3119 = vld [vmem:[#allocation4 + $0x68] sm:$0xff]
          %v3120 = vld [vmem:[#allocation4 + $0x70] sm:$0xff]
          %v3121 = vld [vmem:[#allocation4 + $0x78] sm:$0xff]
          %v3122 = vrcp.pop %v3106
          %v3123 = vrcp.pop %v3107
          %v3124 = vrcp.pop %v3108
          %v3125 = vrcp.pop %v3109
          %v3126 = vrcp.pop %v3110
          %v3127 = vrcp.pop %v3111
          %v3128 = vrcp.pop %v3112
          %v3129 = vrcp.pop %v3113
          %v3130 = vrcp.pop %v3114
          %v3131 = vrcp.pop %v3115
          %v3132 = vrcp.pop %v3116
          %v3133 = vrcp.pop %v3117
          %v3134 = vrcp.pop %v3118
          %v3135 = vrcp.pop %v3119
          %v3136 = vrcp.pop %v3120
          %v3137 = vrcp.pop %v3121
          %v3138 = vld [vmem:[#allocation5] sm:$0xff]
          %v3139 = vld [vmem:[#allocation5 + $0x8] sm:$0xff]
          %v3140 = vld [vmem:[#allocation5 + $0x10] sm:$0xff]
          %v3141 = vld [vmem:[#allocation5 + $0x18] sm:$0xff]
          %v3142 = vld [vmem:[#allocation5 + $0x20] sm:$0xff]
          %v3143 = vld [vmem:[#allocation5 + $0x28] sm:$0xff]
          %v3144 = vld [vmem:[#allocation5 + $0x30] sm:$0xff]
          %v3145 = vld [vmem:[#allocation5 + $0x38] sm:$0xff]
          %v3146 = vld [vmem:[#allocation5 + $0x40] sm:$0xff]
          %v3147 = vld [vmem:[#allocation5 + $0x48] sm:$0xff]
          %v3148 = vld [vmem:[#allocation5 + $0x50] sm:$0xff]
          %v3149 = vld [vmem:[#allocation5 + $0x58] sm:$0xff]
          %v3150 = vld [vmem:[#allocation5 + $0x60] sm:$0xff]
          %v3151 = vld [vmem:[#allocation5 + $0x68] sm:$0xff]
          %v3152 = vld [vmem:[#allocation5 + $0x70] sm:$0xff]
          %v3153 = vld [vmem:[#allocation5 + $0x78] sm:$0xff]
          %3155 = vset.pattern.permute.xlu0 0
          %3156 = vperm.xlu0 %3155, %v3122
          %v3157 = vpop.permute.xlu0 %3156
          %3160 = vset.pattern.permute.xlu0 0
          %3161 = vperm.xlu0 %3160, %v3123
          %v3162 = vpop.permute.xlu0 %3161
          %3165 = vset.pattern.permute.xlu0 0
          %3166 = vperm.xlu0 %3165, %v3124
          %v3167 = vpop.permute.xlu0 %3166
          %3170 = vset.pattern.permute.xlu0 0
          %3171 = vperm.xlu0 %3170, %v3125
          %v3172 = vpop.permute.xlu0 %3171
          %3175 = vset.pattern.permute.xlu0 0
          %3176 = vperm.xlu0 %3175, %v3126
          %v3177 = vpop.permute.xlu0 %3176
          %3180 = vset.pattern.permute.xlu0 0
          %3181 = vperm.xlu0 %3180, %v3127
          %v3182 = vpop.permute.xlu0 %3181
          %3185 = vset.pattern.permute.xlu0 0
          %3186 = vperm.xlu0 %3185, %v3128
          %v3187 = vpop.permute.xlu0 %3186
          %3190 = vset.pattern.permute.xlu0 0
          %3191 = vperm.xlu0 %3190, %v3129
          %v3192 = vpop.permute.xlu0 %3191
          %3195 = vset.pattern.permute.xlu0 0
          %3196 = vperm.xlu0 %3195, %v3130
          %v3197 = vpop.permute.xlu0 %3196
          %3200 = vset.pattern.permute.xlu0 0
          %3201 = vperm.xlu0 %3200, %v3131
          %v3202 = vpop.permute.xlu0 %3201
          %3205 = vset.pattern.permute.xlu0 0
          %3206 = vperm.xlu0 %3205, %v3132
          %v3207 = vpop.permute.xlu0 %3206
          %3210 = vset.pattern.permute.xlu0 0
          %3211 = vperm.xlu0 %3210, %v3133
          %v3212 = vpop.permute.xlu0 %3211
          %3215 = vset.pattern.permute.xlu0 0
          %3216 = vperm.xlu0 %3215, %v3134
          %v3217 = vpop.permute.xlu0 %3216
          %3220 = vset.pattern.permute.xlu0 0
          %3221 = vperm.xlu0 %3220, %v3135
          %v3222 = vpop.permute.xlu0 %3221
          %3225 = vset.pattern.permute.xlu0 0
          %3226 = vperm.xlu0 %3225, %v3136
          %v3227 = vpop.permute.xlu0 %3226
          %3230 = vset.pattern.permute.xlu0 0
          %3231 = vperm.xlu0 %3230, %v3137
          %v3232 = vpop.permute.xlu0 %3231
          %v3234 = vmul.f32 %v3138, %v3157
          %v3235 = vmul.f32 %v3139, %v3162
          %v3236 = vmul.f32 %v3140, %v3167
          %v3237 = vmul.f32 %v3141, %v3172
          %v3238 = vmul.f32 %v3142, %v3177
          %v3239 = vmul.f32 %v3143, %v3182
          %v3240 = vmul.f32 %v3144, %v3187
          %v3241 = vmul.f32 %v3145, %v3192
          %v3242 = vmul.f32 %v3146, %v3197
          %v3243 = vmul.f32 %v3147, %v3202
          %v3244 = vmul.f32 %v3148, %v3207
          %v3245 = vmul.f32 %v3149, %v3212
          %v3246 = vmul.f32 %v3150, %v3217
          %v3247 = vmul.f32 %v3151, %v3222
          %v3248 = vmul.f32 %v3152, %v3227
          %v3249 = vmul.f32 %v3153, %v3232
          %v3250 = vpack.c.bf16 %v3235, %v3234
          %v3251 = vpack.c.bf16 %v3237, %v3236
          %v3252 = vpack.c.bf16 %v3239, %v3238
          %v3253 = vpack.c.bf16 %v3241, %v3240
          %v3254 = vpack.c.bf16 %v3243, %v3242
          %v3255 = vpack.c.bf16 %v3245, %v3244
          %v3256 = vpack.c.bf16 %v3247, %v3246
          %v3257 = vpack.c.bf16 %v3249, %v3248
          %v3258 = vld [vmem:[%s5] sm:$0x3]
          %v3259 = vld [vmem:[%s5 + $0x2] sm:$0x3]
          %v3260 = vld [vmem:[%s5 + $0x4] sm:$0x3]
          %v3261 = vld [vmem:[%s5 + $0x6] sm:$0x3]
          %v3262 = vld [vmem:[%s5 + $0x8] sm:$0x3]
          %v3263 = vld [vmem:[%s5 + $0xa] sm:$0x3]
          %v3264 = vld [vmem:[%s5 + $0xc] sm:$0x3]
          %v3265 = vld [vmem:[%s5 + $0xe] sm:$0x3]
          %v3267 = vsel %vm1836, %v3250, 0
          %vm3269 = vcmask 1041408
          %v3271 = vsel %vm3269, %v3258, 0
          %3273 = vmatprep.subr.bf16.mxu0 0
          %3274 = vmatpush1.bf16.msra.mxu0 %v3271
          %3275 = vmatprep.subr.bf16.mxu0 0
          %3276 = vmatpush1.bf16.msra.mxu0 0
          %3277 = vmatprep.subr.bf16.mxu0 0
          %3278 = vmatpush1.bf16.msra.mxu0 0
          %3279 = vmatprep.subr.bf16.mxu0 0
          %3280 = vmatpush1.bf16.msra.mxu0 0
          %3281 = vmatprep.subr.bf16.mxu0 0
          %3282 = vmatpush1.bf16.msra.mxu0 0
          %3283 = vmatprep.subr.bf16.mxu0 0
          %3284 = vmatpush1.bf16.msra.mxu0 0
          %3285 = vmatprep.subr.bf16.mxu0 0
          %3286 = vmatpush1.bf16.msra.mxu0 0
          %3287 = vmatprep.subr.bf16.mxu0 0
          %3288 = vmatpush1.bf16.msra.mxu0 0
          %3289 = vmatprep.subr.bf16.mxu0 0
          %3290 = vmatpush1.bf16.msra.mxu0 0
          %3291 = vmatprep.subr.bf16.mxu0 0
          %3292 = vmatpush1.bf16.msra.mxu0 0
          %3293 = vmatprep.subr.bf16.mxu0 0
          %3294 = vmatpush1.bf16.msra.mxu0 0
          %3295 = vmatprep.subr.bf16.mxu0 0
          %3296 = vmatpush1.bf16.msra.mxu0 0
          %3297 = vmatprep.subr.bf16.mxu0 0
          %3298 = vmatpush1.bf16.msra.mxu0 0
          %3299 = vmatprep.subr.bf16.mxu0 0
          %3300 = vmatpush1.bf16.msra.mxu0 0
          %3301 = vmatprep.subr.bf16.mxu0 0
          %3302 = vmatpush1.bf16.msra.mxu0 0
          %3303 = vmatprep.subr.bf16.mxu0 0
          %3304 = vmatpush1.bf16.msra.mxu0 0
          %3305 = vmatprep.mubr.bf16.mxu0 0
          %3306 = vmatmul.mubr.bf16.gmra.mrb[0].mxu0 %v3267
          %v3307 = vpop.f32.mrb[0].mxu0
          %v3308 = vadd.f32 0.0, %v3307
          %v3309 = vpop.f32.mrb[0].mxu0
          %v3310 = vpop.f32.mrb[0].mxu0
          %v3311 = vadd.f32 0.0, %v3310
          %v3312 = vpop.f32.mrb[0].mxu0
          %3313 = vdwg.mxu0
          %v3315 = vsel %vm1836, %v3251, 0
          %v3318 = vsel %vm3269, %v3259, 0
          %3320 = vmatprep.subr.bf16.mxu0 0
          %3321 = vmatpush1.bf16.msra.mxu0 %v3318
          %3322 = vmatprep.subr.bf16.mxu0 0
          %3323 = vmatpush1.bf16.msra.mxu0 0
          %3324 = vmatprep.subr.bf16.mxu0 0
          %3325 = vmatpush1.bf16.msra.mxu0 0
          %3326 = vmatprep.subr.bf16.mxu0 0
          %3327 = vmatpush1.bf16.msra.mxu0 0
          %3328 = vmatprep.subr.bf16.mxu0 0
          %3329 = vmatpush1.bf16.msra.mxu0 0
          %3330 = vmatprep.subr.bf16.mxu0 0
          %3331 = vmatpush1.bf16.msra.mxu0 0
          %3332 = vmatprep.subr.bf16.mxu0 0
          %3333 = vmatpush1.bf16.msra.mxu0 0
          %3334 = vmatprep.subr.bf16.mxu0 0
          %3335 = vmatpush1.bf16.msra.mxu0 0
          %3336 = vmatprep.subr.bf16.mxu0 0
          %3337 = vmatpush1.bf16.msra.mxu0 0
          %3338 = vmatprep.subr.bf16.mxu0 0
          %3339 = vmatpush1.bf16.msra.mxu0 0
          %3340 = vmatprep.subr.bf16.mxu0 0
          %3341 = vmatpush1.bf16.msra.mxu0 0
          %3342 = vmatprep.subr.bf16.mxu0 0
          %3343 = vmatpush1.bf16.msra.mxu0 0
          %3344 = vmatprep.subr.bf16.mxu0 0
          %3345 = vmatpush1.bf16.msra.mxu0 0
          %3346 = vmatprep.subr.bf16.mxu0 0
          %3347 = vmatpush1.bf16.msra.mxu0 0
          %3348 = vmatprep.subr.bf16.mxu0 0
          %3349 = vmatpush1.bf16.msra.mxu0 0
          %3350 = vmatprep.subr.bf16.mxu0 0
          %3351 = vmatpush1.bf16.msra.mxu0 0
          %3352 = vmatprep.mubr.bf16.mxu0 0
          %3353 = vmatmul.mubr.bf16.gmra.mrb[0].mxu0 %v3315
          %v3354 = vpop.f32.mrb[0].mxu0
          %v3355 = vadd.f32 0.0, %v3354
          %v3356 = vpop.f32.mrb[0].mxu0
          %v3357 = vpop.f32.mrb[0].mxu0
          %v3358 = vadd.f32 0.0, %v3357
          %v3359 = vpop.f32.mrb[0].mxu0
          %3360 = vdwg.mxu0
          %v3362 = vsel %vm1836, %v3252, 0
          %v3365 = vsel %vm3269, %v3260, 0
          %3367 = vmatprep.subr.bf16.mxu0 0
          %3368 = vmatpush1.bf16.msra.mxu0 %v3365
          %3369 = vmatprep.subr.bf16.mxu0 0
          %3370 = vmatpush1.bf16.msra.mxu0 0
          %3371 = vmatprep.subr.bf16.mxu0 0
          %3372 = vmatpush1.bf16.msra.mxu0 0
          %3373 = vmatprep.subr.bf16.mxu0 0
          %3374 = vmatpush1.bf16.msra.mxu0 0
          %3375 = vmatprep.subr.bf16.mxu0 0
          %3376 = vmatpush1.bf16.msra.mxu0 0
          %3377 = vmatprep.subr.bf16.mxu0 0
          %3378 = vmatpush1.bf16.msra.mxu0 0
          %3379 = vmatprep.subr.bf16.mxu0 0
          %3380 = vmatpush1.bf16.msra.mxu0 0
          %3381 = vmatprep.subr.bf16.mxu0 0
          %3382 = vmatpush1.bf16.msra.mxu0 0
          %3383 = vmatprep.subr.bf16.mxu0 0
          %3384 = vmatpush1.bf16.msra.mxu0 0
          %3385 = vmatprep.subr.bf16.mxu0 0
          %3386 = vmatpush1.bf16.msra.mxu0 0
          %3387 = vmatprep.subr.bf16.mxu0 0
          %3388 = vmatpush1.bf16.msra.mxu0 0
          %3389 = vmatprep.subr.bf16.mxu0 0
          %3390 = vmatpush1.bf16.msra.mxu0 0
          %3391 = vmatprep.subr.bf16.mxu0 0
          %3392 = vmatpush1.bf16.msra.mxu0 0
          %3393 = vmatprep.subr.bf16.mxu0 0
          %3394 = vmatpush1.bf16.msra.mxu0 0
          %3395 = vmatprep.subr.bf16.mxu0 0
          %3396 = vmatpush1.bf16.msra.mxu0 0
          %3397 = vmatprep.subr.bf16.mxu0 0
          %3398 = vmatpush1.bf16.msra.mxu0 0
          %3399 = vmatprep.mubr.bf16.mxu0 0
          %3400 = vmatmul.mubr.bf16.gmra.mrb[0].mxu0 %v3362
          %v3401 = vpop.f32.mrb[0].mxu0
          %v3402 = vadd.f32 0.0, %v3401
          %v3403 = vpop.f32.mrb[0].mxu0
          %v3404 = vpop.f32.mrb[0].mxu0
          %v3405 = vadd.f32 0.0, %v3404
          %v3406 = vpop.f32.mrb[0].mxu0
          %3407 = vdwg.mxu0
          %v3409 = vsel %vm1836, %v3253, 0
          %v3412 = vsel %vm3269, %v3261, 0
          %3414 = vmatprep.subr.bf16.mxu0 0
          %3415 = vmatpush1.bf16.msra.mxu0 %v3412
          %3416 = vmatprep.subr.bf16.mxu0 0
          %3417 = vmatpush1.bf16.msra.mxu0 0
          %3418 = vmatprep.subr.bf16.mxu0 0
          %3419 = vmatpush1.bf16.msra.mxu0 0
          %3420 = vmatprep.subr.bf16.mxu0 0
          %3421 = vmatpush1.bf16.msra.mxu0 0
          %3422 = vmatprep.subr.bf16.mxu0 0
          %3423 = vmatpush1.bf16.msra.mxu0 0
          %3424 = vmatprep.subr.bf16.mxu0 0
          %3425 = vmatpush1.bf16.msra.mxu0 0
          %3426 = vmatprep.subr.bf16.mxu0 0
          %3427 = vmatpush1.bf16.msra.mxu0 0
          %3428 = vmatprep.subr.bf16.mxu0 0
          %3429 = vmatpush1.bf16.msra.mxu0 0
          %3430 = vmatprep.subr.bf16.mxu0 0
          %3431 = vmatpush1.bf16.msra.mxu0 0
          %3432 = vmatprep.subr.bf16.mxu0 0
          %3433 = vmatpush1.bf16.msra.mxu0 0
          %3434 = vmatprep.subr.bf16.mxu0 0
          %3435 = vmatpush1.bf16.msra.mxu0 0
          %3436 = vmatprep.subr.bf16.mxu0 0
          %3437 = vmatpush1.bf16.msra.mxu0 0
          %3438 = vmatprep.subr.bf16.mxu0 0
          %3439 = vmatpush1.bf16.msra.mxu0 0
          %3440 = vmatprep.subr.bf16.mxu0 0
          %3441 = vmatpush1.bf16.msra.mxu0 0
          %3442 = vmatprep.subr.bf16.mxu0 0
          %3443 = vmatpush1.bf16.msra.mxu0 0
          %3444 = vmatprep.subr.bf16.mxu0 0
          %3445 = vmatpush1.bf16.msra.mxu0 0
          %3446 = vmatprep.mubr.bf16.mxu0 0
          %3447 = vmatmul.mubr.bf16.gmra.mrb[0].mxu0 %v3409
          %v3448 = vpop.f32.mrb[0].mxu0
          %v3449 = vadd.f32 0.0, %v3448
          %v3450 = vpop.f32.mrb[0].mxu0
          %v3451 = vpop.f32.mrb[0].mxu0
          %v3452 = vadd.f32 0.0, %v3451
          %v3453 = vpop.f32.mrb[0].mxu0
          %3454 = vdwg.mxu0
          %v3456 = vsel %vm1836, %v3254, 0
          %v3459 = vsel %vm3269, %v3262, 0
          %3461 = vmatprep.subr.bf16.mxu0 0
          %3462 = vmatpush1.bf16.msra.mxu0 %v3459
          %3463 = vmatprep.subr.bf16.mxu0 0
          %3464 = vmatpush1.bf16.msra.mxu0 0
          %3465 = vmatprep.subr.bf16.mxu0 0
          %3466 = vmatpush1.bf16.msra.mxu0 0
          %3467 = vmatprep.subr.bf16.mxu0 0
          %3468 = vmatpush1.bf16.msra.mxu0 0
          %3469 = vmatprep.subr.bf16.mxu0 0
          %3470 = vmatpush1.bf16.msra.mxu0 0
          %3471 = vmatprep.subr.bf16.mxu0 0
          %3472 = vmatpush1.bf16.msra.mxu0 0
          %3473 = vmatprep.subr.bf16.mxu0 0
          %3474 = vmatpush1.bf16.msra.mxu0 0
          %3475 = vmatprep.subr.bf16.mxu0 0
          %3476 = vmatpush1.bf16.msra.mxu0 0
          %3477 = vmatprep.subr.bf16.mxu0 0
          %3478 = vmatpush1.bf16.msra.mxu0 0
          %3479 = vmatprep.subr.bf16.mxu0 0
          %3480 = vmatpush1.bf16.msra.mxu0 0
          %3481 = vmatprep.subr.bf16.mxu0 0
          %3482 = vmatpush1.bf16.msra.mxu0 0
          %3483 = vmatprep.subr.bf16.mxu0 0
          %3484 = vmatpush1.bf16.msra.mxu0 0
          %3485 = vmatprep.subr.bf16.mxu0 0
          %3486 = vmatpush1.bf16.msra.mxu0 0
          %3487 = vmatprep.subr.bf16.mxu0 0
          %3488 = vmatpush1.bf16.msra.mxu0 0
          %3489 = vmatprep.subr.bf16.mxu0 0
          %3490 = vmatpush1.bf16.msra.mxu0 0
          %3491 = vmatprep.subr.bf16.mxu0 0
          %3492 = vmatpush1.bf16.msra.mxu0 0
          %3493 = vmatprep.mubr.bf16.mxu0 0
          %3494 = vmatmul.mubr.bf16.gmra.mrb[0].mxu0 %v3456
          %v3495 = vpop.f32.mrb[0].mxu0
          %v3496 = vadd.f32 0.0, %v3495
          %v3497 = vpop.f32.mrb[0].mxu0
          %v3498 = vpop.f32.mrb[0].mxu0
          %v3499 = vadd.f32 0.0, %v3498
          %v3500 = vpop.f32.mrb[0].mxu0
          %3501 = vdwg.mxu0
          %v3503 = vsel %vm1836, %v3255, 0
          %v3506 = vsel %vm3269, %v3263, 0
          %3508 = vmatprep.subr.bf16.mxu0 0
          %3509 = vmatpush1.bf16.msra.mxu0 %v3506
          %3510 = vmatprep.subr.bf16.mxu0 0
          %3511 = vmatpush1.bf16.msra.mxu0 0
          %3512 = vmatprep.subr.bf16.mxu0 0
          %3513 = vmatpush1.bf16.msra.mxu0 0
          %3514 = vmatprep.subr.bf16.mxu0 0
          %3515 = vmatpush1.bf16.msra.mxu0 0
          %3516 = vmatprep.subr.bf16.mxu0 0
          %3517 = vmatpush1.bf16.msra.mxu0 0
          %3518 = vmatprep.subr.bf16.mxu0 0
          %3519 = vmatpush1.bf16.msra.mxu0 0
          %3520 = vmatprep.subr.bf16.mxu0 0
          %3521 = vmatpush1.bf16.msra.mxu0 0
          %3522 = vmatprep.subr.bf16.mxu0 0
          %3523 = vmatpush1.bf16.msra.mxu0 0
          %3524 = vmatprep.subr.bf16.mxu0 0
          %3525 = vmatpush1.bf16.msra.mxu0 0
          %3526 = vmatprep.subr.bf16.mxu0 0
          %3527 = vmatpush1.bf16.msra.mxu0 0
          %3528 = vmatprep.subr.bf16.mxu0 0
          %3529 = vmatpush1.bf16.msra.mxu0 0
          %3530 = vmatprep.subr.bf16.mxu0 0
          %3531 = vmatpush1.bf16.msra.mxu0 0
          %3532 = vmatprep.subr.bf16.mxu0 0
          %3533 = vmatpush1.bf16.msra.mxu0 0
          %3534 = vmatprep.subr.bf16.mxu0 0
          %3535 = vmatpush1.bf16.msra.mxu0 0
          %3536 = vmatprep.subr.bf16.mxu0 0
          %3537 = vmatpush1.bf16.msra.mxu0 0
          %3538 = vmatprep.subr.bf16.mxu0 0
          %3539 = vmatpush1.bf16.msra.mxu0 0
          %3540 = vmatprep.mubr.bf16.mxu0 0
          %3541 = vmatmul.mubr.bf16.gmra.mrb[0].mxu0 %v3503
          %v3542 = vpop.f32.mrb[0].mxu0
          %v3543 = vadd.f32 0.0, %v3542
          %v3544 = vpop.f32.mrb[0].mxu0
          %v3545 = vpop.f32.mrb[0].mxu0
          %v3546 = vadd.f32 0.0, %v3545
          %v3547 = vpop.f32.mrb[0].mxu0
          %3548 = vdwg.mxu0
          %v3550 = vsel %vm1836, %v3256, 0
          %v3553 = vsel %vm3269, %v3264, 0
          %3555 = vmatprep.subr.bf16.mxu0 0
          %3556 = vmatpush1.bf16.msra.mxu0 %v3553
          %3557 = vmatprep.subr.bf16.mxu0 0
          %3558 = vmatpush1.bf16.msra.mxu0 0
          %3559 = vmatprep.subr.bf16.mxu0 0
          %3560 = vmatpush1.bf16.msra.mxu0 0
          %3561 = vmatprep.subr.bf16.mxu0 0
          %3562 = vmatpush1.bf16.msra.mxu0 0
          %3563 = vmatprep.subr.bf16.mxu0 0
          %3564 = vmatpush1.bf16.msra.mxu0 0
          %3565 = vmatprep.subr.bf16.mxu0 0
          %3566 = vmatpush1.bf16.msra.mxu0 0
          %3567 = vmatprep.subr.bf16.mxu0 0
          %3568 = vmatpush1.bf16.msra.mxu0 0
          %3569 = vmatprep.subr.bf16.mxu0 0
          %3570 = vmatpush1.bf16.msra.mxu0 0
          %3571 = vmatprep.subr.bf16.mxu0 0
          %3572 = vmatpush1.bf16.msra.mxu0 0
          %3573 = vmatprep.subr.bf16.mxu0 0
          %3574 = vmatpush1.bf16.msra.mxu0 0
          %3575 = vmatprep.subr.bf16.mxu0 0
          %3576 = vmatpush1.bf16.msra.mxu0 0
          %3577 = vmatprep.subr.bf16.mxu0 0
          %3578 = vmatpush1.bf16.msra.mxu0 0
          %3579 = vmatprep.subr.bf16.mxu0 0
          %3580 = vmatpush1.bf16.msra.mxu0 0
          %3581 = vmatprep.subr.bf16.mxu0 0
          %3582 = vmatpush1.bf16.msra.mxu0 0
          %3583 = vmatprep.subr.bf16.mxu0 0
          %3584 = vmatpush1.bf16.msra.mxu0 0
          %3585 = vmatprep.subr.bf16.mxu0 0
          %3586 = vmatpush1.bf16.msra.mxu0 0
          %3587 = vmatprep.mubr.bf16.mxu0 0
          %3588 = vmatmul.mubr.bf16.gmra.mrb[0].mxu0 %v3550
          %v3589 = vpop.f32.mrb[0].mxu0
          %v3590 = vadd.f32 0.0, %v3589
          %v3591 = vpop.f32.mrb[0].mxu0
          %v3592 = vpop.f32.mrb[0].mxu0
          %v3593 = vadd.f32 0.0, %v3592
          %v3594 = vpop.f32.mrb[0].mxu0
          %3595 = vdwg.mxu0
          %v3597 = vsel %vm1836, %v3257, 0
          %v3600 = vsel %vm3269, %v3265, 0
          %3602 = vmatprep.subr.bf16.mxu0 0
          %3603 = vmatpush1.bf16.msra.mxu0 %v3600
          %3604 = vmatprep.subr.bf16.mxu0 0
          %3605 = vmatpush1.bf16.msra.mxu0 0
          %3606 = vmatprep.subr.bf16.mxu0 0
          %3607 = vmatpush1.bf16.msra.mxu0 0
          %3608 = vmatprep.subr.bf16.mxu0 0
          %3609 = vmatpush1.bf16.msra.mxu0 0
          %3610 = vmatprep.subr.bf16.mxu0 0
          %3611 = vmatpush1.bf16.msra.mxu0 0
          %3612 = vmatprep.subr.bf16.mxu0 0
          %3613 = vmatpush1.bf16.msra.mxu0 0
          %3614 = vmatprep.subr.bf16.mxu0 0
          %3615 = vmatpush1.bf16.msra.mxu0 0
          %3616 = vmatprep.subr.bf16.mxu0 0
          %3617 = vmatpush1.bf16.msra.mxu0 0
          %3618 = vmatprep.subr.bf16.mxu0 0
          %3619 = vmatpush1.bf16.msra.mxu0 0
          %3620 = vmatprep.subr.bf16.mxu0 0
          %3621 = vmatpush1.bf16.msra.mxu0 0
          %3622 = vmatprep.subr.bf16.mxu0 0
          %3623 = vmatpush1.bf16.msra.mxu0 0
          %3624 = vmatprep.subr.bf16.mxu0 0
          %3625 = vmatpush1.bf16.msra.mxu0 0
          %3626 = vmatprep.subr.bf16.mxu0 0
          %3627 = vmatpush1.bf16.msra.mxu0 0
          %3628 = vmatprep.subr.bf16.mxu0 0
          %3629 = vmatpush1.bf16.msra.mxu0 0
          %3630 = vmatprep.subr.bf16.mxu0 0
          %3631 = vmatpush1.bf16.msra.mxu0 0
          %3632 = vmatprep.subr.bf16.mxu0 0
          %3633 = vmatpush1.bf16.msra.mxu0 0
          %3634 = vmatprep.mubr.bf16.mxu0 0
          %3635 = vmatmul.mubr.bf16.gmra.mrb[0].mxu0 %v3597
          %v3636 = vpop.f32.mrb[0].mxu0
          %v3637 = vadd.f32 0.0, %v3636
          %v3638 = vpop.f32.mrb[0].mxu0
          %v3639 = vpop.f32.mrb[0].mxu0
          %v3640 = vadd.f32 0.0, %v3639
          %v3641 = vpop.f32.mrb[0].mxu0
          %3642 = vdwg.mxu0
          %v3643 = vsel %vm940, %v3308, 0.0
          %v3644 = vsel %vm940, %v3355, 0.0
          %v3645 = vadd.f32 %v3643, %v3644
          %v3646 = vsel %vm940, %v3402, 0.0
          %v3647 = vadd.f32 %v3645, %v3646
          %v3648 = vsel %vm940, %v3449, 0.0
          %v3649 = vadd.f32 %v3647, %v3648
          %v3650 = vsel %vm940, %v3496, 0.0
          %v3651 = vadd.f32 %v3649, %v3650
          %v3652 = vsel %vm940, %v3543, 0.0
          %v3653 = vadd.f32 %v3651, %v3652
          %v3654 = vsel %vm940, %v3590, 0.0
          %v3655 = vadd.f32 %v3653, %v3654
          %v3656 = vsel %vm940, %v3637, 0.0
          %v3657 = vadd.f32 %v3655, %v3656
          %v3658 = vsel %vm940, %v3311, 0.0
          %v3659 = vsel %vm940, %v3358, 0.0
          %v3660 = vadd.f32 %v3658, %v3659
          %v3661 = vsel %vm940, %v3405, 0.0
          %v3662 = vadd.f32 %v3660, %v3661
          %v3663 = vsel %vm940, %v3452, 0.0
          %v3664 = vadd.f32 %v3662, %v3663
          %v3665 = vsel %vm940, %v3499, 0.0
          %v3666 = vadd.f32 %v3664, %v3665
          %v3667 = vsel %vm940, %v3546, 0.0
          %v3668 = vadd.f32 %v3666, %v3667
          %v3669 = vsel %vm940, %v3593, 0.0
          %v3670 = vadd.f32 %v3668, %v3669
          %v3671 = vsel %vm940, %v3640, 0.0
          %v3672 = vadd.f32 %v3670, %v3671
          %v3673 = vld [vmem:[%s6] sm:$0x1]
          %v3675 = vlaneseq
          %v3676 = vshrl.u32 %v3675, 7
          %v3677 = vsub.s32 0, %v3676
          %v3678 = vrot.slane %v3673, %v3677
          %v3680 = vadd.f32 %v3657, %v3678
          %v3681 = vadd.f32 %v3672, %v3678
          %3682 = vst.msk [vmem:[%s329] sm:$0xff] %vm940, %v3680
          %3683 = vst.msk [vmem:[%s329 + $0x8] sm:$0xff] %vm940, %v3681
        $region56: #{tpu_custom_call.1} parent=47 // pred_fallthru
          _
        %s3684 = sand.u32 %s211, 1
        %s3685 = scalar_lea.sflag [#allocation7], %s3684
        %s3686 = sand.u32 %s211, 1
        %s3687 = smul.addr %s3686, 16
        %s3688 = scalar_lea.vmem [#allocation6], %s3687
        // Predicated region
        $region57: #{tpu_custom_call.1} parent=47 // pred_check
          %p3689 = pneg %p221
        $region58: #{tpu_custom_call.1} parent=47 // pred_check_branch
          %3691 = sbr.rel (%p3689) target = $region60
        $region59: #{tpu_custom_call.1} parent=47 // pred_region
          %s3692 = smul.u32 2, %s27
          %s3694 = ssub.s32 256, 256
          %3695 = vsyncadd %s3685, %s3694
          %s3696 = smul.addr %s26, 2
          %s3697 = sadd.s32 %s3692, %s3696
          %s3698 = smul.addr %s3697, 128
          %s3699 = scalar_lea.hbm %s7, %s3698
          %s3700 = sshll.u32 %s3688, 4
          %s3701 = int_to_ptr.vmem [resolvable:$true] %s3700
          %3706 = dma.vmem_to_hbm [thread:$0]  %s3701, 256, %s3699, %s3685, 128, 128, 8
        $region60: #{tpu_custom_call.1} parent=47 // pred_fallthru
          _
      $region48: #{tpu_custom_call.1} parent=5 // pred_fallthru
        _
      %p3707 = scmp.le.s32.totalorder 2, %s16
      // Predicated region
      $region61: #{tpu_custom_call.1} parent=5 // pred_check
        %p3708 = pneg %p3707
      $region62: #{tpu_custom_call.1} parent=5 // pred_check_branch
        %3710 = sbr.rel (%p3708) target = $region64
      $region63: #{tpu_custom_call.1} parent=5 // pred_region
        %s3711 = ssub.s32 %s16, 2
        // Predicated region
        $region65: #{tpu_custom_call.1} parent=63 // pred_check
          %p3712 = pneg %p227
        $region66: #{tpu_custom_call.1} parent=63 // pred_check_branch
          %3714 = sbr.rel (%p3712) target = $region68
        $region67: #{tpu_custom_call.1} parent=63 // pred_region
          %s3715 = sand.u32 %s212, 1
          %s3716 = scalar_lea.sflag [#allocation7], %s3715
          %s3717 = sand.u32 %s212, 1
          %s3718 = smul.addr %s3717, 16
          %s3719 = scalar_lea.vmem [#allocation6], %s3718
          %3720 = dma.done %s3716, 256
        $region68: #{tpu_custom_call.1} parent=63 // pred_fallthru
          _
      $region64: #{tpu_custom_call.1} parent=5 // pred_fallthru
        _
    $region6: #{tpu_custom_call.1} parent=1 // loop_footer
      %s20 = sadd.s32 1, %s16
    $region7: #{tpu_custom_call.1} parent=1 // loop_footer_branch
      %15 = sbr.rel target = $region3
    $region8: #{tpu_custom_call.1} parent=1 // loop_exit
      _
    %3721 = vsyncpa [#allocation7], 1
    %s3722 = scalar_lea.sflag [#allocation7], 1
    %3723 = vsyncpa %s3722, 1

</llo_original>
